<compile_context>
chip_gen: v5e
topology: v5e:2x2
jax: 0.10.0
libtpu: 0.0.40
codegen_flags: <defaults>
</compile_context>

<pallas_src>
import functools

import jax
import jax.numpy as jnp
from jax.experimental import pallas as pl
from jax.experimental.pallas import tpu as pltpu


def _downscale_kernel(x_ref, w_ref, b_ref, o_ref, *, K, S, Cin, Cout,
                      B_TILE, TOH, OW, n_oh_tiles):
    """One (batch-tile, OH-tile) grid step.

    x_ref: (B_TILE, S*S, Cin, H_SUB, W_SUB) stride-parity slabs of the padded
           input (resident across the OH-tile grid axis).
    w_ref: (Cout, D)  folded conv weights, D = K*K*Cin ordered (kh, kw, ci).
    b_ref: (Cout, 1)  bias column.
    o_ref: (B_TILE, Cout, TOH*OW) output tile (NCHW-flat pixels in lanes).
    """
    D = K * K * Cin
    NP = TOH * OW

    if n_oh_tiles == 1:
        oh0 = 0                                   # fully static fast path
    else:
        oh0 = pl.multiple_of(pl.program_id(1) * TOH, TOH)

    # Transposed im2col: D rows (kh, kw, ci); pixels in the minor dims.
    # Every tap is a contiguous (sublane, lane)-windowed load from one parity
    # slab -> no narrow-lane pieces, no per-tap strided gathers.
    pieces = []
    for kh in range(K):
        p, a = kh % S, kh // S
        for kw in range(K):
            q, b0 = kw % S, kw // S
            pieces.append(
                x_ref[:, p * S + q, :, pl.ds(oh0 + a, TOH), pl.ds(b0, OW)])
    patch = jnp.stack(pieces, axis=1)             # (B, K*K, Cin, TOH, OW)
    patch = patch.reshape(B_TILE, D, NP)          # (B, D, pixels)

    # Single fused (batched) MXU matmul, result already (Cout, pixels).
    wb = jnp.broadcast_to(w_ref[...][None], (B_TILE, Cout, D))
    res = jax.lax.dot_general(
        wb, patch,
        dimension_numbers=(((2,), (1,)), ((0,), (0,))),
        preferred_element_type=jnp.float32)       # (B, Cout, pixels)
    res = res + b_ref[...][None]                  # bias: one broadcast VPU add
    o_ref[...] = res.astype(o_ref.dtype)


def _pick_oh_tile(OH, OW, target_pixels=2048):
    """Output-row tile: bounds the im2col patch VMEM; keeps stores lane-legal."""
    if OH * OW <= target_pixels:
        return OH
    cap = max(1, target_pixels // OW)
    for t in range(min(OH, cap), 0, -1):
        if OH % t == 0 and (t * OW) % 128 == 0:
            return t
    return OH                                     # fallback: one tile (full dim)


def _pick_b_tile(N, in_bytes_per_img, work_bytes_per_img,
                 budget=24 << 20, cap=8):
    per = 2 * in_bytes_per_img + work_bytes_per_img   # 2x: double-buffered DMA
    bt = max(1, min(N, budget // max(per, 1)))
    return int(min(bt, cap))


def downscale_forward(x_nchw, weight_oihw, bias, *, stride=2, padding=2):
    """Equivalent of Downscale.forward: (N, Cin, H, W) -> (N, Cout, OH, OW)."""
    N, Cin, H, W = x_nchw.shape
    Cout, wcin, K, K2 = weight_oihw.shape
    assert wcin == Cin and K2 == K
    S, P = stride, padding

    OH = (H + 2 * P - K) // S + 1
    OW = (W + 2 * P - K) // S + 1
    A = -(-K // S)                       # ceil(K/S): shifts per parity slab
    H_SUB = OH + A - 1                   # slab rows any tap can touch
    W_SUB = OW + A - 1
    Hp, Wp = S * H_SUB, S * W_SUB        # padded extents (multiples of S)
    D = K * K * Cin

    TOH = _pick_oh_tile(OH, OW)
    n_oh_tiles = OH // TOH

    itemsize = jnp.dtype(x_nchw.dtype).itemsize
    in_bytes = S * S * Cin * H_SUB * W_SUB * itemsize
    work_bytes = (2 * D * TOH * OW + 4 * Cout * TOH * OW) * 4
    B_TILE = _pick_b_tile(N, in_bytes, work_bytes)
    N_pad = -(-N // B_TILE) * B_TILE

    # Input: one fused XLA pass = zero-pad + split into S*S stride-parity
    # slabs (no NHWC transpose of the full tensor).  All padded positions are
    # either true conv zero-padding or never read by any tap.
    # TODO(synk): fold this pad/parity split into the kernel (in-kernel lane
    # deinterleave) to drop the extra HBM pass at very large image sizes.
    x_p = jnp.pad(x_nchw, ((0, N_pad - N), (0, 0),
                           (P, Hp - H - P), (P, Wp - W - P)))
    x_slab = x_p.reshape(N_pad, Cin, H_SUB, S, W_SUB, S)
    x_slab = jnp.transpose(x_slab, (0, 3, 5, 1, 2, 4))
    x_slab = x_slab.reshape(N_pad, S * S, Cin, H_SUB, W_SUB)

    # Weights: (Cout, D) with D ordered (kh, kw, ci); bias as a column.
    w_mat = jnp.transpose(weight_oihw, (0, 2, 3, 1)).reshape(Cout, D)
    w_mat = w_mat.astype(x_nchw.dtype)
    b_col = bias.reshape(Cout, 1).astype(jnp.float32)

    kernel = functools.partial(
        _downscale_kernel, K=K, S=S, Cin=Cin, Cout=Cout,
        B_TILE=B_TILE, TOH=TOH, OW=OW, n_oh_tiles=n_oh_tiles)

    out = pl.pallas_call(
        kernel,
        out_shape=jax.ShapeDtypeStruct((N_pad, Cout, OH * OW), x_nchw.dtype),
        grid_spec=pltpu.PrefetchScalarGridSpec(
            num_scalar_prefetch=0,
            grid=(N_pad // B_TILE, n_oh_tiles),
            in_specs=[
                # Parity slabs: resident across the OH-tile axis (index map
                # constant in h -> no re-fetch between consecutive h steps).
                pl.BlockSpec((B_TILE, S * S, Cin, H_SUB, W_SUB),
                             lambda g, h: (g, 0, 0, 0, 0)),
                pl.BlockSpec((Cout, D), lambda g, h: (0, 0)),      # weights
                pl.BlockSpec((Cout, 1), lambda g, h: (0, 0)),      # bias
            ],
            out_specs=pl.BlockSpec((B_TILE, Cout, TOH * OW),
                                   lambda g, h: (g, 0, h)),
        ),
        compiler_params=pltpu.CompilerParams(
            dimension_semantics=("parallel", "parallel"),
            vmem_limit_bytes=64 * 1024 * 1024),
    )(x_slab, w_mat, b_col)

    # (N, Cout, OH*OW) -> (N, Cout, OH, OW) is a layout-preserving (free) reshape.
    return out[:N].reshape(N, Cout, OH, OW)


if __name__ == "__main__":
    # Small deterministic setup consistent with Downscale(in_ch=4, out_ch=8).
    N, Cin, H, W = 2, 4, 16, 16
    Cout, K = 8, 5

    key = jax.random.PRNGKey(0)
    kx, kwt, kb = jax.random.split(key, 3)
    x = jax.random.normal(kx, (N, Cin, H, W), jnp.float32)

    # Deterministic Conv2d-style init (kaiming-uniform-like bounds).
    fan_in = Cin * K * K
    bound = 1.0 / (fan_in ** 0.5)
    weight = jax.random.uniform(kwt, (Cout, Cin, K, K), jnp.float32, -bound, bound)
    bias = jax.random.uniform(kb, (Cout,), jnp.float32, -bound, bound)

    out = downscale_forward(x, weight, bias)
    out = jax.block_until_ready(out)

    # Reference (XLA conv) sanity check.
    ref = jax.lax.conv_general_dilated(
        x, weight, window_strides=(2, 2), padding=((2, 2), (2, 2)),
        dimension_numbers=("NCHW", "OIHW", "NCHW"),
    ) + bias[None, :, None, None]

    assert out.shape == (N, Cout, H // 2, W // 2), out.shape
    assert jnp.allclose(out, ref, atol=1e-4, rtol=1e-4), float(
        jnp.max(jnp.abs(out - ref)))

    print("KERNEL_OK")
</pallas_src>

<mosaic_0001>
module attributes {stable_mosaic.version = 11 : i64} {
  func.func @_downscale_kernel(%arg0: i32, %arg1: i32, %arg2: memref<2x4x4x10x10xf32, #tpu.memory_space<vmem>>, %arg3: memref<8x100xf32, #tpu.memory_space<vmem>>, %arg4: memref<8x1xf32, #tpu.memory_space<vmem>>, %arg5: memref<2x8x64xf32, #tpu.memory_space<vmem>>) attributes {dimension_semantics = [#tpu.dimension_semantics<parallel>, #tpu.dimension_semantics<parallel>], iteration_bounds = array<i64: 1, 1>, scalar_prefetch = 0 : i64, scratch_operands = 0 : i64, tpu.core_type = #tpu.core_type<tc>, window_params = [{transform_indices = @transform_0, window_bounds = array<i64: 2, 4, 4, 10, 10>}, {pipeline_mode = #tpu.pipeline_mode<synchronous>, transform_indices = @transform_1, window_bounds = array<i64: 8, 100>}, {pipeline_mode = #tpu.pipeline_mode<synchronous>, transform_indices = @transform_2, window_bounds = array<i64: 8, 1>}, {transform_indices = @transform_3, window_bounds = array<i64: 2, 8, 64>}]} {
    %c0 = arith.constant 0 : index
    %c0_0 = arith.constant 0 : index
    %c0_1 = arith.constant 0 : index
    %c0_2 = arith.constant 0 : index
    %c0_3 = arith.constant 0 : index
    %0 = vector.load %arg2[%c0, %c0_0, %c0_1, %c0_2, %c0_3] : memref<2x4x4x10x10xf32, #tpu.memory_space<vmem>>, vector<2x1x4x8x8xf32>
    %1 = vector.shape_cast %0 : vector<2x1x4x8x8xf32> to vector<2x4x8x8xf32>
    %c0_4 = arith.constant 0 : index
    %c1 = arith.constant 1 : index
    %c0_5 = arith.constant 0 : index
    %c0_6 = arith.constant 0 : index
    %c0_7 = arith.constant 0 : index
    %2 = vector.load %arg2[%c0_4, %c1, %c0_5, %c0_6, %c0_7] : memref<2x4x4x10x10xf32, #tpu.memory_space<vmem>>, vector<2x1x4x8x8xf32>
    %3 = vector.shape_cast %2 : vector<2x1x4x8x8xf32> to vector<2x4x8x8xf32>
    %c0_8 = arith.constant 0 : index
    %c0_9 = arith.constant 0 : index
    %c0_10 = arith.constant 0 : index
    %c0_11 = arith.constant 0 : index
    %c1_12 = arith.constant 1 : index
    %4 = vector.load %arg2[%c0_8, %c0_9, %c0_10, %c0_11, %c1_12] : memref<2x4x4x10x10xf32, #tpu.memory_space<vmem>>, vector<2x1x4x8x8xf32>
    %5 = vector.shape_cast %4 : vector<2x1x4x8x8xf32> to vector<2x4x8x8xf32>
    %c0_13 = arith.constant 0 : index
    %c1_14 = arith.constant 1 : index
    %c0_15 = arith.constant 0 : index
    %c0_16 = arith.constant 0 : index
    %c1_17 = arith.constant 1 : index
    %6 = vector.load %arg2[%c0_13, %c1_14, %c0_15, %c0_16, %c1_17] : memref<2x4x4x10x10xf32, #tpu.memory_space<vmem>>, vector<2x1x4x8x8xf32>
    %7 = vector.shape_cast %6 : vector<2x1x4x8x8xf32> to vector<2x4x8x8xf32>
    %c0_18 = arith.constant 0 : index
    %c0_19 = arith.constant 0 : index
    %c0_20 = arith.constant 0 : index
    %c0_21 = arith.constant 0 : index
    %c2 = arith.constant 2 : index
    %8 = vector.load %arg2[%c0_18, %c0_19, %c0_20, %c0_21, %c2] : memref<2x4x4x10x10xf32, #tpu.memory_space<vmem>>, vector<2x1x4x8x8xf32>
    %9 = vector.shape_cast %8 : vector<2x1x4x8x8xf32> to vector<2x4x8x8xf32>
    %c0_22 = arith.constant 0 : index
    %c2_23 = arith.constant 2 : index
    %c0_24 = arith.constant 0 : index
    %c0_25 = arith.constant 0 : index
    %c0_26 = arith.constant 0 : index
    %10 = vector.load %arg2[%c0_22, %c2_23, %c0_24, %c0_25, %c0_26] : memref<2x4x4x10x10xf32, #tpu.memory_space<vmem>>, vector<2x1x4x8x8xf32>
    %11 = vector.shape_cast %10 : vector<2x1x4x8x8xf32> to vector<2x4x8x8xf32>
    %c0_27 = arith.constant 0 : index
    %c3 = arith.constant 3 : index
    %c0_28 = arith.constant 0 : index
    %c0_29 = arith.constant 0 : index
    %c0_30 = arith.constant 0 : index
    %12 = vector.load %arg2[%c0_27, %c3, %c0_28, %c0_29, %c0_30] : memref<2x4x4x10x10xf32, #tpu.memory_space<vmem>>, vector<2x1x4x8x8xf32>
    %13 = vector.shape_cast %12 : vector<2x1x4x8x8xf32> to vector<2x4x8x8xf32>
    %c0_31 = arith.constant 0 : index
    %c2_32 = arith.constant 2 : index
    %c0_33 = arith.constant 0 : index
    %c0_34 = arith.constant 0 : index
    %c1_35 = arith.constant 1 : index
    %14 = vector.load %arg2[%c0_31, %c2_32, %c0_33, %c0_34, %c1_35] : memref<2x4x4x10x10xf32, #tpu.memory_space<vmem>>, vector<2x1x4x8x8xf32>
    %15 = vector.shape_cast %14 : vector<2x1x4x8x8xf32> to vector<2x4x8x8xf32>
    %c0_36 = arith.constant 0 : index
    %c3_37 = arith.constant 3 : index
    %c0_38 = arith.constant 0 : index
    %c0_39 = arith.constant 0 : index
    %c1_40 = arith.constant 1 : index
    %16 = vector.load %arg2[%c0_36, %c3_37, %c0_38, %c0_39, %c1_40] : memref<2x4x4x10x10xf32, #tpu.memory_space<vmem>>, vector<2x1x4x8x8xf32>
    %17 = vector.shape_cast %16 : vector<2x1x4x8x8xf32> to vector<2x4x8x8xf32>
    %c0_41 = arith.constant 0 : index
    %c2_42 = arith.constant 2 : index
    %c0_43 = arith.constant 0 : index
    %c0_44 = arith.constant 0 : index
    %c2_45 = arith.constant 2 : index
    %18 = vector.load %arg2[%c0_41, %c2_42, %c0_43, %c0_44, %c2_45] : memref<2x4x4x10x10xf32, #tpu.memory_space<vmem>>, vector<2x1x4x8x8xf32>
    %19 = vector.shape_cast %18 : vector<2x1x4x8x8xf32> to vector<2x4x8x8xf32>
    %c0_46 = arith.constant 0 : index
    %c0_47 = arith.constant 0 : index
    %c0_48 = arith.constant 0 : index
    %c1_49 = arith.constant 1 : index
    %c0_50 = arith.constant 0 : index
    %20 = vector.load %arg2[%c0_46, %c0_47, %c0_48, %c1_49, %c0_50] : memref<2x4x4x10x10xf32, #tpu.memory_space<vmem>>, vector<2x1x4x8x8xf32>
    %21 = vector.shape_cast %20 : vector<2x1x4x8x8xf32> to vector<2x4x8x8xf32>
    %c0_51 = arith.constant 0 : index
    %c1_52 = arith.constant 1 : index
    %c0_53 = arith.constant 0 : index
    %c1_54 = arith.constant 1 : index
    %c0_55 = arith.constant 0 : index
    %22 = vector.load %arg2[%c0_51, %c1_52, %c0_53, %c1_54, %c0_55] : memref<2x4x4x10x10xf32, #tpu.memory_space<vmem>>, vector<2x1x4x8x8xf32>
    %23 = vector.shape_cast %22 : vector<2x1x4x8x8xf32> to vector<2x4x8x8xf32>
    %c0_56 = arith.constant 0 : index
    %c0_57 = arith.constant 0 : index
    %c0_58 = arith.constant 0 : index
    %c1_59 = arith.constant 1 : index
    %c1_60 = arith.constant 1 : index
    %24 = vector.load %arg2[%c0_56, %c0_57, %c0_58, %c1_59, %c1_60] : memref<2x4x4x10x10xf32, #tpu.memory_space<vmem>>, vector<2x1x4x8x8xf32>
    %25 = vector.shape_cast %24 : vector<2x1x4x8x8xf32> to vector<2x4x8x8xf32>
    %c0_61 = arith.constant 0 : index
    %c1_62 = arith.constant 1 : index
    %c0_63 = arith.constant 0 : index
    %c1_64 = arith.constant 1 : index
    %c1_65 = arith.constant 1 : index
    %26 = vector.load %arg2[%c0_61, %c1_62, %c0_63, %c1_64, %c1_65] : memref<2x4x4x10x10xf32, #tpu.memory_space<vmem>>, vector<2x1x4x8x8xf32>
    %27 = vector.shape_cast %26 : vector<2x1x4x8x8xf32> to vector<2x4x8x8xf32>
    %c0_66 = arith.constant 0 : index
    %c0_67 = arith.constant 0 : index
    %c0_68 = arith.constant 0 : index
    %c1_69 = arith.constant 1 : index
    %c2_70 = arith.constant 2 : index
    %28 = vector.load %arg2[%c0_66, %c0_67, %c0_68, %c1_69, %c2_70] : memref<2x4x4x10x10xf32, #tpu.memory_space<vmem>>, vector<2x1x4x8x8xf32>
    %29 = vector.shape_cast %28 : vector<2x1x4x8x8xf32> to vector<2x4x8x8xf32>
    %c0_71 = arith.constant 0 : index
    %c2_72 = arith.constant 2 : index
    %c0_73 = arith.constant 0 : index
    %c1_74 = arith.constant 1 : index
    %c0_75 = arith.constant 0 : index
    %30 = vector.load %arg2[%c0_71, %c2_72, %c0_73, %c1_74, %c0_75] : memref<2x4x4x10x10xf32, #tpu.memory_space<vmem>>, vector<2x1x4x8x8xf32>
    %31 = vector.shape_cast %30 : vector<2x1x4x8x8xf32> to vector<2x4x8x8xf32>
    %c0_76 = arith.constant 0 : index
    %c3_77 = arith.constant 3 : index
    %c0_78 = arith.constant 0 : index
    %c1_79 = arith.constant 1 : index
    %c0_80 = arith.constant 0 : index
    %32 = vector.load %arg2[%c0_76, %c3_77, %c0_78, %c1_79, %c0_80] : memref<2x4x4x10x10xf32, #tpu.memory_space<vmem>>, vector<2x1x4x8x8xf32>
    %33 = vector.shape_cast %32 : vector<2x1x4x8x8xf32> to vector<2x4x8x8xf32>
    %c0_81 = arith.constant 0 : index
    %c2_82 = arith.constant 2 : index
    %c0_83 = arith.constant 0 : index
    %c1_84 = arith.constant 1 : index
    %c1_85 = arith.constant 1 : index
    %34 = vector.load %arg2[%c0_81, %c2_82, %c0_83, %c1_84, %c1_85] : memref<2x4x4x10x10xf32, #tpu.memory_space<vmem>>, vector<2x1x4x8x8xf32>
    %35 = vector.shape_cast %34 : vector<2x1x4x8x8xf32> to vector<2x4x8x8xf32>
    %c0_86 = arith.constant 0 : index
    %c3_87 = arith.constant 3 : index
    %c0_88 = arith.constant 0 : index
    %c1_89 = arith.constant 1 : index
    %c1_90 = arith.constant 1 : index
    %36 = vector.load %arg2[%c0_86, %c3_87, %c0_88, %c1_89, %c1_90] : memref<2x4x4x10x10xf32, #tpu.memory_space<vmem>>, vector<2x1x4x8x8xf32>
    %37 = vector.shape_cast %36 : vector<2x1x4x8x8xf32> to vector<2x4x8x8xf32>
    %c0_91 = arith.constant 0 : index
    %c2_92 = arith.constant 2 : index
    %c0_93 = arith.constant 0 : index
    %c1_94 = arith.constant 1 : index
    %c2_95 = arith.constant 2 : index
    %38 = vector.load %arg2[%c0_91, %c2_92, %c0_93, %c1_94, %c2_95] : memref<2x4x4x10x10xf32, #tpu.memory_space<vmem>>, vector<2x1x4x8x8xf32>
    %39 = vector.shape_cast %38 : vector<2x1x4x8x8xf32> to vector<2x4x8x8xf32>
    %c0_96 = arith.constant 0 : index
    %c0_97 = arith.constant 0 : index
    %c0_98 = arith.constant 0 : index
    %c2_99 = arith.constant 2 : index
    %c0_100 = arith.constant 0 : index
    %40 = vector.load %arg2[%c0_96, %c0_97, %c0_98, %c2_99, %c0_100] : memref<2x4x4x10x10xf32, #tpu.memory_space<vmem>>, vector<2x1x4x8x8xf32>
    %41 = vector.shape_cast %40 : vector<2x1x4x8x8xf32> to vector<2x4x8x8xf32>
    %c0_101 = arith.constant 0 : index
    %c1_102 = arith.constant 1 : index
    %c0_103 = arith.constant 0 : index
    %c2_104 = arith.constant 2 : index
    %c0_105 = arith.constant 0 : index
    %42 = vector.load %arg2[%c0_101, %c1_102, %c0_103, %c2_104, %c0_105] : memref<2x4x4x10x10xf32, #tpu.memory_space<vmem>>, vector<2x1x4x8x8xf32>
    %43 = vector.shape_cast %42 : vector<2x1x4x8x8xf32> to vector<2x4x8x8xf32>
    %c0_106 = arith.constant 0 : index
    %c0_107 = arith.constant 0 : index
    %c0_108 = arith.constant 0 : index
    %c2_109 = arith.constant 2 : index
    %c1_110 = arith.constant 1 : index
    %44 = vector.load %arg2[%c0_106, %c0_107, %c0_108, %c2_109, %c1_110] : memref<2x4x4x10x10xf32, #tpu.memory_space<vmem>>, vector<2x1x4x8x8xf32>
    %45 = vector.shape_cast %44 : vector<2x1x4x8x8xf32> to vector<2x4x8x8xf32>
    %c0_111 = arith.constant 0 : index
    %c1_112 = arith.constant 1 : index
    %c0_113 = arith.constant 0 : index
    %c2_114 = arith.constant 2 : index
    %c1_115 = arith.constant 1 : index
    %46 = vector.load %arg2[%c0_111, %c1_112, %c0_113, %c2_114, %c1_115] : memref<2x4x4x10x10xf32, #tpu.memory_space<vmem>>, vector<2x1x4x8x8xf32>
    %47 = vector.shape_cast %46 : vector<2x1x4x8x8xf32> to vector<2x4x8x8xf32>
    %c0_116 = arith.constant 0 : index
    %c0_117 = arith.constant 0 : index
    %c0_118 = arith.constant 0 : index
    %c2_119 = arith.constant 2 : index
    %c2_120 = arith.constant 2 : index
    %48 = vector.load %arg2[%c0_116, %c0_117, %c0_118, %c2_119, %c2_120] : memref<2x4x4x10x10xf32, #tpu.memory_space<vmem>>, vector<2x1x4x8x8xf32>
    %49 = vector.shape_cast %48 : vector<2x1x4x8x8xf32> to vector<2x4x8x8xf32>
    %50 = vector.shape_cast %1 : vector<2x4x8x8xf32> to vector<2x1x4x8x8xf32>
    %51 = vector.shape_cast %3 : vector<2x4x8x8xf32> to vector<2x1x4x8x8xf32>
    %52 = vector.shape_cast %5 : vector<2x4x8x8xf32> to vector<2x1x4x8x8xf32>
    %53 = vector.shape_cast %7 : vector<2x4x8x8xf32> to vector<2x1x4x8x8xf32>
    %54 = vector.shape_cast %9 : vector<2x4x8x8xf32> to vector<2x1x4x8x8xf32>
    %55 = vector.shape_cast %11 : vector<2x4x8x8xf32> to vector<2x1x4x8x8xf32>
    %56 = vector.shape_cast %13 : vector<2x4x8x8xf32> to vector<2x1x4x8x8xf32>
    %57 = vector.shape_cast %15 : vector<2x4x8x8xf32> to vector<2x1x4x8x8xf32>
    %58 = vector.shape_cast %17 : vector<2x4x8x8xf32> to vector<2x1x4x8x8xf32>
    %59 = vector.shape_cast %19 : vector<2x4x8x8xf32> to vector<2x1x4x8x8xf32>
    %60 = vector.shape_cast %21 : vector<2x4x8x8xf32> to vector<2x1x4x8x8xf32>
    %61 = vector.shape_cast %23 : vector<2x4x8x8xf32> to vector<2x1x4x8x8xf32>
    %62 = vector.shape_cast %25 : vector<2x4x8x8xf32> to vector<2x1x4x8x8xf32>
    %63 = vector.shape_cast %27 : vector<2x4x8x8xf32> to vector<2x1x4x8x8xf32>
    %64 = vector.shape_cast %29 : vector<2x4x8x8xf32> to vector<2x1x4x8x8xf32>
    %65 = vector.shape_cast %31 : vector<2x4x8x8xf32> to vector<2x1x4x8x8xf32>
    %66 = vector.shape_cast %33 : vector<2x4x8x8xf32> to vector<2x1x4x8x8xf32>
    %67 = vector.shape_cast %35 : vector<2x4x8x8xf32> to vector<2x1x4x8x8xf32>
    %68 = vector.shape_cast %37 : vector<2x4x8x8xf32> to vector<2x1x4x8x8xf32>
    %69 = vector.shape_cast %39 : vector<2x4x8x8xf32> to vector<2x1x4x8x8xf32>
    %70 = vector.shape_cast %41 : vector<2x4x8x8xf32> to vector<2x1x4x8x8xf32>
    %71 = vector.shape_cast %43 : vector<2x4x8x8xf32> to vector<2x1x4x8x8xf32>
    %72 = vector.shape_cast %45 : vector<2x4x8x8xf32> to vector<2x1x4x8x8xf32>
    %73 = vector.shape_cast %47 : vector<2x4x8x8xf32> to vector<2x1x4x8x8xf32>
    %74 = vector.shape_cast %49 : vector<2x4x8x8xf32> to vector<2x1x4x8x8xf32>
    %75 = tpu.concatenate %50, %51, %52, %53, %54, %55, %56, %57, %58, %59, %60, %61, %62, %63, %64, %65 in 1 : vector<2x1x4x8x8xf32>, vector<2x1x4x8x8xf32>, vector<2x1x4x8x8xf32>, vector<2x1x4x8x8xf32>, vector<2x1x4x8x8xf32>, vector<2x1x4x8x8xf32>, vector<2x1x4x8x8xf32>, vector<2x1x4x8x8xf32>, vector<2x1x4x8x8xf32>, vector<2x1x4x8x8xf32>, vector<2x1x4x8x8xf32>, vector<2x1x4x8x8xf32>, vector<2x1x4x8x8xf32>, vector<2x1x4x8x8xf32>, vector<2x1x4x8x8xf32>, vector<2x1x4x8x8xf32> -> vector<2x16x4x8x8xf32>
    %76 = tpu.concatenate %66, %67, %68, %69, %70, %71, %72, %73, %74 in 1 : vector<2x1x4x8x8xf32>, vector<2x1x4x8x8xf32>, vector<2x1x4x8x8xf32>, vector<2x1x4x8x8xf32>, vector<2x1x4x8x8xf32>, vector<2x1x4x8x8xf32>, vector<2x1x4x8x8xf32>, vector<2x1x4x8x8xf32>, vector<2x1x4x8x8xf32> -> vector<2x9x4x8x8xf32>
    %77 = tpu.concatenate %75, %76 in 1 : vector<2x16x4x8x8xf32>, vector<2x9x4x8x8xf32> -> vector<2x25x4x8x8xf32>
    %78 = vector.shape_cast %77 : vector<2x25x4x8x8xf32> to vector<2x100x64xf32>
    %c0_121 = arith.constant 0 : index
    %c0_122 = arith.constant 0 : index
    %79 = vector.load %arg3[%c0_121, %c0_122] : memref<8x100xf32, #tpu.memory_space<vmem>>, vector<8x100xf32>
    %80 = vector.shape_cast %79 : vector<8x100xf32> to vector<1x8x100xf32>
    %81 = vector.shape_cast %80 : vector<1x8x100xf32> to vector<1x8x100xf32>
    %82 = vector.broadcast %81 : vector<1x8x100xf32> to vector<2x8x100xf32>
    %cst = arith.constant dense<0.000000e+00> : vector<2x8x64xf32>
    %83 = tpu.matmul %82, %78, %cst {dimension_numbers = #tpu.dot_dimension_numbers<[2], [1], [1], [2], [0, 0, 0, 1, 1, 2], [0], [0]>} : vector<2x8x100xf32>, vector<2x100x64xf32>, vector<2x8x64xf32> -> vector<2x8x64xf32>
    %c0_123 = arith.constant 0 : index
    %c0_124 = arith.constant 0 : index
    %84 = vector.load %arg4[%c0_123, %c0_124] : memref<8x1xf32, #tpu.memory_space<vmem>>, vector<8x1xf32>
    %85 = vector.shape_cast %84 : vector<8x1xf32> to vector<1x8x1xf32>
    %86 = vector.broadcast %85 : vector<1x8x1xf32> to vector<2x8x64xf32>
    %87 = arith.addf %83, %86 : vector<2x8x64xf32>
    %c0_125 = arith.constant 0 : index
    %c0_126 = arith.constant 0 : index
    %c0_127 = arith.constant 0 : index
    %88 = vector.load %arg5[%c0_125, %c0_126, %c0_127] : memref<2x8x64xf32, #tpu.memory_space<vmem>>, vector<2x8x64xf32>
    tpu.vector_store %arg5[%c0_125, %c0_126, %c0_127], %87 {strides = array<i32>} : memref<2x8x64xf32, #tpu.memory_space<vmem>>, vector<2x8x64xf32>,
    return
  }
  func.func @transform_0(%arg0: i32, %arg1: i32) -> (i32, i32, i32, i32, i32) {
    %c0_i32 = arith.constant 0 : i32
    %c0_i32_0 = arith.constant 0 : i32
    %c0_i32_1 = arith.constant 0 : i32
    %c0_i32_2 = arith.constant 0 : i32
    %c0_i32_3 = arith.constant 0 : i32
    return %arg0, %c0_i32, %c0_i32_0, %c0_i32_1, %c0_i32_2 : i32, i32, i32, i32, i32
  }
  func.func @transform_1(%arg0: i32, %arg1: i32) -> (i32, i32) {
    %c0_i32 = arith.constant 0 : i32
    %c0_i32_0 = arith.constant 0 : i32
    %c0_i32_1 = arith.constant 0 : i32
    return %c0_i32, %c0_i32_0 : i32, i32
  }
  func.func @transform_2(%arg0: i32, %arg1: i32) -> (i32, i32) {
    %c0_i32 = arith.constant 0 : i32
    %c0_i32_0 = arith.constant 0 : i32
    %c0_i32_1 = arith.constant 0 : i32
    return %c0_i32, %c0_i32_0 : i32, i32
  }
  func.func @transform_3(%arg0: i32, %arg1: i32) -> (i32, i32, i32) {
    %c0_i32 = arith.constant 0 : i32
    %c0_i32_0 = arith.constant 0 : i32
    return %arg0, %c0_i32, %arg1 : i32, i32, i32
  }
}

</mosaic_0001>

<llo_original>
// kernel: tpu_custom_call.1
$region0: #{tpu_custom_call.1}
  #allocation0 [shape = 'u32[]', space=smem, size = 0x4, offset = 0x4, fixed_abs, tag = 'smem constant byte address 0x4 - core index']
  #allocation1 [shape = 'u32[72,128]{1,0:T(1,128)}', space=vmem, size = 0x9000, scoped, tag = 'internal scratch']
  %s0 = inlined_call_operand.vmem [shape: f32[2,4,4,10,10], index: 0, kind: input, shape index: {}]
  %s1 = inlined_call_operand.vmem [shape: f32[8,100], index: 1, kind: input, shape index: {}]
  %s2 = inlined_call_operand.vmem [shape: f32[8,1], index: 2, kind: input, shape index: {}]
  %s3 = inlined_call_operand.hbm [shape: f32[2,8,64], index: 3, kind: output, shape index: {}]
  %s4 = sld [smem:[#allocation0]]
  $region22: #{tpu_custom_call.1} parent=0
    _
  %s6 = ssub.s32 1, %s4
  %s7 = scalar_select 0, %s6, %s4
  $region1: #{tpu_custom_call.1} parent=0
    #allocation2 [shape = 'u8[8192]{0}', space=vmem, size = 0x2000, scoped, tag = 'output window, operand 0, single buffered']
    #allocation3 [shape = 's32[1]{0}', space=sflag, size = 0x4, scoped, tag = 'scoped memory for tpu_custom_call.1']
    %8 = vsyncpa [#allocation3], 0
    // Predicated region
    $region2: #{tpu_custom_call.1} parent=1 // pred_check
      _
    $region3: #{tpu_custom_call.1} parent=1 // pred_check_branch
      %10 = sbr.rel (0) target = $region5
    $region4: #{tpu_custom_call.1} parent=1 // pred_region
      _
    $region5: #{tpu_custom_call.1} parent=1 // pred_fallthru
      _
    // Predicated region
    $region6: #{tpu_custom_call.1} parent=1 // pred_check
      _
    $region7: #{tpu_custom_call.1} parent=1 // pred_check_branch
      %12 = sbr.rel (0) target = $region9
    $region8: #{tpu_custom_call.1} parent=1 // pred_region
      _
    $region9: #{tpu_custom_call.1} parent=1 // pred_fallthru
      _
    // Predicated region
    $region10: #{tpu_custom_call.1} parent=1 // pred_check
      _
    $region11: #{tpu_custom_call.1} parent=1 // pred_check_branch
      %14 = sbr.rel (0) target = $region13
    $region12: #{tpu_custom_call.1} parent=1 // pred_region
      _
    $region13: #{tpu_custom_call.1} parent=1 // pred_fallthru
      _
    %v15 = vld [vmem:[%s0] sm:$0xff]
    %v16 = vld [vmem:[%s0 + $0x10] sm:$0xff]
    %v17 = vld [vmem:[%s0 + $0x20] sm:$0xff]
    %v18 = vld [vmem:[%s0 + $0x30] sm:$0xff]
    %v19 = vld [vmem:[%s0 + $0x100] sm:$0xff]
    %v20 = vld [vmem:[%s0 + $0x110] sm:$0xff]
    %v21 = vld [vmem:[%s0 + $0x120] sm:$0xff]
    %v22 = vld [vmem:[%s0 + $0x130] sm:$0xff]
    %s23 = scalar_lea.vmem %s0, 64
    %v24 = vld [vmem:[%s23] sm:$0xff]
    %v25 = vld [vmem:[%s23 + $0x10] sm:$0xff]
    %v26 = vld [vmem:[%s23 + $0x20] sm:$0xff]
    %v27 = vld [vmem:[%s23 + $0x30] sm:$0xff]
    %v28 = vld [vmem:[%s23 + $0x100] sm:$0xff]
    %v29 = vld [vmem:[%s23 + $0x110] sm:$0xff]
    %v30 = vld [vmem:[%s23 + $0x120] sm:$0xff]
    %v31 = vld [vmem:[%s23 + $0x130] sm:$0xff]
    %s32 = scalar_lea.vmem %s0, 128
    %v33 = vld [vmem:[%s32] sm:$0xff]
    %v34 = vld [vmem:[%s32 + $0x10] sm:$0xff]
    %v35 = vld [vmem:[%s32 + $0x20] sm:$0xff]
    %v36 = vld [vmem:[%s32 + $0x30] sm:$0xff]
    %v37 = vld [vmem:[%s32 + $0x100] sm:$0xff]
    %v38 = vld [vmem:[%s32 + $0x110] sm:$0xff]
    %v39 = vld [vmem:[%s32 + $0x120] sm:$0xff]
    %v40 = vld [vmem:[%s32 + $0x130] sm:$0xff]
    %s41 = scalar_lea.vmem %s0, 192
    %v42 = vld [vmem:[%s41] sm:$0xff]
    %v43 = vld [vmem:[%s41 + $0x10] sm:$0xff]
    %v44 = vld [vmem:[%s41 + $0x20] sm:$0xff]
    %v45 = vld [vmem:[%s41 + $0x30] sm:$0xff]
    %v46 = vld [vmem:[%s41 + $0x100] sm:$0xff]
    %v47 = vld [vmem:[%s41 + $0x110] sm:$0xff]
    %v48 = vld [vmem:[%s41 + $0x120] sm:$0xff]
    %v49 = vld [vmem:[%s41 + $0x130] sm:$0xff]
    %v50 = vld [vmem:[%s0 + $0x1] sm:$0xff]
    %v51 = vld [vmem:[%s0 + $0x11] sm:$0xff]
    %v52 = vld [vmem:[%s0 + $0x21] sm:$0xff]
    %v53 = vld [vmem:[%s0 + $0x31] sm:$0xff]
    %v54 = vld [vmem:[%s0 + $0x101] sm:$0xff]
    %v55 = vld [vmem:[%s0 + $0x111] sm:$0xff]
    %v56 = vld [vmem:[%s0 + $0x121] sm:$0xff]
    %v57 = vld [vmem:[%s0 + $0x131] sm:$0xff]
    %v58 = vld [vmem:[%s23 + $0x1] sm:$0xff]
    %v59 = vld [vmem:[%s23 + $0x11] sm:$0xff]
    %v60 = vld [vmem:[%s23 + $0x21] sm:$0xff]
    %v61 = vld [vmem:[%s23 + $0x31] sm:$0xff]
    %v62 = vld [vmem:[%s23 + $0x101] sm:$0xff]
    %v63 = vld [vmem:[%s23 + $0x111] sm:$0xff]
    %v64 = vld [vmem:[%s23 + $0x121] sm:$0xff]
    %v65 = vld [vmem:[%s23 + $0x131] sm:$0xff]
    %v66 = vld [vmem:[%s32 + $0x1] sm:$0xff]
    %v67 = vld [vmem:[%s32 + $0x11] sm:$0xff]
    %v68 = vld [vmem:[%s32 + $0x21] sm:$0xff]
    %v69 = vld [vmem:[%s32 + $0x31] sm:$0xff]
    %v70 = vld [vmem:[%s32 + $0x101] sm:$0xff]
    %v71 = vld [vmem:[%s32 + $0x111] sm:$0xff]
    %v72 = vld [vmem:[%s32 + $0x121] sm:$0xff]
    %v73 = vld [vmem:[%s32 + $0x131] sm:$0xff]
    %v74 = vld [vmem:[%s41 + $0x1] sm:$0xff]
    %v75 = vld [vmem:[%s41 + $0x11] sm:$0xff]
    %v76 = vld [vmem:[%s41 + $0x21] sm:$0xff]
    %v77 = vld [vmem:[%s41 + $0x31] sm:$0xff]
    %v78 = vld [vmem:[%s41 + $0x101] sm:$0xff]
    %v79 = vld [vmem:[%s41 + $0x111] sm:$0xff]
    %v80 = vld [vmem:[%s41 + $0x121] sm:$0xff]
    %v81 = vld [vmem:[%s41 + $0x131] sm:$0xff]
    %v82 = vld [vmem:[%s0 + $0x2] sm:$0xff]
    %v83 = vld [vmem:[%s0 + $0x12] sm:$0xff]
    %v84 = vld [vmem:[%s0 + $0x22] sm:$0xff]
    %v85 = vld [vmem:[%s0 + $0x32] sm:$0xff]
    %v86 = vld [vmem:[%s0 + $0x102] sm:$0xff]
    %v87 = vld [vmem:[%s0 + $0x112] sm:$0xff]
    %v88 = vld [vmem:[%s0 + $0x122] sm:$0xff]
    %v89 = vld [vmem:[%s0 + $0x132] sm:$0xff]
    %v90 = vld [vmem:[%s23 + $0x2] sm:$0xff]
    %v91 = vld [vmem:[%s23 + $0x12] sm:$0xff]
    %v92 = vld [vmem:[%s23 + $0x22] sm:$0xff]
    %v93 = vld [vmem:[%s23 + $0x32] sm:$0xff]
    %v94 = vld [vmem:[%s23 + $0x102] sm:$0xff]
    %v95 = vld [vmem:[%s23 + $0x112] sm:$0xff]
    %v96 = vld [vmem:[%s23 + $0x122] sm:$0xff]
    %v97 = vld [vmem:[%s23 + $0x132] sm:$0xff]
    %106 = vrot.lane.b32.xlu0 %v15, 127
    %v107 = vpop.permute.xlu0 %106
    %108 = vrot.lane.b32.xlu0 %v16, 127
    %v109 = vpop.permute.xlu0 %108
    %110 = vrot.lane.b32.xlu0 %v17, 127
    %v111 = vpop.permute.xlu0 %110
    %112 = vrot.lane.b32.xlu0 %v18, 127
    %v113 = vpop.permute.xlu0 %112
    %114 = vrot.lane.b32.xlu0 %v19, 127
    %v115 = vpop.permute.xlu0 %114
    %116 = vrot.lane.b32.xlu0 %v20, 127
    %v117 = vpop.permute.xlu0 %116
    %118 = vrot.lane.b32.xlu0 %v21, 127
    %v119 = vpop.permute.xlu0 %118
    %120 = vrot.lane.b32.xlu0 %v22, 127
    %v121 = vpop.permute.xlu0 %120
    %138 = vrot.lane.b32.xlu0 %v24, 127
    %v139 = vpop.permute.xlu0 %138
    %140 = vrot.lane.b32.xlu0 %v25, 127
    %v141 = vpop.permute.xlu0 %140
    %142 = vrot.lane.b32.xlu0 %v26, 127
    %v143 = vpop.permute.xlu0 %142
    %144 = vrot.lane.b32.xlu0 %v27, 127
    %v145 = vpop.permute.xlu0 %144
    %146 = vrot.lane.b32.xlu0 %v28, 127
    %v147 = vpop.permute.xlu0 %146
    %148 = vrot.lane.b32.xlu0 %v29, 127
    %v149 = vpop.permute.xlu0 %148
    %150 = vrot.lane.b32.xlu0 %v30, 127
    %v151 = vpop.permute.xlu0 %150
    %152 = vrot.lane.b32.xlu0 %v31, 127
    %v153 = vpop.permute.xlu0 %152
    %162 = vrot.lane.b32.xlu0 %v15, 126
    %v163 = vpop.permute.xlu0 %162
    %164 = vrot.lane.b32.xlu0 %v16, 126
    %v165 = vpop.permute.xlu0 %164
    %166 = vrot.lane.b32.xlu0 %v17, 126
    %v167 = vpop.permute.xlu0 %166
    %168 = vrot.lane.b32.xlu0 %v18, 126
    %v169 = vpop.permute.xlu0 %168
    %170 = vrot.lane.b32.xlu0 %v19, 126
    %v171 = vpop.permute.xlu0 %170
    %172 = vrot.lane.b32.xlu0 %v20, 126
    %v173 = vpop.permute.xlu0 %172
    %174 = vrot.lane.b32.xlu0 %v21, 126
    %v175 = vpop.permute.xlu0 %174
    %176 = vrot.lane.b32.xlu0 %v22, 126
    %v177 = vpop.permute.xlu0 %176
    %194 = vrot.lane.b32.xlu0 %v33, 127
    %v195 = vpop.permute.xlu0 %194
    %196 = vrot.lane.b32.xlu0 %v34, 127
    %v197 = vpop.permute.xlu0 %196
    %198 = vrot.lane.b32.xlu0 %v35, 127
    %v199 = vpop.permute.xlu0 %198
    %200 = vrot.lane.b32.xlu0 %v36, 127
    %v201 = vpop.permute.xlu0 %200
    %202 = vrot.lane.b32.xlu0 %v37, 127
    %v203 = vpop.permute.xlu0 %202
    %204 = vrot.lane.b32.xlu0 %v38, 127
    %v205 = vpop.permute.xlu0 %204
    %206 = vrot.lane.b32.xlu0 %v39, 127
    %v207 = vpop.permute.xlu0 %206
    %208 = vrot.lane.b32.xlu0 %v40, 127
    %v209 = vpop.permute.xlu0 %208
    %226 = vrot.lane.b32.xlu0 %v42, 127
    %v227 = vpop.permute.xlu0 %226
    %228 = vrot.lane.b32.xlu0 %v43, 127
    %v229 = vpop.permute.xlu0 %228
    %230 = vrot.lane.b32.xlu0 %v44, 127
    %v231 = vpop.permute.xlu0 %230
    %232 = vrot.lane.b32.xlu0 %v45, 127
    %v233 = vpop.permute.xlu0 %232
    %234 = vrot.lane.b32.xlu0 %v46, 127
    %v235 = vpop.permute.xlu0 %234
    %236 = vrot.lane.b32.xlu0 %v47, 127
    %v237 = vpop.permute.xlu0 %236
    %238 = vrot.lane.b32.xlu0 %v48, 127
    %v239 = vpop.permute.xlu0 %238
    %240 = vrot.lane.b32.xlu0 %v49, 127
    %v241 = vpop.permute.xlu0 %240
    %250 = vrot.lane.b32.xlu0 %v33, 126
    %v251 = vpop.permute.xlu0 %250
    %252 = vrot.lane.b32.xlu0 %v34, 126
    %v253 = vpop.permute.xlu0 %252
    %254 = vrot.lane.b32.xlu0 %v35, 126
    %v255 = vpop.permute.xlu0 %254
    %256 = vrot.lane.b32.xlu0 %v36, 126
    %v257 = vpop.permute.xlu0 %256
    %258 = vrot.lane.b32.xlu0 %v37, 126
    %v259 = vpop.permute.xlu0 %258
    %260 = vrot.lane.b32.xlu0 %v38, 126
    %v261 = vpop.permute.xlu0 %260
    %262 = vrot.lane.b32.xlu0 %v39, 126
    %v263 = vpop.permute.xlu0 %262
    %264 = vrot.lane.b32.xlu0 %v40, 126
    %v265 = vpop.permute.xlu0 %264
    %282 = vrot.lane.b32.xlu0 %v50, 127
    %v283 = vpop.permute.xlu0 %282
    %284 = vrot.lane.b32.xlu0 %v51, 127
    %v285 = vpop.permute.xlu0 %284
    %286 = vrot.lane.b32.xlu0 %v52, 127
    %v287 = vpop.permute.xlu0 %286
    %288 = vrot.lane.b32.xlu0 %v53, 127
    %v289 = vpop.permute.xlu0 %288
    %290 = vrot.lane.b32.xlu0 %v54, 127
    %v291 = vpop.permute.xlu0 %290
    %292 = vrot.lane.b32.xlu0 %v55, 127
    %v293 = vpop.permute.xlu0 %292
    %294 = vrot.lane.b32.xlu0 %v56, 127
    %v295 = vpop.permute.xlu0 %294
    %296 = vrot.lane.b32.xlu0 %v57, 127
    %v297 = vpop.permute.xlu0 %296
    %314 = vrot.lane.b32.xlu0 %v58, 127
    %v315 = vpop.permute.xlu0 %314
    %316 = vrot.lane.b32.xlu0 %v59, 127
    %v317 = vpop.permute.xlu0 %316
    %318 = vrot.lane.b32.xlu0 %v60, 127
    %v319 = vpop.permute.xlu0 %318
    %320 = vrot.lane.b32.xlu0 %v61, 127
    %v321 = vpop.permute.xlu0 %320
    %322 = vrot.lane.b32.xlu0 %v62, 127
    %v323 = vpop.permute.xlu0 %322
    %324 = vrot.lane.b32.xlu0 %v63, 127
    %v325 = vpop.permute.xlu0 %324
    %326 = vrot.lane.b32.xlu0 %v64, 127
    %v327 = vpop.permute.xlu0 %326
    %328 = vrot.lane.b32.xlu0 %v65, 127
    %v329 = vpop.permute.xlu0 %328
    %338 = vrot.lane.b32.xlu0 %v50, 126
    %v339 = vpop.permute.xlu0 %338
    %340 = vrot.lane.b32.xlu0 %v51, 126
    %v341 = vpop.permute.xlu0 %340
    %342 = vrot.lane.b32.xlu0 %v52, 126
    %v343 = vpop.permute.xlu0 %342
    %344 = vrot.lane.b32.xlu0 %v53, 126
    %v345 = vpop.permute.xlu0 %344
    %346 = vrot.lane.b32.xlu0 %v54, 126
    %v347 = vpop.permute.xlu0 %346
    %348 = vrot.lane.b32.xlu0 %v55, 126
    %v349 = vpop.permute.xlu0 %348
    %350 = vrot.lane.b32.xlu0 %v56, 126
    %v351 = vpop.permute.xlu0 %350
    %352 = vrot.lane.b32.xlu0 %v57, 126
    %v353 = vpop.permute.xlu0 %352
    %370 = vrot.lane.b32.xlu0 %v66, 127
    %v371 = vpop.permute.xlu0 %370
    %372 = vrot.lane.b32.xlu0 %v67, 127
    %v373 = vpop.permute.xlu0 %372
    %374 = vrot.lane.b32.xlu0 %v68, 127
    %v375 = vpop.permute.xlu0 %374
    %376 = vrot.lane.b32.xlu0 %v69, 127
    %v377 = vpop.permute.xlu0 %376
    %378 = vrot.lane.b32.xlu0 %v70, 127
    %v379 = vpop.permute.xlu0 %378
    %380 = vrot.lane.b32.xlu0 %v71, 127
    %v381 = vpop.permute.xlu0 %380
    %382 = vrot.lane.b32.xlu0 %v72, 127
    %v383 = vpop.permute.xlu0 %382
    %384 = vrot.lane.b32.xlu0 %v73, 127
    %v385 = vpop.permute.xlu0 %384
    %402 = vrot.lane.b32.xlu0 %v74, 127
    %v403 = vpop.permute.xlu0 %402
    %404 = vrot.lane.b32.xlu0 %v75, 127
    %v405 = vpop.permute.xlu0 %404
    %406 = vrot.lane.b32.xlu0 %v76, 127
    %v407 = vpop.permute.xlu0 %406
    %408 = vrot.lane.b32.xlu0 %v77, 127
    %v409 = vpop.permute.xlu0 %408
    %410 = vrot.lane.b32.xlu0 %v78, 127
    %v411 = vpop.permute.xlu0 %410
    %412 = vrot.lane.b32.xlu0 %v79, 127
    %v413 = vpop.permute.xlu0 %412
    %414 = vrot.lane.b32.xlu0 %v80, 127
    %v415 = vpop.permute.xlu0 %414
    %416 = vrot.lane.b32.xlu0 %v81, 127
    %v417 = vpop.permute.xlu0 %416
    %426 = vrot.lane.b32.xlu0 %v66, 126
    %v427 = vpop.permute.xlu0 %426
    %428 = vrot.lane.b32.xlu0 %v67, 126
    %v429 = vpop.permute.xlu0 %428
    %430 = vrot.lane.b32.xlu0 %v68, 126
    %v431 = vpop.permute.xlu0 %430
    %432 = vrot.lane.b32.xlu0 %v69, 126
    %v433 = vpop.permute.xlu0 %432
    %434 = vrot.lane.b32.xlu0 %v70, 126
    %v435 = vpop.permute.xlu0 %434
    %436 = vrot.lane.b32.xlu0 %v71, 126
    %v437 = vpop.permute.xlu0 %436
    %438 = vrot.lane.b32.xlu0 %v72, 126
    %v439 = vpop.permute.xlu0 %438
    %440 = vrot.lane.b32.xlu0 %v73, 126
    %v441 = vpop.permute.xlu0 %440
    %458 = vrot.lane.b32.xlu0 %v82, 127
    %v459 = vpop.permute.xlu0 %458
    %460 = vrot.lane.b32.xlu0 %v83, 127
    %v461 = vpop.permute.xlu0 %460
    %462 = vrot.lane.b32.xlu0 %v84, 127
    %v463 = vpop.permute.xlu0 %462
    %464 = vrot.lane.b32.xlu0 %v85, 127
    %v465 = vpop.permute.xlu0 %464
    %466 = vrot.lane.b32.xlu0 %v86, 127
    %v467 = vpop.permute.xlu0 %466
    %468 = vrot.lane.b32.xlu0 %v87, 127
    %v469 = vpop.permute.xlu0 %468
    %470 = vrot.lane.b32.xlu0 %v88, 127
    %v471 = vpop.permute.xlu0 %470
    %472 = vrot.lane.b32.xlu0 %v89, 127
    %v473 = vpop.permute.xlu0 %472
    %490 = vrot.lane.b32.xlu0 %v90, 127
    %v491 = vpop.permute.xlu0 %490
    %492 = vrot.lane.b32.xlu0 %v91, 127
    %v493 = vpop.permute.xlu0 %492
    %494 = vrot.lane.b32.xlu0 %v92, 127
    %v495 = vpop.permute.xlu0 %494
    %496 = vrot.lane.b32.xlu0 %v93, 127
    %v497 = vpop.permute.xlu0 %496
    %498 = vrot.lane.b32.xlu0 %v94, 127
    %v499 = vpop.permute.xlu0 %498
    %500 = vrot.lane.b32.xlu0 %v95, 127
    %v501 = vpop.permute.xlu0 %500
    %502 = vrot.lane.b32.xlu0 %v96, 127
    %v503 = vpop.permute.xlu0 %502
    %504 = vrot.lane.b32.xlu0 %v97, 127
    %v505 = vpop.permute.xlu0 %504
    %514 = vrot.lane.b32.xlu0 %v82, 126
    %v515 = vpop.permute.xlu0 %514
    %516 = vrot.lane.b32.xlu0 %v83, 126
    %v517 = vpop.permute.xlu0 %516
    %518 = vrot.lane.b32.xlu0 %v84, 126
    %v519 = vpop.permute.xlu0 %518
    %520 = vrot.lane.b32.xlu0 %v85, 126
    %v521 = vpop.permute.xlu0 %520
    %522 = vrot.lane.b32.xlu0 %v86, 126
    %v523 = vpop.permute.xlu0 %522
    %524 = vrot.lane.b32.xlu0 %v87, 126
    %v525 = vpop.permute.xlu0 %524
    %526 = vrot.lane.b32.xlu0 %v88, 126
    %v527 = vpop.permute.xlu0 %526
    %528 = vrot.lane.b32.xlu0 %v89, 126
    %v529 = vpop.permute.xlu0 %528
    %v538 = vrot.slane %v17, 4
    %vm539 = vcmask 1047556
    %v540 = vsel %vm539, %v538, %v15
    %v541 = vrot.slane %v15, 4
    %v542 = vsel %vm539, %v17, %v541
    %v544 = vunpack.c.l.s4 1983009808
    %v545 = vunpack.c.0.s8 %v544
    %v546 = vperm.slane %v540, %v545
    %v548 = vunpack.c.l.s4 1983009808
    %v549 = vunpack.c.0.s8 %v548
    %v550 = vperm.slane %v542, %v549
    %v551 = vrot.slane %v18, 4
    %v552 = vsel %vm539, %v551, %v16
    %v553 = vrot.slane %v16, 4
    %v554 = vsel %vm539, %v18, %v553
    %v556 = vunpack.c.l.s4 1983009808
    %v557 = vunpack.c.0.s8 %v556
    %v558 = vperm.slane %v552, %v557
    %v560 = vunpack.c.l.s4 1983009808
    %v561 = vunpack.c.0.s8 %v560
    %v562 = vperm.slane %v554, %v561
    %v563 = vrot.slane %v26, 4
    %v564 = vsel %vm539, %v563, %v24
    %v565 = vrot.slane %v24, 4
    %v566 = vsel %vm539, %v26, %v565
    %v568 = vunpack.c.l.s4 1983009808
    %v569 = vunpack.c.0.s8 %v568
    %v570 = vperm.slane %v564, %v569
    %v572 = vunpack.c.l.s4 1983009808
    %v573 = vunpack.c.0.s8 %v572
    %v574 = vperm.slane %v566, %v573
    %v575 = vrot.slane %v27, 4
    %v576 = vsel %vm539, %v575, %v25
    %v577 = vrot.slane %v25, 4
    %v578 = vsel %vm539, %v27, %v577
    %v580 = vunpack.c.l.s4 1983009808
    %v581 = vunpack.c.0.s8 %v580
    %v582 = vperm.slane %v576, %v581
    %v584 = vunpack.c.l.s4 1983009808
    %v585 = vunpack.c.0.s8 %v584
    %v586 = vperm.slane %v578, %v585
    %v587 = vrot.slane %v558, 4
    %v588 = vsel %vm539, %v587, %v546
    %v589 = vrot.slane %v546, 4
    %v590 = vsel %vm539, %v558, %v589
    %v592 = vunpack.c.l.s4 1934713408
    %v593 = vunpack.c.0.s8 %v592
    %v594 = vperm.slane %v588, %v593
    %v596 = vunpack.c.l.s4 1934713408
    %v597 = vunpack.c.0.s8 %v596
    %v598 = vperm.slane %v590, %v597
    %v599 = vrot.slane %v562, 4
    %v600 = vsel %vm539, %v599, %v550
    %v601 = vrot.slane %v550, 4
    %v602 = vsel %vm539, %v562, %v601
    %v604 = vunpack.c.l.s4 1934713408
    %v605 = vunpack.c.0.s8 %v604
    %v606 = vperm.slane %v600, %v605
    %v608 = vunpack.c.l.s4 1934713408
    %v609 = vunpack.c.0.s8 %v608
    %v610 = vperm.slane %v602, %v609
    %v611 = vrot.slane %v582, 4
    %v612 = vsel %vm539, %v611, %v570
    %v613 = vrot.slane %v570, 4
    %v614 = vsel %vm539, %v582, %v613
    %v616 = vunpack.c.l.s4 1934713408
    %v617 = vunpack.c.0.s8 %v616
    %v618 = vperm.slane %v612, %v617
    %v620 = vunpack.c.l.s4 1934713408
    %v621 = vunpack.c.0.s8 %v620
    %v622 = vperm.slane %v614, %v621
    %v623 = vrot.slane %v586, 4
    %v624 = vsel %vm539, %v623, %v574
    %v625 = vrot.slane %v574, 4
    %v626 = vsel %vm539, %v586, %v625
    %v628 = vunpack.c.l.s4 1934713408
    %v629 = vunpack.c.0.s8 %v628
    %v630 = vperm.slane %v624, %v629
    %v632 = vunpack.c.l.s4 1934713408
    %v633 = vunpack.c.0.s8 %v632
    %v634 = vperm.slane %v626, %v633
    %v635 = vrot.slane %v618, 4
    %v636 = vsel %vm539, %v635, %v594
    %v637 = vrot.slane %v594, 4
    %v638 = vsel %vm539, %v618, %v637
    %v639 = vrot.slane %v622, 4
    %v640 = vsel %vm539, %v639, %v598
    %v641 = vrot.slane %v598, 4
    %v642 = vsel %vm539, %v622, %v641
    %v643 = vrot.slane %v630, 4
    %v644 = vsel %vm539, %v643, %v606
    %v645 = vrot.slane %v606, 4
    %v646 = vsel %vm539, %v630, %v645
    %v647 = vrot.slane %v634, 4
    %v648 = vsel %vm539, %v647, %v610
    %v649 = vrot.slane %v610, 4
    %v650 = vsel %vm539, %v634, %v649
    %v651 = vrot.slane %v111, 4
    %v652 = vsel %vm539, %v651, %v107
    %v653 = vrot.slane %v107, 4
    %v654 = vsel %vm539, %v111, %v653
    %v656 = vunpack.c.l.s4 1983009808
    %v657 = vunpack.c.0.s8 %v656
    %v658 = vperm.slane %v652, %v657
    %v660 = vunpack.c.l.s4 1983009808
    %v661 = vunpack.c.0.s8 %v660
    %v662 = vperm.slane %v654, %v661
    %v663 = vrot.slane %v113, 4
    %v664 = vsel %vm539, %v663, %v109
    %v665 = vrot.slane %v109, 4
    %v666 = vsel %vm539, %v113, %v665
    %v668 = vunpack.c.l.s4 1983009808
    %v669 = vunpack.c.0.s8 %v668
    %v670 = vperm.slane %v664, %v669
    %v672 = vunpack.c.l.s4 1983009808
    %v673 = vunpack.c.0.s8 %v672
    %v674 = vperm.slane %v666, %v673
    %v675 = vrot.slane %v143, 4
    %v676 = vsel %vm539, %v675, %v139
    %v677 = vrot.slane %v139, 4
    %v678 = vsel %vm539, %v143, %v677
    %v680 = vunpack.c.l.s4 1983009808
    %v681 = vunpack.c.0.s8 %v680
    %v682 = vperm.slane %v676, %v681
    %v684 = vunpack.c.l.s4 1983009808
    %v685 = vunpack.c.0.s8 %v684
    %v686 = vperm.slane %v678, %v685
    %v687 = vrot.slane %v145, 4
    %v688 = vsel %vm539, %v687, %v141
    %v689 = vrot.slane %v141, 4
    %v690 = vsel %vm539, %v145, %v689
    %v692 = vunpack.c.l.s4 1983009808
    %v693 = vunpack.c.0.s8 %v692
    %v694 = vperm.slane %v688, %v693
    %v696 = vunpack.c.l.s4 1983009808
    %v697 = vunpack.c.0.s8 %v696
    %v698 = vperm.slane %v690, %v697
    %v699 = vrot.slane %v670, 4
    %v700 = vsel %vm539, %v699, %v658
    %v701 = vrot.slane %v658, 4
    %v702 = vsel %vm539, %v670, %v701
    %v704 = vunpack.c.l.s4 1934713408
    %v705 = vunpack.c.0.s8 %v704
    %v706 = vperm.slane %v700, %v705
    %v708 = vunpack.c.l.s4 1934713408
    %v709 = vunpack.c.0.s8 %v708
    %v710 = vperm.slane %v702, %v709
    %v711 = vrot.slane %v674, 4
    %v712 = vsel %vm539, %v711, %v662
    %v713 = vrot.slane %v662, 4
    %v714 = vsel %vm539, %v674, %v713
    %v716 = vunpack.c.l.s4 1934713408
    %v717 = vunpack.c.0.s8 %v716
    %v718 = vperm.slane %v712, %v717
    %v720 = vunpack.c.l.s4 1934713408
    %v721 = vunpack.c.0.s8 %v720
    %v722 = vperm.slane %v714, %v721
    %v723 = vrot.slane %v694, 4
    %v724 = vsel %vm539, %v723, %v682
    %v725 = vrot.slane %v682, 4
    %v726 = vsel %vm539, %v694, %v725
    %v728 = vunpack.c.l.s4 1934713408
    %v729 = vunpack.c.0.s8 %v728
    %v730 = vperm.slane %v724, %v729
    %v732 = vunpack.c.l.s4 1934713408
    %v733 = vunpack.c.0.s8 %v732
    %v734 = vperm.slane %v726, %v733
    %v735 = vrot.slane %v698, 4
    %v736 = vsel %vm539, %v735, %v686
    %v737 = vrot.slane %v686, 4
    %v738 = vsel %vm539, %v698, %v737
    %v740 = vunpack.c.l.s4 1934713408
    %v741 = vunpack.c.0.s8 %v740
    %v742 = vperm.slane %v736, %v741
    %v744 = vunpack.c.l.s4 1934713408
    %v745 = vunpack.c.0.s8 %v744
    %v746 = vperm.slane %v738, %v745
    %v747 = vrot.slane %v730, 4
    %v748 = vsel %vm539, %v747, %v706
    %v749 = vrot.slane %v706, 4
    %v750 = vsel %vm539, %v730, %v749
    %v751 = vrot.slane %v734, 4
    %v752 = vsel %vm539, %v751, %v710
    %v753 = vrot.slane %v710, 4
    %v754 = vsel %vm539, %v734, %v753
    %v755 = vrot.slane %v742, 4
    %v756 = vsel %vm539, %v755, %v718
    %v757 = vrot.slane %v718, 4
    %v758 = vsel %vm539, %v742, %v757
    %v759 = vrot.slane %v746, 4
    %v760 = vsel %vm539, %v759, %v722
    %v761 = vrot.slane %v722, 4
    %v762 = vsel %vm539, %v746, %v761
    %v763 = vrot.slane %v167, 4
    %v764 = vsel %vm539, %v763, %v163
    %v765 = vrot.slane %v163, 4
    %v766 = vsel %vm539, %v167, %v765
    %v768 = vunpack.c.l.s4 1983009808
    %v769 = vunpack.c.0.s8 %v768
    %v770 = vperm.slane %v764, %v769
    %v772 = vunpack.c.l.s4 1983009808
    %v773 = vunpack.c.0.s8 %v772
    %v774 = vperm.slane %v766, %v773
    %v775 = vrot.slane %v169, 4
    %v776 = vsel %vm539, %v775, %v165
    %v777 = vrot.slane %v165, 4
    %v778 = vsel %vm539, %v169, %v777
    %v780 = vunpack.c.l.s4 1983009808
    %v781 = vunpack.c.0.s8 %v780
    %v782 = vperm.slane %v776, %v781
    %v784 = vunpack.c.l.s4 1983009808
    %v785 = vunpack.c.0.s8 %v784
    %v786 = vperm.slane %v778, %v785
    %v787 = vrot.slane %v35, 4
    %v788 = vsel %vm539, %v787, %v33
    %v789 = vrot.slane %v33, 4
    %v790 = vsel %vm539, %v35, %v789
    %v792 = vunpack.c.l.s4 1983009808
    %v793 = vunpack.c.0.s8 %v792
    %v794 = vperm.slane %v788, %v793
    %v796 = vunpack.c.l.s4 1983009808
    %v797 = vunpack.c.0.s8 %v796
    %v798 = vperm.slane %v790, %v797
    %v799 = vrot.slane %v36, 4
    %v800 = vsel %vm539, %v799, %v34
    %v801 = vrot.slane %v34, 4
    %v802 = vsel %vm539, %v36, %v801
    %v804 = vunpack.c.l.s4 1983009808
    %v805 = vunpack.c.0.s8 %v804
    %v806 = vperm.slane %v800, %v805
    %v808 = vunpack.c.l.s4 1983009808
    %v809 = vunpack.c.0.s8 %v808
    %v810 = vperm.slane %v802, %v809
    %v811 = vrot.slane %v782, 4
    %v812 = vsel %vm539, %v811, %v770
    %v813 = vrot.slane %v770, 4
    %v814 = vsel %vm539, %v782, %v813
    %v816 = vunpack.c.l.s4 1934713408
    %v817 = vunpack.c.0.s8 %v816
    %v818 = vperm.slane %v812, %v817
    %v820 = vunpack.c.l.s4 1934713408
    %v821 = vunpack.c.0.s8 %v820
    %v822 = vperm.slane %v814, %v821
    %v823 = vrot.slane %v786, 4
    %v824 = vsel %vm539, %v823, %v774
    %v825 = vrot.slane %v774, 4
    %v826 = vsel %vm539, %v786, %v825
    %v828 = vunpack.c.l.s4 1934713408
    %v829 = vunpack.c.0.s8 %v828
    %v830 = vperm.slane %v824, %v829
    %v832 = vunpack.c.l.s4 1934713408
    %v833 = vunpack.c.0.s8 %v832
    %v834 = vperm.slane %v826, %v833
    %v835 = vrot.slane %v806, 4
    %v836 = vsel %vm539, %v835, %v794
    %v837 = vrot.slane %v794, 4
    %v838 = vsel %vm539, %v806, %v837
    %v840 = vunpack.c.l.s4 1934713408
    %v841 = vunpack.c.0.s8 %v840
    %v842 = vperm.slane %v836, %v841
    %v844 = vunpack.c.l.s4 1934713408
    %v845 = vunpack.c.0.s8 %v844
    %v846 = vperm.slane %v838, %v845
    %v847 = vrot.slane %v810, 4
    %v848 = vsel %vm539, %v847, %v798
    %v849 = vrot.slane %v798, 4
    %v850 = vsel %vm539, %v810, %v849
    %v852 = vunpack.c.l.s4 1934713408
    %v853 = vunpack.c.0.s8 %v852
    %v854 = vperm.slane %v848, %v853
    %v856 = vunpack.c.l.s4 1934713408
    %v857 = vunpack.c.0.s8 %v856
    %v858 = vperm.slane %v850, %v857
    %v859 = vrot.slane %v842, 4
    %v860 = vsel %vm539, %v859, %v818
    %v861 = vrot.slane %v818, 4
    %v862 = vsel %vm539, %v842, %v861
    %v863 = vrot.slane %v846, 4
    %v864 = vsel %vm539, %v863, %v822
    %v865 = vrot.slane %v822, 4
    %v866 = vsel %vm539, %v846, %v865
    %v867 = vrot.slane %v854, 4
    %v868 = vsel %vm539, %v867, %v830
    %v869 = vrot.slane %v830, 4
    %v870 = vsel %vm539, %v854, %v869
    %v871 = vrot.slane %v858, 4
    %v872 = vsel %vm539, %v871, %v834
    %v873 = vrot.slane %v834, 4
    %v874 = vsel %vm539, %v858, %v873
    %v875 = vrot.slane %v44, 4
    %v876 = vsel %vm539, %v875, %v42
    %v877 = vrot.slane %v42, 4
    %v878 = vsel %vm539, %v44, %v877
    %v880 = vunpack.c.l.s4 1983009808
    %v881 = vunpack.c.0.s8 %v880
    %v882 = vperm.slane %v876, %v881
    %v884 = vunpack.c.l.s4 1983009808
    %v885 = vunpack.c.0.s8 %v884
    %v886 = vperm.slane %v878, %v885
    %v887 = vrot.slane %v45, 4
    %v888 = vsel %vm539, %v887, %v43
    %v889 = vrot.slane %v43, 4
    %v890 = vsel %vm539, %v45, %v889
    %v892 = vunpack.c.l.s4 1983009808
    %v893 = vunpack.c.0.s8 %v892
    %v894 = vperm.slane %v888, %v893
    %v896 = vunpack.c.l.s4 1983009808
    %v897 = vunpack.c.0.s8 %v896
    %v898 = vperm.slane %v890, %v897
    %v899 = vrot.slane %v199, 4
    %v900 = vsel %vm539, %v899, %v195
    %v901 = vrot.slane %v195, 4
    %v902 = vsel %vm539, %v199, %v901
    %v904 = vunpack.c.l.s4 1983009808
    %v905 = vunpack.c.0.s8 %v904
    %v906 = vperm.slane %v900, %v905
    %v908 = vunpack.c.l.s4 1983009808
    %v909 = vunpack.c.0.s8 %v908
    %v910 = vperm.slane %v902, %v909
    %v911 = vrot.slane %v201, 4
    %v912 = vsel %vm539, %v911, %v197
    %v913 = vrot.slane %v197, 4
    %v914 = vsel %vm539, %v201, %v913
    %v916 = vunpack.c.l.s4 1983009808
    %v917 = vunpack.c.0.s8 %v916
    %v918 = vperm.slane %v912, %v917
    %v920 = vunpack.c.l.s4 1983009808
    %v921 = vunpack.c.0.s8 %v920
    %v922 = vperm.slane %v914, %v921
    %v923 = vrot.slane %v894, 4
    %v924 = vsel %vm539, %v923, %v882
    %v925 = vrot.slane %v882, 4
    %v926 = vsel %vm539, %v894, %v925
    %v928 = vunpack.c.l.s4 1934713408
    %v929 = vunpack.c.0.s8 %v928
    %v930 = vperm.slane %v924, %v929
    %v932 = vunpack.c.l.s4 1934713408
    %v933 = vunpack.c.0.s8 %v932
    %v934 = vperm.slane %v926, %v933
    %v935 = vrot.slane %v898, 4
    %v936 = vsel %vm539, %v935, %v886
    %v937 = vrot.slane %v886, 4
    %v938 = vsel %vm539, %v898, %v937
    %v940 = vunpack.c.l.s4 1934713408
    %v941 = vunpack.c.0.s8 %v940
    %v942 = vperm.slane %v936, %v941
    %v944 = vunpack.c.l.s4 1934713408
    %v945 = vunpack.c.0.s8 %v944
    %v946 = vperm.slane %v938, %v945
    %v947 = vrot.slane %v918, 4
    %v948 = vsel %vm539, %v947, %v906
    %v949 = vrot.slane %v906, 4
    %v950 = vsel %vm539, %v918, %v949
    %v952 = vunpack.c.l.s4 1934713408
    %v953 = vunpack.c.0.s8 %v952
    %v954 = vperm.slane %v948, %v953
    %v956 = vunpack.c.l.s4 1934713408
    %v957 = vunpack.c.0.s8 %v956
    %v958 = vperm.slane %v950, %v957
    %v959 = vrot.slane %v922, 4
    %v960 = vsel %vm539, %v959, %v910
    %v961 = vrot.slane %v910, 4
    %v962 = vsel %vm539, %v922, %v961
    %v964 = vunpack.c.l.s4 1934713408
    %v965 = vunpack.c.0.s8 %v964
    %v966 = vperm.slane %v960, %v965
    %v968 = vunpack.c.l.s4 1934713408
    %v969 = vunpack.c.0.s8 %v968
    %v970 = vperm.slane %v962, %v969
    %v971 = vrot.slane %v954, 4
    %v972 = vsel %vm539, %v971, %v930
    %v973 = vrot.slane %v930, 4
    %v974 = vsel %vm539, %v954, %v973
    %v975 = vrot.slane %v958, 4
    %v976 = vsel %vm539, %v975, %v934
    %v977 = vrot.slane %v934, 4
    %v978 = vsel %vm539, %v958, %v977
    %v979 = vrot.slane %v966, 4
    %v980 = vsel %vm539, %v979, %v942
    %v981 = vrot.slane %v942, 4
    %v982 = vsel %vm539, %v966, %v981
    %v983 = vrot.slane %v970, 4
    %v984 = vsel %vm539, %v983, %v946
    %v985 = vrot.slane %v946, 4
    %v986 = vsel %vm539, %v970, %v985
    %v987 = vrot.slane %v231, 4
    %v988 = vsel %vm539, %v987, %v227
    %v989 = vrot.slane %v227, 4
    %v990 = vsel %vm539, %v231, %v989
    %v992 = vunpack.c.l.s4 1983009808
    %v993 = vunpack.c.0.s8 %v992
    %v994 = vperm.slane %v988, %v993
    %v996 = vunpack.c.l.s4 1983009808
    %v997 = vunpack.c.0.s8 %v996
    %v998 = vperm.slane %v990, %v997
    %v999 = vrot.slane %v233, 4
    %v1000 = vsel %vm539, %v999, %v229
    %v1001 = vrot.slane %v229, 4
    %v1002 = vsel %vm539, %v233, %v1001
    %v1004 = vunpack.c.l.s4 1983009808
    %v1005 = vunpack.c.0.s8 %v1004
    %v1006 = vperm.slane %v1000, %v1005
    %v1008 = vunpack.c.l.s4 1983009808
    %v1009 = vunpack.c.0.s8 %v1008
    %v1010 = vperm.slane %v1002, %v1009
    %v1011 = vrot.slane %v255, 4
    %v1012 = vsel %vm539, %v1011, %v251
    %v1013 = vrot.slane %v251, 4
    %v1014 = vsel %vm539, %v255, %v1013
    %v1016 = vunpack.c.l.s4 1983009808
    %v1017 = vunpack.c.0.s8 %v1016
    %v1018 = vperm.slane %v1012, %v1017
    %v1020 = vunpack.c.l.s4 1983009808
    %v1021 = vunpack.c.0.s8 %v1020
    %v1022 = vperm.slane %v1014, %v1021
    %v1023 = vrot.slane %v257, 4
    %v1024 = vsel %vm539, %v1023, %v253
    %v1025 = vrot.slane %v253, 4
    %v1026 = vsel %vm539, %v257, %v1025
    %v1028 = vunpack.c.l.s4 1983009808
    %v1029 = vunpack.c.0.s8 %v1028
    %v1030 = vperm.slane %v1024, %v1029
    %v1032 = vunpack.c.l.s4 1983009808
    %v1033 = vunpack.c.0.s8 %v1032
    %v1034 = vperm.slane %v1026, %v1033
    %v1035 = vrot.slane %v1006, 4
    %v1036 = vsel %vm539, %v1035, %v994
    %v1037 = vrot.slane %v994, 4
    %v1038 = vsel %vm539, %v1006, %v1037
    %v1040 = vunpack.c.l.s4 1934713408
    %v1041 = vunpack.c.0.s8 %v1040
    %v1042 = vperm.slane %v1036, %v1041
    %v1044 = vunpack.c.l.s4 1934713408
    %v1045 = vunpack.c.0.s8 %v1044
    %v1046 = vperm.slane %v1038, %v1045
    %v1047 = vrot.slane %v1010, 4
    %v1048 = vsel %vm539, %v1047, %v998
    %v1049 = vrot.slane %v998, 4
    %v1050 = vsel %vm539, %v1010, %v1049
    %v1052 = vunpack.c.l.s4 1934713408
    %v1053 = vunpack.c.0.s8 %v1052
    %v1054 = vperm.slane %v1048, %v1053
    %v1056 = vunpack.c.l.s4 1934713408
    %v1057 = vunpack.c.0.s8 %v1056
    %v1058 = vperm.slane %v1050, %v1057
    %v1059 = vrot.slane %v1030, 4
    %v1060 = vsel %vm539, %v1059, %v1018
    %v1061 = vrot.slane %v1018, 4
    %v1062 = vsel %vm539, %v1030, %v1061
    %v1064 = vunpack.c.l.s4 1934713408
    %v1065 = vunpack.c.0.s8 %v1064
    %v1066 = vperm.slane %v1060, %v1065
    %v1068 = vunpack.c.l.s4 1934713408
    %v1069 = vunpack.c.0.s8 %v1068
    %v1070 = vperm.slane %v1062, %v1069
    %v1071 = vrot.slane %v1034, 4
    %v1072 = vsel %vm539, %v1071, %v1022
    %v1073 = vrot.slane %v1022, 4
    %v1074 = vsel %vm539, %v1034, %v1073
    %v1076 = vunpack.c.l.s4 1934713408
    %v1077 = vunpack.c.0.s8 %v1076
    %v1078 = vperm.slane %v1072, %v1077
    %v1080 = vunpack.c.l.s4 1934713408
    %v1081 = vunpack.c.0.s8 %v1080
    %v1082 = vperm.slane %v1074, %v1081
    %v1083 = vrot.slane %v1066, 4
    %v1084 = vsel %vm539, %v1083, %v1042
    %v1085 = vrot.slane %v1042, 4
    %v1086 = vsel %vm539, %v1066, %v1085
    %v1087 = vrot.slane %v1070, 4
    %v1088 = vsel %vm539, %v1087, %v1046
    %v1089 = vrot.slane %v1046, 4
    %v1090 = vsel %vm539, %v1070, %v1089
    %v1091 = vrot.slane %v1078, 4
    %v1092 = vsel %vm539, %v1091, %v1054
    %v1093 = vrot.slane %v1054, 4
    %v1094 = vsel %vm539, %v1078, %v1093
    %v1095 = vrot.slane %v1082, 4
    %v1096 = vsel %vm539, %v1095, %v1058
    %v1097 = vrot.slane %v1058, 4
    %v1098 = vsel %vm539, %v1082, %v1097
    %v1099 = vrot.slane %v52, 4
    %v1100 = vsel %vm539, %v1099, %v50
    %v1101 = vrot.slane %v50, 4
    %v1102 = vsel %vm539, %v52, %v1101
    %v1104 = vunpack.c.l.s4 1983009808
    %v1105 = vunpack.c.0.s8 %v1104
    %v1106 = vperm.slane %v1100, %v1105
    %v1108 = vunpack.c.l.s4 1983009808
    %v1109 = vunpack.c.0.s8 %v1108
    %v1110 = vperm.slane %v1102, %v1109
    %v1111 = vrot.slane %v53, 4
    %v1112 = vsel %vm539, %v1111, %v51
    %v1113 = vrot.slane %v51, 4
    %v1114 = vsel %vm539, %v53, %v1113
    %v1116 = vunpack.c.l.s4 1983009808
    %v1117 = vunpack.c.0.s8 %v1116
    %v1118 = vperm.slane %v1112, %v1117
    %v1120 = vunpack.c.l.s4 1983009808
    %v1121 = vunpack.c.0.s8 %v1120
    %v1122 = vperm.slane %v1114, %v1121
    %v1123 = vrot.slane %v60, 4
    %v1124 = vsel %vm539, %v1123, %v58
    %v1125 = vrot.slane %v58, 4
    %v1126 = vsel %vm539, %v60, %v1125
    %v1128 = vunpack.c.l.s4 1983009808
    %v1129 = vunpack.c.0.s8 %v1128
    %v1130 = vperm.slane %v1124, %v1129
    %v1132 = vunpack.c.l.s4 1983009808
    %v1133 = vunpack.c.0.s8 %v1132
    %v1134 = vperm.slane %v1126, %v1133
    %v1135 = vrot.slane %v61, 4
    %v1136 = vsel %vm539, %v1135, %v59
    %v1137 = vrot.slane %v59, 4
    %v1138 = vsel %vm539, %v61, %v1137
    %v1140 = vunpack.c.l.s4 1983009808
    %v1141 = vunpack.c.0.s8 %v1140
    %v1142 = vperm.slane %v1136, %v1141
    %v1144 = vunpack.c.l.s4 1983009808
    %v1145 = vunpack.c.0.s8 %v1144
    %v1146 = vperm.slane %v1138, %v1145
    %v1147 = vrot.slane %v1118, 4
    %v1148 = vsel %vm539, %v1147, %v1106
    %v1149 = vrot.slane %v1106, 4
    %v1150 = vsel %vm539, %v1118, %v1149
    %v1152 = vunpack.c.l.s4 1934713408
    %v1153 = vunpack.c.0.s8 %v1152
    %v1154 = vperm.slane %v1148, %v1153
    %v1156 = vunpack.c.l.s4 1934713408
    %v1157 = vunpack.c.0.s8 %v1156
    %v1158 = vperm.slane %v1150, %v1157
    %v1159 = vrot.slane %v1122, 4
    %v1160 = vsel %vm539, %v1159, %v1110
    %v1161 = vrot.slane %v1110, 4
    %v1162 = vsel %vm539, %v1122, %v1161
    %v1164 = vunpack.c.l.s4 1934713408
    %v1165 = vunpack.c.0.s8 %v1164
    %v1166 = vperm.slane %v1160, %v1165
    %v1168 = vunpack.c.l.s4 1934713408
    %v1169 = vunpack.c.0.s8 %v1168
    %v1170 = vperm.slane %v1162, %v1169
    %v1171 = vrot.slane %v1142, 4
    %v1172 = vsel %vm539, %v1171, %v1130
    %v1173 = vrot.slane %v1130, 4
    %v1174 = vsel %vm539, %v1142, %v1173
    %v1176 = vunpack.c.l.s4 1934713408
    %v1177 = vunpack.c.0.s8 %v1176
    %v1178 = vperm.slane %v1172, %v1177
    %v1180 = vunpack.c.l.s4 1934713408
    %v1181 = vunpack.c.0.s8 %v1180
    %v1182 = vperm.slane %v1174, %v1181
    %v1183 = vrot.slane %v1146, 4
    %v1184 = vsel %vm539, %v1183, %v1134
    %v1185 = vrot.slane %v1134, 4
    %v1186 = vsel %vm539, %v1146, %v1185
    %v1188 = vunpack.c.l.s4 1934713408
    %v1189 = vunpack.c.0.s8 %v1188
    %v1190 = vperm.slane %v1184, %v1189
    %v1192 = vunpack.c.l.s4 1934713408
    %v1193 = vunpack.c.0.s8 %v1192
    %v1194 = vperm.slane %v1186, %v1193
    %v1195 = vrot.slane %v1178, 4
    %v1196 = vsel %vm539, %v1195, %v1154
    %v1197 = vrot.slane %v1154, 4
    %v1198 = vsel %vm539, %v1178, %v1197
    %v1199 = vrot.slane %v1182, 4
    %v1200 = vsel %vm539, %v1199, %v1158
    %v1201 = vrot.slane %v1158, 4
    %v1202 = vsel %vm539, %v1182, %v1201
    %v1203 = vrot.slane %v1190, 4
    %v1204 = vsel %vm539, %v1203, %v1166
    %v1205 = vrot.slane %v1166, 4
    %v1206 = vsel %vm539, %v1190, %v1205
    %v1207 = vrot.slane %v1194, 4
    %v1208 = vsel %vm539, %v1207, %v1170
    %v1209 = vrot.slane %v1170, 4
    %v1210 = vsel %vm539, %v1194, %v1209
    %v1211 = vrot.slane %v287, 4
    %v1212 = vsel %vm539, %v1211, %v283
    %v1213 = vrot.slane %v283, 4
    %v1214 = vsel %vm539, %v287, %v1213
    %v1216 = vunpack.c.l.s4 1983009808
    %v1217 = vunpack.c.0.s8 %v1216
    %v1218 = vperm.slane %v1212, %v1217
    %v1220 = vunpack.c.l.s4 1983009808
    %v1221 = vunpack.c.0.s8 %v1220
    %v1222 = vperm.slane %v1214, %v1221
    %v1223 = vrot.slane %v289, 4
    %v1224 = vsel %vm539, %v1223, %v285
    %v1225 = vrot.slane %v285, 4
    %v1226 = vsel %vm539, %v289, %v1225
    %v1228 = vunpack.c.l.s4 1983009808
    %v1229 = vunpack.c.0.s8 %v1228
    %v1230 = vperm.slane %v1224, %v1229
    %v1232 = vunpack.c.l.s4 1983009808
    %v1233 = vunpack.c.0.s8 %v1232
    %v1234 = vperm.slane %v1226, %v1233
    %v1235 = vrot.slane %v319, 4
    %v1236 = vsel %vm539, %v1235, %v315
    %v1237 = vrot.slane %v315, 4
    %v1238 = vsel %vm539, %v319, %v1237
    %v1240 = vunpack.c.l.s4 1983009808
    %v1241 = vunpack.c.0.s8 %v1240
    %v1242 = vperm.slane %v1236, %v1241
    %v1244 = vunpack.c.l.s4 1983009808
    %v1245 = vunpack.c.0.s8 %v1244
    %v1246 = vperm.slane %v1238, %v1245
    %v1247 = vrot.slane %v321, 4
    %v1248 = vsel %vm539, %v1247, %v317
    %v1249 = vrot.slane %v317, 4
    %v1250 = vsel %vm539, %v321, %v1249
    %v1252 = vunpack.c.l.s4 1983009808
    %v1253 = vunpack.c.0.s8 %v1252
    %v1254 = vperm.slane %v1248, %v1253
    %v1256 = vunpack.c.l.s4 1983009808
    %v1257 = vunpack.c.0.s8 %v1256
    %v1258 = vperm.slane %v1250, %v1257
    %v1259 = vrot.slane %v1230, 4
    %v1260 = vsel %vm539, %v1259, %v1218
    %v1261 = vrot.slane %v1218, 4
    %v1262 = vsel %vm539, %v1230, %v1261
    %v1264 = vunpack.c.l.s4 1934713408
    %v1265 = vunpack.c.0.s8 %v1264
    %v1266 = vperm.slane %v1260, %v1265
    %v1268 = vunpack.c.l.s4 1934713408
    %v1269 = vunpack.c.0.s8 %v1268
    %v1270 = vperm.slane %v1262, %v1269
    %v1271 = vrot.slane %v1234, 4
    %v1272 = vsel %vm539, %v1271, %v1222
    %v1273 = vrot.slane %v1222, 4
    %v1274 = vsel %vm539, %v1234, %v1273
    %v1276 = vunpack.c.l.s4 1934713408
    %v1277 = vunpack.c.0.s8 %v1276
    %v1278 = vperm.slane %v1272, %v1277
    %v1280 = vunpack.c.l.s4 1934713408
    %v1281 = vunpack.c.0.s8 %v1280
    %v1282 = vperm.slane %v1274, %v1281
    %v1283 = vrot.slane %v1254, 4
    %v1284 = vsel %vm539, %v1283, %v1242
    %v1285 = vrot.slane %v1242, 4
    %v1286 = vsel %vm539, %v1254, %v1285
    %v1288 = vunpack.c.l.s4 1934713408
    %v1289 = vunpack.c.0.s8 %v1288
    %v1290 = vperm.slane %v1284, %v1289
    %v1292 = vunpack.c.l.s4 1934713408
    %v1293 = vunpack.c.0.s8 %v1292
    %v1294 = vperm.slane %v1286, %v1293
    %v1295 = vrot.slane %v1258, 4
    %v1296 = vsel %vm539, %v1295, %v1246
    %v1297 = vrot.slane %v1246, 4
    %v1298 = vsel %vm539, %v1258, %v1297
    %v1300 = vunpack.c.l.s4 1934713408
    %v1301 = vunpack.c.0.s8 %v1300
    %v1302 = vperm.slane %v1296, %v1301
    %v1304 = vunpack.c.l.s4 1934713408
    %v1305 = vunpack.c.0.s8 %v1304
    %v1306 = vperm.slane %v1298, %v1305
    %v1307 = vrot.slane %v1290, 4
    %v1308 = vsel %vm539, %v1307, %v1266
    %v1309 = vrot.slane %v1266, 4
    %v1310 = vsel %vm539, %v1290, %v1309
    %v1311 = vrot.slane %v1294, 4
    %v1312 = vsel %vm539, %v1311, %v1270
    %v1313 = vrot.slane %v1270, 4
    %v1314 = vsel %vm539, %v1294, %v1313
    %v1315 = vrot.slane %v1302, 4
    %v1316 = vsel %vm539, %v1315, %v1278
    %v1317 = vrot.slane %v1278, 4
    %v1318 = vsel %vm539, %v1302, %v1317
    %v1319 = vrot.slane %v1306, 4
    %v1320 = vsel %vm539, %v1319, %v1282
    %v1321 = vrot.slane %v1282, 4
    %v1322 = vsel %vm539, %v1306, %v1321
    %v1323 = vrot.slane %v343, 4
    %v1324 = vsel %vm539, %v1323, %v339
    %v1325 = vrot.slane %v339, 4
    %v1326 = vsel %vm539, %v343, %v1325
    %v1328 = vunpack.c.l.s4 1983009808
    %v1329 = vunpack.c.0.s8 %v1328
    %v1330 = vperm.slane %v1324, %v1329
    %v1332 = vunpack.c.l.s4 1983009808
    %v1333 = vunpack.c.0.s8 %v1332
    %v1334 = vperm.slane %v1326, %v1333
    %v1335 = vrot.slane %v345, 4
    %v1336 = vsel %vm539, %v1335, %v341
    %v1337 = vrot.slane %v341, 4
    %v1338 = vsel %vm539, %v345, %v1337
    %v1340 = vunpack.c.l.s4 1983009808
    %v1341 = vunpack.c.0.s8 %v1340
    %v1342 = vperm.slane %v1336, %v1341
    %v1344 = vunpack.c.l.s4 1983009808
    %v1345 = vunpack.c.0.s8 %v1344
    %v1346 = vperm.slane %v1338, %v1345
    %v1347 = vrot.slane %v68, 4
    %v1348 = vsel %vm539, %v1347, %v66
    %v1349 = vrot.slane %v66, 4
    %v1350 = vsel %vm539, %v68, %v1349
    %v1352 = vunpack.c.l.s4 1983009808
    %v1353 = vunpack.c.0.s8 %v1352
    %v1354 = vperm.slane %v1348, %v1353
    %v1356 = vunpack.c.l.s4 1983009808
    %v1357 = vunpack.c.0.s8 %v1356
    %v1358 = vperm.slane %v1350, %v1357
    %v1359 = vrot.slane %v69, 4
    %v1360 = vsel %vm539, %v1359, %v67
    %v1361 = vrot.slane %v67, 4
    %v1362 = vsel %vm539, %v69, %v1361
    %v1364 = vunpack.c.l.s4 1983009808
    %v1365 = vunpack.c.0.s8 %v1364
    %v1366 = vperm.slane %v1360, %v1365
    %v1368 = vunpack.c.l.s4 1983009808
    %v1369 = vunpack.c.0.s8 %v1368
    %v1370 = vperm.slane %v1362, %v1369
    %v1371 = vrot.slane %v1342, 4
    %v1372 = vsel %vm539, %v1371, %v1330
    %v1373 = vrot.slane %v1330, 4
    %v1374 = vsel %vm539, %v1342, %v1373
    %v1376 = vunpack.c.l.s4 1934713408
    %v1377 = vunpack.c.0.s8 %v1376
    %v1378 = vperm.slane %v1372, %v1377
    %v1380 = vunpack.c.l.s4 1934713408
    %v1381 = vunpack.c.0.s8 %v1380
    %v1382 = vperm.slane %v1374, %v1381
    %v1383 = vrot.slane %v1346, 4
    %v1384 = vsel %vm539, %v1383, %v1334
    %v1385 = vrot.slane %v1334, 4
    %v1386 = vsel %vm539, %v1346, %v1385
    %v1388 = vunpack.c.l.s4 1934713408
    %v1389 = vunpack.c.0.s8 %v1388
    %v1390 = vperm.slane %v1384, %v1389
    %v1392 = vunpack.c.l.s4 1934713408
    %v1393 = vunpack.c.0.s8 %v1392
    %v1394 = vperm.slane %v1386, %v1393
    %v1395 = vrot.slane %v1366, 4
    %v1396 = vsel %vm539, %v1395, %v1354
    %v1397 = vrot.slane %v1354, 4
    %v1398 = vsel %vm539, %v1366, %v1397
    %v1400 = vunpack.c.l.s4 1934713408
    %v1401 = vunpack.c.0.s8 %v1400
    %v1402 = vperm.slane %v1396, %v1401
    %v1404 = vunpack.c.l.s4 1934713408
    %v1405 = vunpack.c.0.s8 %v1404
    %v1406 = vperm.slane %v1398, %v1405
    %v1407 = vrot.slane %v1370, 4
    %v1408 = vsel %vm539, %v1407, %v1358
    %v1409 = vrot.slane %v1358, 4
    %v1410 = vsel %vm539, %v1370, %v1409
    %v1412 = vunpack.c.l.s4 1934713408
    %v1413 = vunpack.c.0.s8 %v1412
    %v1414 = vperm.slane %v1408, %v1413
    %v1416 = vunpack.c.l.s4 1934713408
    %v1417 = vunpack.c.0.s8 %v1416
    %v1418 = vperm.slane %v1410, %v1417
    %v1419 = vrot.slane %v1402, 4
    %v1420 = vsel %vm539, %v1419, %v1378
    %v1421 = vrot.slane %v1378, 4
    %v1422 = vsel %vm539, %v1402, %v1421
    %v1423 = vrot.slane %v1406, 4
    %v1424 = vsel %vm539, %v1423, %v1382
    %v1425 = vrot.slane %v1382, 4
    %v1426 = vsel %vm539, %v1406, %v1425
    %v1427 = vrot.slane %v1414, 4
    %v1428 = vsel %vm539, %v1427, %v1390
    %v1429 = vrot.slane %v1390, 4
    %v1430 = vsel %vm539, %v1414, %v1429
    %v1431 = vrot.slane %v1418, 4
    %v1432 = vsel %vm539, %v1431, %v1394
    %v1433 = vrot.slane %v1394, 4
    %v1434 = vsel %vm539, %v1418, %v1433
    %v1435 = vrot.slane %v76, 4
    %v1436 = vsel %vm539, %v1435, %v74
    %v1437 = vrot.slane %v74, 4
    %v1438 = vsel %vm539, %v76, %v1437
    %v1440 = vunpack.c.l.s4 1983009808
    %v1441 = vunpack.c.0.s8 %v1440
    %v1442 = vperm.slane %v1436, %v1441
    %v1444 = vunpack.c.l.s4 1983009808
    %v1445 = vunpack.c.0.s8 %v1444
    %v1446 = vperm.slane %v1438, %v1445
    %v1447 = vrot.slane %v77, 4
    %v1448 = vsel %vm539, %v1447, %v75
    %v1449 = vrot.slane %v75, 4
    %v1450 = vsel %vm539, %v77, %v1449
    %v1452 = vunpack.c.l.s4 1983009808
    %v1453 = vunpack.c.0.s8 %v1452
    %v1454 = vperm.slane %v1448, %v1453
    %v1456 = vunpack.c.l.s4 1983009808
    %v1457 = vunpack.c.0.s8 %v1456
    %v1458 = vperm.slane %v1450, %v1457
    %v1459 = vrot.slane %v375, 4
    %v1460 = vsel %vm539, %v1459, %v371
    %v1461 = vrot.slane %v371, 4
    %v1462 = vsel %vm539, %v375, %v1461
    %v1464 = vunpack.c.l.s4 1983009808
    %v1465 = vunpack.c.0.s8 %v1464
    %v1466 = vperm.slane %v1460, %v1465
    %v1468 = vunpack.c.l.s4 1983009808
    %v1469 = vunpack.c.0.s8 %v1468
    %v1470 = vperm.slane %v1462, %v1469
    %v1471 = vrot.slane %v377, 4
    %v1472 = vsel %vm539, %v1471, %v373
    %v1473 = vrot.slane %v373, 4
    %v1474 = vsel %vm539, %v377, %v1473
    %v1476 = vunpack.c.l.s4 1983009808
    %v1477 = vunpack.c.0.s8 %v1476
    %v1478 = vperm.slane %v1472, %v1477
    %v1480 = vunpack.c.l.s4 1983009808
    %v1481 = vunpack.c.0.s8 %v1480
    %v1482 = vperm.slane %v1474, %v1481
    %v1483 = vrot.slane %v1454, 4
    %v1484 = vsel %vm539, %v1483, %v1442
    %v1485 = vrot.slane %v1442, 4
    %v1486 = vsel %vm539, %v1454, %v1485
    %v1488 = vunpack.c.l.s4 1934713408
    %v1489 = vunpack.c.0.s8 %v1488
    %v1490 = vperm.slane %v1484, %v1489
    %v1492 = vunpack.c.l.s4 1934713408
    %v1493 = vunpack.c.0.s8 %v1492
    %v1494 = vperm.slane %v1486, %v1493
    %v1495 = vrot.slane %v1458, 4
    %v1496 = vsel %vm539, %v1495, %v1446
    %v1497 = vrot.slane %v1446, 4
    %v1498 = vsel %vm539, %v1458, %v1497
    %v1500 = vunpack.c.l.s4 1934713408
    %v1501 = vunpack.c.0.s8 %v1500
    %v1502 = vperm.slane %v1496, %v1501
    %v1504 = vunpack.c.l.s4 1934713408
    %v1505 = vunpack.c.0.s8 %v1504
    %v1506 = vperm.slane %v1498, %v1505
    %v1507 = vrot.slane %v1478, 4
    %v1508 = vsel %vm539, %v1507, %v1466
    %v1509 = vrot.slane %v1466, 4
    %v1510 = vsel %vm539, %v1478, %v1509
    %v1512 = vunpack.c.l.s4 1934713408
    %v1513 = vunpack.c.0.s8 %v1512
    %v1514 = vperm.slane %v1508, %v1513
    %v1516 = vunpack.c.l.s4 1934713408
    %v1517 = vunpack.c.0.s8 %v1516
    %v1518 = vperm.slane %v1510, %v1517
    %v1519 = vrot.slane %v1482, 4
    %v1520 = vsel %vm539, %v1519, %v1470
    %v1521 = vrot.slane %v1470, 4
    %v1522 = vsel %vm539, %v1482, %v1521
    %v1524 = vunpack.c.l.s4 1934713408
    %v1525 = vunpack.c.0.s8 %v1524
    %v1526 = vperm.slane %v1520, %v1525
    %v1528 = vunpack.c.l.s4 1934713408
    %v1529 = vunpack.c.0.s8 %v1528
    %v1530 = vperm.slane %v1522, %v1529
    %v1531 = vrot.slane %v1514, 4
    %v1532 = vsel %vm539, %v1531, %v1490
    %v1533 = vrot.slane %v1490, 4
    %v1534 = vsel %vm539, %v1514, %v1533
    %v1535 = vrot.slane %v1518, 4
    %v1536 = vsel %vm539, %v1535, %v1494
    %v1537 = vrot.slane %v1494, 4
    %v1538 = vsel %vm539, %v1518, %v1537
    %v1539 = vrot.slane %v1526, 4
    %v1540 = vsel %vm539, %v1539, %v1502
    %v1541 = vrot.slane %v1502, 4
    %v1542 = vsel %vm539, %v1526, %v1541
    %v1543 = vrot.slane %v1530, 4
    %v1544 = vsel %vm539, %v1543, %v1506
    %v1545 = vrot.slane %v1506, 4
    %v1546 = vsel %vm539, %v1530, %v1545
    %v1547 = vrot.slane %v407, 4
    %v1548 = vsel %vm539, %v1547, %v403
    %v1549 = vrot.slane %v403, 4
    %v1550 = vsel %vm539, %v407, %v1549
    %v1552 = vunpack.c.l.s4 1983009808
    %v1553 = vunpack.c.0.s8 %v1552
    %v1554 = vperm.slane %v1548, %v1553
    %v1556 = vunpack.c.l.s4 1983009808
    %v1557 = vunpack.c.0.s8 %v1556
    %v1558 = vperm.slane %v1550, %v1557
    %v1559 = vrot.slane %v409, 4
    %v1560 = vsel %vm539, %v1559, %v405
    %v1561 = vrot.slane %v405, 4
    %v1562 = vsel %vm539, %v409, %v1561
    %v1564 = vunpack.c.l.s4 1983009808
    %v1565 = vunpack.c.0.s8 %v1564
    %v1566 = vperm.slane %v1560, %v1565
    %v1568 = vunpack.c.l.s4 1983009808
    %v1569 = vunpack.c.0.s8 %v1568
    %v1570 = vperm.slane %v1562, %v1569
    %v1571 = vrot.slane %v431, 4
    %v1572 = vsel %vm539, %v1571, %v427
    %v1573 = vrot.slane %v427, 4
    %v1574 = vsel %vm539, %v431, %v1573
    %v1576 = vunpack.c.l.s4 1983009808
    %v1577 = vunpack.c.0.s8 %v1576
    %v1578 = vperm.slane %v1572, %v1577
    %v1580 = vunpack.c.l.s4 1983009808
    %v1581 = vunpack.c.0.s8 %v1580
    %v1582 = vperm.slane %v1574, %v1581
    %v1583 = vrot.slane %v433, 4
    %v1584 = vsel %vm539, %v1583, %v429
    %v1585 = vrot.slane %v429, 4
    %v1586 = vsel %vm539, %v433, %v1585
    %v1588 = vunpack.c.l.s4 1983009808
    %v1589 = vunpack.c.0.s8 %v1588
    %v1590 = vperm.slane %v1584, %v1589
    %v1592 = vunpack.c.l.s4 1983009808
    %v1593 = vunpack.c.0.s8 %v1592
    %v1594 = vperm.slane %v1586, %v1593
    %v1595 = vrot.slane %v1566, 4
    %v1596 = vsel %vm539, %v1595, %v1554
    %v1597 = vrot.slane %v1554, 4
    %v1598 = vsel %vm539, %v1566, %v1597
    %v1600 = vunpack.c.l.s4 1934713408
    %v1601 = vunpack.c.0.s8 %v1600
    %v1602 = vperm.slane %v1596, %v1601
    %v1604 = vunpack.c.l.s4 1934713408
    %v1605 = vunpack.c.0.s8 %v1604
    %v1606 = vperm.slane %v1598, %v1605
    %v1607 = vrot.slane %v1570, 4
    %v1608 = vsel %vm539, %v1607, %v1558
    %v1609 = vrot.slane %v1558, 4
    %v1610 = vsel %vm539, %v1570, %v1609
    %v1612 = vunpack.c.l.s4 1934713408
    %v1613 = vunpack.c.0.s8 %v1612
    %v1614 = vperm.slane %v1608, %v1613
    %v1616 = vunpack.c.l.s4 1934713408
    %v1617 = vunpack.c.0.s8 %v1616
    %v1618 = vperm.slane %v1610, %v1617
    %v1619 = vrot.slane %v1590, 4
    %v1620 = vsel %vm539, %v1619, %v1578
    %v1621 = vrot.slane %v1578, 4
    %v1622 = vsel %vm539, %v1590, %v1621
    %v1624 = vunpack.c.l.s4 1934713408
    %v1625 = vunpack.c.0.s8 %v1624
    %v1626 = vperm.slane %v1620, %v1625
    %v1628 = vunpack.c.l.s4 1934713408
    %v1629 = vunpack.c.0.s8 %v1628
    %v1630 = vperm.slane %v1622, %v1629
    %v1631 = vrot.slane %v1594, 4
    %v1632 = vsel %vm539, %v1631, %v1582
    %v1633 = vrot.slane %v1582, 4
    %v1634 = vsel %vm539, %v1594, %v1633
    %v1636 = vunpack.c.l.s4 1934713408
    %v1637 = vunpack.c.0.s8 %v1636
    %v1638 = vperm.slane %v1632, %v1637
    %v1640 = vunpack.c.l.s4 1934713408
    %v1641 = vunpack.c.0.s8 %v1640
    %v1642 = vperm.slane %v1634, %v1641
    %v1643 = vrot.slane %v1626, 4
    %v1644 = vsel %vm539, %v1643, %v1602
    %v1645 = vrot.slane %v1602, 4
    %v1646 = vsel %vm539, %v1626, %v1645
    %v1647 = vrot.slane %v1630, 4
    %v1648 = vsel %vm539, %v1647, %v1606
    %v1649 = vrot.slane %v1606, 4
    %v1650 = vsel %vm539, %v1630, %v1649
    %v1651 = vrot.slane %v1638, 4
    %v1652 = vsel %vm539, %v1651, %v1614
    %v1653 = vrot.slane %v1614, 4
    %v1654 = vsel %vm539, %v1638, %v1653
    %v1655 = vrot.slane %v1642, 4
    %v1656 = vsel %vm539, %v1655, %v1618
    %v1657 = vrot.slane %v1618, 4
    %v1658 = vsel %vm539, %v1642, %v1657
    %v1659 = vrot.slane %v84, 4
    %v1660 = vsel %vm539, %v1659, %v82
    %v1661 = vrot.slane %v82, 4
    %v1662 = vsel %vm539, %v84, %v1661
    %v1664 = vunpack.c.l.s4 1983009808
    %v1665 = vunpack.c.0.s8 %v1664
    %v1666 = vperm.slane %v1660, %v1665
    %v1668 = vunpack.c.l.s4 1983009808
    %v1669 = vunpack.c.0.s8 %v1668
    %v1670 = vperm.slane %v1662, %v1669
    %v1671 = vrot.slane %v85, 4
    %v1672 = vsel %vm539, %v1671, %v83
    %v1673 = vrot.slane %v83, 4
    %v1674 = vsel %vm539, %v85, %v1673
    %v1676 = vunpack.c.l.s4 1983009808
    %v1677 = vunpack.c.0.s8 %v1676
    %v1678 = vperm.slane %v1672, %v1677
    %v1680 = vunpack.c.l.s4 1983009808
    %v1681 = vunpack.c.0.s8 %v1680
    %v1682 = vperm.slane %v1674, %v1681
    %v1683 = vrot.slane %v92, 4
    %v1684 = vsel %vm539, %v1683, %v90
    %v1685 = vrot.slane %v90, 4
    %v1686 = vsel %vm539, %v92, %v1685
    %v1688 = vunpack.c.l.s4 1983009808
    %v1689 = vunpack.c.0.s8 %v1688
    %v1690 = vperm.slane %v1684, %v1689
    %v1692 = vunpack.c.l.s4 1983009808
    %v1693 = vunpack.c.0.s8 %v1692
    %v1694 = vperm.slane %v1686, %v1693
    %v1695 = vrot.slane %v93, 4
    %v1696 = vsel %vm539, %v1695, %v91
    %v1697 = vrot.slane %v91, 4
    %v1698 = vsel %vm539, %v93, %v1697
    %v1700 = vunpack.c.l.s4 1983009808
    %v1701 = vunpack.c.0.s8 %v1700
    %v1702 = vperm.slane %v1696, %v1701
    %v1704 = vunpack.c.l.s4 1983009808
    %v1705 = vunpack.c.0.s8 %v1704
    %v1706 = vperm.slane %v1698, %v1705
    %v1707 = vrot.slane %v1678, 4
    %v1708 = vsel %vm539, %v1707, %v1666
    %v1709 = vrot.slane %v1666, 4
    %v1710 = vsel %vm539, %v1678, %v1709
    %v1712 = vunpack.c.l.s4 1934713408
    %v1713 = vunpack.c.0.s8 %v1712
    %v1714 = vperm.slane %v1708, %v1713
    %v1716 = vunpack.c.l.s4 1934713408
    %v1717 = vunpack.c.0.s8 %v1716
    %v1718 = vperm.slane %v1710, %v1717
    %v1719 = vrot.slane %v1682, 4
    %v1720 = vsel %vm539, %v1719, %v1670
    %v1721 = vrot.slane %v1670, 4
    %v1722 = vsel %vm539, %v1682, %v1721
    %v1724 = vunpack.c.l.s4 1934713408
    %v1725 = vunpack.c.0.s8 %v1724
    %v1726 = vperm.slane %v1720, %v1725
    %v1728 = vunpack.c.l.s4 1934713408
    %v1729 = vunpack.c.0.s8 %v1728
    %v1730 = vperm.slane %v1722, %v1729
    %v1731 = vrot.slane %v1702, 4
    %v1732 = vsel %vm539, %v1731, %v1690
    %v1733 = vrot.slane %v1690, 4
    %v1734 = vsel %vm539, %v1702, %v1733
    %v1736 = vunpack.c.l.s4 1934713408
    %v1737 = vunpack.c.0.s8 %v1736
    %v1738 = vperm.slane %v1732, %v1737
    %v1740 = vunpack.c.l.s4 1934713408
    %v1741 = vunpack.c.0.s8 %v1740
    %v1742 = vperm.slane %v1734, %v1741
    %v1743 = vrot.slane %v1706, 4
    %v1744 = vsel %vm539, %v1743, %v1694
    %v1745 = vrot.slane %v1694, 4
    %v1746 = vsel %vm539, %v1706, %v1745
    %v1748 = vunpack.c.l.s4 1934713408
    %v1749 = vunpack.c.0.s8 %v1748
    %v1750 = vperm.slane %v1744, %v1749
    %v1752 = vunpack.c.l.s4 1934713408
    %v1753 = vunpack.c.0.s8 %v1752
    %v1754 = vperm.slane %v1746, %v1753
    %v1755 = vrot.slane %v1738, 4
    %v1756 = vsel %vm539, %v1755, %v1714
    %v1757 = vrot.slane %v1714, 4
    %v1758 = vsel %vm539, %v1738, %v1757
    %v1759 = vrot.slane %v1742, 4
    %v1760 = vsel %vm539, %v1759, %v1718
    %v1761 = vrot.slane %v1718, 4
    %v1762 = vsel %vm539, %v1742, %v1761
    %v1763 = vrot.slane %v1750, 4
    %v1764 = vsel %vm539, %v1763, %v1726
    %v1765 = vrot.slane %v1726, 4
    %v1766 = vsel %vm539, %v1750, %v1765
    %v1767 = vrot.slane %v1754, 4
    %v1768 = vsel %vm539, %v1767, %v1730
    %v1769 = vrot.slane %v1730, 4
    %v1770 = vsel %vm539, %v1754, %v1769
    %v1771 = vrot.slane %v463, 4
    %v1772 = vsel %vm539, %v1771, %v459
    %v1773 = vrot.slane %v459, 4
    %v1774 = vsel %vm539, %v463, %v1773
    %v1776 = vunpack.c.l.s4 1983009808
    %v1777 = vunpack.c.0.s8 %v1776
    %v1778 = vperm.slane %v1772, %v1777
    %v1780 = vunpack.c.l.s4 1983009808
    %v1781 = vunpack.c.0.s8 %v1780
    %v1782 = vperm.slane %v1774, %v1781
    %v1783 = vrot.slane %v465, 4
    %v1784 = vsel %vm539, %v1783, %v461
    %v1785 = vrot.slane %v461, 4
    %v1786 = vsel %vm539, %v465, %v1785
    %v1788 = vunpack.c.l.s4 1983009808
    %v1789 = vunpack.c.0.s8 %v1788
    %v1790 = vperm.slane %v1784, %v1789
    %v1792 = vunpack.c.l.s4 1983009808
    %v1793 = vunpack.c.0.s8 %v1792
    %v1794 = vperm.slane %v1786, %v1793
    %v1795 = vrot.slane %v495, 4
    %v1796 = vsel %vm539, %v1795, %v491
    %v1797 = vrot.slane %v491, 4
    %v1798 = vsel %vm539, %v495, %v1797
    %v1800 = vunpack.c.l.s4 1983009808
    %v1801 = vunpack.c.0.s8 %v1800
    %v1802 = vperm.slane %v1796, %v1801
    %v1804 = vunpack.c.l.s4 1983009808
    %v1805 = vunpack.c.0.s8 %v1804
    %v1806 = vperm.slane %v1798, %v1805
    %v1807 = vrot.slane %v497, 4
    %v1808 = vsel %vm539, %v1807, %v493
    %v1809 = vrot.slane %v493, 4
    %v1810 = vsel %vm539, %v497, %v1809
    %v1812 = vunpack.c.l.s4 1983009808
    %v1813 = vunpack.c.0.s8 %v1812
    %v1814 = vperm.slane %v1808, %v1813
    %v1816 = vunpack.c.l.s4 1983009808
    %v1817 = vunpack.c.0.s8 %v1816
    %v1818 = vperm.slane %v1810, %v1817
    %v1819 = vrot.slane %v1790, 4
    %v1820 = vsel %vm539, %v1819, %v1778
    %v1821 = vrot.slane %v1778, 4
    %v1822 = vsel %vm539, %v1790, %v1821
    %v1824 = vunpack.c.l.s4 1934713408
    %v1825 = vunpack.c.0.s8 %v1824
    %v1826 = vperm.slane %v1820, %v1825
    %v1828 = vunpack.c.l.s4 1934713408
    %v1829 = vunpack.c.0.s8 %v1828
    %v1830 = vperm.slane %v1822, %v1829
    %v1831 = vrot.slane %v1794, 4
    %v1832 = vsel %vm539, %v1831, %v1782
    %v1833 = vrot.slane %v1782, 4
    %v1834 = vsel %vm539, %v1794, %v1833
    %v1836 = vunpack.c.l.s4 1934713408
    %v1837 = vunpack.c.0.s8 %v1836
    %v1838 = vperm.slane %v1832, %v1837
    %v1840 = vunpack.c.l.s4 1934713408
    %v1841 = vunpack.c.0.s8 %v1840
    %v1842 = vperm.slane %v1834, %v1841
    %v1843 = vrot.slane %v1814, 4
    %v1844 = vsel %vm539, %v1843, %v1802
    %v1845 = vrot.slane %v1802, 4
    %v1846 = vsel %vm539, %v1814, %v1845
    %v1848 = vunpack.c.l.s4 1934713408
    %v1849 = vunpack.c.0.s8 %v1848
    %v1850 = vperm.slane %v1844, %v1849
    %v1852 = vunpack.c.l.s4 1934713408
    %v1853 = vunpack.c.0.s8 %v1852
    %v1854 = vperm.slane %v1846, %v1853
    %v1855 = vrot.slane %v1818, 4
    %v1856 = vsel %vm539, %v1855, %v1806
    %v1857 = vrot.slane %v1806, 4
    %v1858 = vsel %vm539, %v1818, %v1857
    %v1860 = vunpack.c.l.s4 1934713408
    %v1861 = vunpack.c.0.s8 %v1860
    %v1862 = vperm.slane %v1856, %v1861
    %v1864 = vunpack.c.l.s4 1934713408
    %v1865 = vunpack.c.0.s8 %v1864
    %v1866 = vperm.slane %v1858, %v1865
    %v1867 = vrot.slane %v1850, 4
    %v1868 = vsel %vm539, %v1867, %v1826
    %v1869 = vrot.slane %v1826, 4
    %v1870 = vsel %vm539, %v1850, %v1869
    %v1871 = vrot.slane %v1854, 4
    %v1872 = vsel %vm539, %v1871, %v1830
    %v1873 = vrot.slane %v1830, 4
    %v1874 = vsel %vm539, %v1854, %v1873
    %v1875 = vrot.slane %v1862, 4
    %v1876 = vsel %vm539, %v1875, %v1838
    %v1877 = vrot.slane %v1838, 4
    %v1878 = vsel %vm539, %v1862, %v1877
    %v1879 = vrot.slane %v1866, 4
    %v1880 = vsel %vm539, %v1879, %v1842
    %v1881 = vrot.slane %v1842, 4
    %v1882 = vsel %vm539, %v1866, %v1881
    %v1883 = vrot.slane %v519, 4
    %v1884 = vsel %vm539, %v1883, %v515
    %v1885 = vrot.slane %v515, 4
    %v1886 = vsel %vm539, %v519, %v1885
    %v1888 = vunpack.c.l.s4 1983009808
    %v1889 = vunpack.c.0.s8 %v1888
    %v1890 = vperm.slane %v1884, %v1889
    %v1892 = vunpack.c.l.s4 1983009808
    %v1893 = vunpack.c.0.s8 %v1892
    %v1894 = vperm.slane %v1886, %v1893
    %v1895 = vrot.slane %v521, 4
    %v1896 = vsel %vm539, %v1895, %v517
    %v1897 = vrot.slane %v517, 4
    %v1898 = vsel %vm539, %v521, %v1897
    %v1900 = vunpack.c.l.s4 1983009808
    %v1901 = vunpack.c.0.s8 %v1900
    %v1902 = vperm.slane %v1896, %v1901
    %v1904 = vunpack.c.l.s4 1983009808
    %v1905 = vunpack.c.0.s8 %v1904
    %v1906 = vperm.slane %v1898, %v1905
    %v1907 = vrot.slane %v1902, 4
    %v1908 = vsel %vm539, %v1907, %v1890
    %v1909 = vrot.slane %v1890, 4
    %v1910 = vsel %vm539, %v1902, %v1909
    %v1912 = vunpack.c.l.s4 1934713408
    %v1913 = vunpack.c.0.s8 %v1912
    %v1914 = vperm.slane %v1908, %v1913
    %v1916 = vunpack.c.l.s4 1934713408
    %v1917 = vunpack.c.0.s8 %v1916
    %v1918 = vperm.slane %v1910, %v1917
    %v1919 = vrot.slane %v1906, 4
    %v1920 = vsel %vm539, %v1919, %v1894
    %v1921 = vrot.slane %v1894, 4
    %v1922 = vsel %vm539, %v1906, %v1921
    %v1924 = vunpack.c.l.s4 1934713408
    %v1925 = vunpack.c.0.s8 %v1924
    %v1926 = vperm.slane %v1920, %v1925
    %v1928 = vunpack.c.l.s4 1934713408
    %v1929 = vunpack.c.0.s8 %v1928
    %v1930 = vperm.slane %v1922, %v1929
    %v1931 = vrot.slane %v1914, 4
    %v1932 = vsel %vm539, 0.0, %v1931
    %v1933 = vrot.slane %v1918, 4
    %v1934 = vsel %vm539, 0.0, %v1933
    %v1935 = vrot.slane %v1926, 4
    %v1936 = vsel %vm539, 0.0, %v1935
    %v1937 = vrot.slane %v1930, 4
    %v1938 = vsel %vm539, 0.0, %v1937
    %v1939 = vrot.slane %v21, 4
    %v1940 = vsel %vm539, %v1939, %v19
    %v1941 = vrot.slane %v19, 4
    %v1942 = vsel %vm539, %v21, %v1941
    %v1944 = vunpack.c.l.s4 1983009808
    %v1945 = vunpack.c.0.s8 %v1944
    %v1946 = vperm.slane %v1940, %v1945
    %v1948 = vunpack.c.l.s4 1983009808
    %v1949 = vunpack.c.0.s8 %v1948
    %v1950 = vperm.slane %v1942, %v1949
    %v1951 = vrot.slane %v22, 4
    %v1952 = vsel %vm539, %v1951, %v20
    %v1953 = vrot.slane %v20, 4
    %v1954 = vsel %vm539, %v22, %v1953
    %v1956 = vunpack.c.l.s4 1983009808
    %v1957 = vunpack.c.0.s8 %v1956
    %v1958 = vperm.slane %v1952, %v1957
    %v1960 = vunpack.c.l.s4 1983009808
    %v1961 = vunpack.c.0.s8 %v1960
    %v1962 = vperm.slane %v1954, %v1961
    %v1963 = vrot.slane %v30, 4
    %v1964 = vsel %vm539, %v1963, %v28
    %v1965 = vrot.slane %v28, 4
    %v1966 = vsel %vm539, %v30, %v1965
    %v1968 = vunpack.c.l.s4 1983009808
    %v1969 = vunpack.c.0.s8 %v1968
    %v1970 = vperm.slane %v1964, %v1969
    %v1972 = vunpack.c.l.s4 1983009808
    %v1973 = vunpack.c.0.s8 %v1972
    %v1974 = vperm.slane %v1966, %v1973
    %v1975 = vrot.slane %v31, 4
    %v1976 = vsel %vm539, %v1975, %v29
    %v1977 = vrot.slane %v29, 4
    %v1978 = vsel %vm539, %v31, %v1977
    %v1980 = vunpack.c.l.s4 1983009808
    %v1981 = vunpack.c.0.s8 %v1980
    %v1982 = vperm.slane %v1976, %v1981
    %v1984 = vunpack.c.l.s4 1983009808
    %v1985 = vunpack.c.0.s8 %v1984
    %v1986 = vperm.slane %v1978, %v1985
    %v1987 = vrot.slane %v1958, 4
    %v1988 = vsel %vm539, %v1987, %v1946
    %v1989 = vrot.slane %v1946, 4
    %v1990 = vsel %vm539, %v1958, %v1989
    %v1992 = vunpack.c.l.s4 1934713408
    %v1993 = vunpack.c.0.s8 %v1992
    %v1994 = vperm.slane %v1988, %v1993
    %v1996 = vunpack.c.l.s4 1934713408
    %v1997 = vunpack.c.0.s8 %v1996
    %v1998 = vperm.slane %v1990, %v1997
    %v1999 = vrot.slane %v1962, 4
    %v2000 = vsel %vm539, %v1999, %v1950
    %v2001 = vrot.slane %v1950, 4
    %v2002 = vsel %vm539, %v1962, %v2001
    %v2004 = vunpack.c.l.s4 1934713408
    %v2005 = vunpack.c.0.s8 %v2004
    %v2006 = vperm.slane %v2000, %v2005
    %v2008 = vunpack.c.l.s4 1934713408
    %v2009 = vunpack.c.0.s8 %v2008
    %v2010 = vperm.slane %v2002, %v2009
    %v2011 = vrot.slane %v1982, 4
    %v2012 = vsel %vm539, %v2011, %v1970
    %v2013 = vrot.slane %v1970, 4
    %v2014 = vsel %vm539, %v1982, %v2013
    %v2016 = vunpack.c.l.s4 1934713408
    %v2017 = vunpack.c.0.s8 %v2016
    %v2018 = vperm.slane %v2012, %v2017
    %v2020 = vunpack.c.l.s4 1934713408
    %v2021 = vunpack.c.0.s8 %v2020
    %v2022 = vperm.slane %v2014, %v2021
    %v2023 = vrot.slane %v1986, 4
    %v2024 = vsel %vm539, %v2023, %v1974
    %v2025 = vrot.slane %v1974, 4
    %v2026 = vsel %vm539, %v1986, %v2025
    %v2028 = vunpack.c.l.s4 1934713408
    %v2029 = vunpack.c.0.s8 %v2028
    %v2030 = vperm.slane %v2024, %v2029
    %v2032 = vunpack.c.l.s4 1934713408
    %v2033 = vunpack.c.0.s8 %v2032
    %v2034 = vperm.slane %v2026, %v2033
    %v2035 = vrot.slane %v2018, 4
    %v2036 = vsel %vm539, %v2035, %v1994
    %v2037 = vrot.slane %v1994, 4
    %v2038 = vsel %vm539, %v2018, %v2037
    %v2039 = vrot.slane %v2022, 4
    %v2040 = vsel %vm539, %v2039, %v1998
    %v2041 = vrot.slane %v1998, 4
    %v2042 = vsel %vm539, %v2022, %v2041
    %v2043 = vrot.slane %v2030, 4
    %v2044 = vsel %vm539, %v2043, %v2006
    %v2045 = vrot.slane %v2006, 4
    %v2046 = vsel %vm539, %v2030, %v2045
    %v2047 = vrot.slane %v2034, 4
    %v2048 = vsel %vm539, %v2047, %v2010
    %v2049 = vrot.slane %v2010, 4
    %v2050 = vsel %vm539, %v2034, %v2049
    %v2051 = vrot.slane %v119, 4
    %v2052 = vsel %vm539, %v2051, %v115
    %v2053 = vrot.slane %v115, 4
    %v2054 = vsel %vm539, %v119, %v2053
    %v2056 = vunpack.c.l.s4 1983009808
    %v2057 = vunpack.c.0.s8 %v2056
    %v2058 = vperm.slane %v2052, %v2057
    %v2060 = vunpack.c.l.s4 1983009808
    %v2061 = vunpack.c.0.s8 %v2060
    %v2062 = vperm.slane %v2054, %v2061
    %v2063 = vrot.slane %v121, 4
    %v2064 = vsel %vm539, %v2063, %v117
    %v2065 = vrot.slane %v117, 4
    %v2066 = vsel %vm539, %v121, %v2065
    %v2068 = vunpack.c.l.s4 1983009808
    %v2069 = vunpack.c.0.s8 %v2068
    %v2070 = vperm.slane %v2064, %v2069
    %v2072 = vunpack.c.l.s4 1983009808
    %v2073 = vunpack.c.0.s8 %v2072
    %v2074 = vperm.slane %v2066, %v2073
    %v2075 = vrot.slane %v151, 4
    %v2076 = vsel %vm539, %v2075, %v147
    %v2077 = vrot.slane %v147, 4
    %v2078 = vsel %vm539, %v151, %v2077
    %v2080 = vunpack.c.l.s4 1983009808
    %v2081 = vunpack.c.0.s8 %v2080
    %v2082 = vperm.slane %v2076, %v2081
    %v2084 = vunpack.c.l.s4 1983009808
    %v2085 = vunpack.c.0.s8 %v2084
    %v2086 = vperm.slane %v2078, %v2085
    %v2087 = vrot.slane %v153, 4
    %v2088 = vsel %vm539, %v2087, %v149
    %v2089 = vrot.slane %v149, 4
    %v2090 = vsel %vm539, %v153, %v2089
    %v2092 = vunpack.c.l.s4 1983009808
    %v2093 = vunpack.c.0.s8 %v2092
    %v2094 = vperm.slane %v2088, %v2093
    %v2096 = vunpack.c.l.s4 1983009808
    %v2097 = vunpack.c.0.s8 %v2096
    %v2098 = vperm.slane %v2090, %v2097
    %v2099 = vrot.slane %v2070, 4
    %v2100 = vsel %vm539, %v2099, %v2058
    %v2101 = vrot.slane %v2058, 4
    %v2102 = vsel %vm539, %v2070, %v2101
    %v2104 = vunpack.c.l.s4 1934713408
    %v2105 = vunpack.c.0.s8 %v2104
    %v2106 = vperm.slane %v2100, %v2105
    %v2108 = vunpack.c.l.s4 1934713408
    %v2109 = vunpack.c.0.s8 %v2108
    %v2110 = vperm.slane %v2102, %v2109
    %v2111 = vrot.slane %v2074, 4
    %v2112 = vsel %vm539, %v2111, %v2062
    %v2113 = vrot.slane %v2062, 4
    %v2114 = vsel %vm539, %v2074, %v2113
    %v2116 = vunpack.c.l.s4 1934713408
    %v2117 = vunpack.c.0.s8 %v2116
    %v2118 = vperm.slane %v2112, %v2117
    %v2120 = vunpack.c.l.s4 1934713408
    %v2121 = vunpack.c.0.s8 %v2120
    %v2122 = vperm.slane %v2114, %v2121
    %v2123 = vrot.slane %v2094, 4
    %v2124 = vsel %vm539, %v2123, %v2082
    %v2125 = vrot.slane %v2082, 4
    %v2126 = vsel %vm539, %v2094, %v2125
    %v2128 = vunpack.c.l.s4 1934713408
    %v2129 = vunpack.c.0.s8 %v2128
    %v2130 = vperm.slane %v2124, %v2129
    %v2132 = vunpack.c.l.s4 1934713408
    %v2133 = vunpack.c.0.s8 %v2132
    %v2134 = vperm.slane %v2126, %v2133
    %v2135 = vrot.slane %v2098, 4
    %v2136 = vsel %vm539, %v2135, %v2086
    %v2137 = vrot.slane %v2086, 4
    %v2138 = vsel %vm539, %v2098, %v2137
    %v2140 = vunpack.c.l.s4 1934713408
    %v2141 = vunpack.c.0.s8 %v2140
    %v2142 = vperm.slane %v2136, %v2141
    %v2144 = vunpack.c.l.s4 1934713408
    %v2145 = vunpack.c.0.s8 %v2144
    %v2146 = vperm.slane %v2138, %v2145
    %v2147 = vrot.slane %v2130, 4
    %v2148 = vsel %vm539, %v2147, %v2106
    %v2149 = vrot.slane %v2106, 4
    %v2150 = vsel %vm539, %v2130, %v2149
    %v2151 = vrot.slane %v2134, 4
    %v2152 = vsel %vm539, %v2151, %v2110
    %v2153 = vrot.slane %v2110, 4
    %v2154 = vsel %vm539, %v2134, %v2153
    %v2155 = vrot.slane %v2142, 4
    %v2156 = vsel %vm539, %v2155, %v2118
    %v2157 = vrot.slane %v2118, 4
    %v2158 = vsel %vm539, %v2142, %v2157
    %v2159 = vrot.slane %v2146, 4
    %v2160 = vsel %vm539, %v2159, %v2122
    %v2161 = vrot.slane %v2122, 4
    %v2162 = vsel %vm539, %v2146, %v2161
    %v2163 = vrot.slane %v175, 4
    %v2164 = vsel %vm539, %v2163, %v171
    %v2165 = vrot.slane %v171, 4
    %v2166 = vsel %vm539, %v175, %v2165
    %v2168 = vunpack.c.l.s4 1983009808
    %v2169 = vunpack.c.0.s8 %v2168
    %v2170 = vperm.slane %v2164, %v2169
    %v2172 = vunpack.c.l.s4 1983009808
    %v2173 = vunpack.c.0.s8 %v2172
    %v2174 = vperm.slane %v2166, %v2173
    %v2175 = vrot.slane %v177, 4
    %v2176 = vsel %vm539, %v2175, %v173
    %v2177 = vrot.slane %v173, 4
    %v2178 = vsel %vm539, %v177, %v2177
    %v2180 = vunpack.c.l.s4 1983009808
    %v2181 = vunpack.c.0.s8 %v2180
    %v2182 = vperm.slane %v2176, %v2181
    %v2184 = vunpack.c.l.s4 1983009808
    %v2185 = vunpack.c.0.s8 %v2184
    %v2186 = vperm.slane %v2178, %v2185
    %v2187 = vrot.slane %v39, 4
    %v2188 = vsel %vm539, %v2187, %v37
    %v2189 = vrot.slane %v37, 4
    %v2190 = vsel %vm539, %v39, %v2189
    %v2192 = vunpack.c.l.s4 1983009808
    %v2193 = vunpack.c.0.s8 %v2192
    %v2194 = vperm.slane %v2188, %v2193
    %v2196 = vunpack.c.l.s4 1983009808
    %v2197 = vunpack.c.0.s8 %v2196
    %v2198 = vperm.slane %v2190, %v2197
    %v2199 = vrot.slane %v40, 4
    %v2200 = vsel %vm539, %v2199, %v38
    %v2201 = vrot.slane %v38, 4
    %v2202 = vsel %vm539, %v40, %v2201
    %v2204 = vunpack.c.l.s4 1983009808
    %v2205 = vunpack.c.0.s8 %v2204
    %v2206 = vperm.slane %v2200, %v2205
    %v2208 = vunpack.c.l.s4 1983009808
    %v2209 = vunpack.c.0.s8 %v2208
    %v2210 = vperm.slane %v2202, %v2209
    %v2211 = vrot.slane %v2182, 4
    %v2212 = vsel %vm539, %v2211, %v2170
    %v2213 = vrot.slane %v2170, 4
    %v2214 = vsel %vm539, %v2182, %v2213
    %v2216 = vunpack.c.l.s4 1934713408
    %v2217 = vunpack.c.0.s8 %v2216
    %v2218 = vperm.slane %v2212, %v2217
    %v2220 = vunpack.c.l.s4 1934713408
    %v2221 = vunpack.c.0.s8 %v2220
    %v2222 = vperm.slane %v2214, %v2221
    %v2223 = vrot.slane %v2186, 4
    %v2224 = vsel %vm539, %v2223, %v2174
    %v2225 = vrot.slane %v2174, 4
    %v2226 = vsel %vm539, %v2186, %v2225
    %v2228 = vunpack.c.l.s4 1934713408
    %v2229 = vunpack.c.0.s8 %v2228
    %v2230 = vperm.slane %v2224, %v2229
    %v2232 = vunpack.c.l.s4 1934713408
    %v2233 = vunpack.c.0.s8 %v2232
    %v2234 = vperm.slane %v2226, %v2233
    %v2235 = vrot.slane %v2206, 4
    %v2236 = vsel %vm539, %v2235, %v2194
    %v2237 = vrot.slane %v2194, 4
    %v2238 = vsel %vm539, %v2206, %v2237
    %v2240 = vunpack.c.l.s4 1934713408
    %v2241 = vunpack.c.0.s8 %v2240
    %v2242 = vperm.slane %v2236, %v2241
    %v2244 = vunpack.c.l.s4 1934713408
    %v2245 = vunpack.c.0.s8 %v2244
    %v2246 = vperm.slane %v2238, %v2245
    %v2247 = vrot.slane %v2210, 4
    %v2248 = vsel %vm539, %v2247, %v2198
    %v2249 = vrot.slane %v2198, 4
    %v2250 = vsel %vm539, %v2210, %v2249
    %v2252 = vunpack.c.l.s4 1934713408
    %v2253 = vunpack.c.0.s8 %v2252
    %v2254 = vperm.slane %v2248, %v2253
    %v2256 = vunpack.c.l.s4 1934713408
    %v2257 = vunpack.c.0.s8 %v2256
    %v2258 = vperm.slane %v2250, %v2257
    %v2259 = vrot.slane %v2242, 4
    %v2260 = vsel %vm539, %v2259, %v2218
    %v2261 = vrot.slane %v2218, 4
    %v2262 = vsel %vm539, %v2242, %v2261
    %v2263 = vrot.slane %v2246, 4
    %v2264 = vsel %vm539, %v2263, %v2222
    %v2265 = vrot.slane %v2222, 4
    %v2266 = vsel %vm539, %v2246, %v2265
    %v2267 = vrot.slane %v2254, 4
    %v2268 = vsel %vm539, %v2267, %v2230
    %v2269 = vrot.slane %v2230, 4
    %v2270 = vsel %vm539, %v2254, %v2269
    %v2271 = vrot.slane %v2258, 4
    %v2272 = vsel %vm539, %v2271, %v2234
    %v2273 = vrot.slane %v2234, 4
    %v2274 = vsel %vm539, %v2258, %v2273
    %v2275 = vrot.slane %v48, 4
    %v2276 = vsel %vm539, %v2275, %v46
    %v2277 = vrot.slane %v46, 4
    %v2278 = vsel %vm539, %v48, %v2277
    %v2280 = vunpack.c.l.s4 1983009808
    %v2281 = vunpack.c.0.s8 %v2280
    %v2282 = vperm.slane %v2276, %v2281
    %v2284 = vunpack.c.l.s4 1983009808
    %v2285 = vunpack.c.0.s8 %v2284
    %v2286 = vperm.slane %v2278, %v2285
    %v2287 = vrot.slane %v49, 4
    %v2288 = vsel %vm539, %v2287, %v47
    %v2289 = vrot.slane %v47, 4
    %v2290 = vsel %vm539, %v49, %v2289
    %v2292 = vunpack.c.l.s4 1983009808
    %v2293 = vunpack.c.0.s8 %v2292
    %v2294 = vperm.slane %v2288, %v2293
    %v2296 = vunpack.c.l.s4 1983009808
    %v2297 = vunpack.c.0.s8 %v2296
    %v2298 = vperm.slane %v2290, %v2297
    %v2299 = vrot.slane %v207, 4
    %v2300 = vsel %vm539, %v2299, %v203
    %v2301 = vrot.slane %v203, 4
    %v2302 = vsel %vm539, %v207, %v2301
    %v2304 = vunpack.c.l.s4 1983009808
    %v2305 = vunpack.c.0.s8 %v2304
    %v2306 = vperm.slane %v2300, %v2305
    %v2308 = vunpack.c.l.s4 1983009808
    %v2309 = vunpack.c.0.s8 %v2308
    %v2310 = vperm.slane %v2302, %v2309
    %v2311 = vrot.slane %v209, 4
    %v2312 = vsel %vm539, %v2311, %v205
    %v2313 = vrot.slane %v205, 4
    %v2314 = vsel %vm539, %v209, %v2313
    %v2316 = vunpack.c.l.s4 1983009808
    %v2317 = vunpack.c.0.s8 %v2316
    %v2318 = vperm.slane %v2312, %v2317
    %v2320 = vunpack.c.l.s4 1983009808
    %v2321 = vunpack.c.0.s8 %v2320
    %v2322 = vperm.slane %v2314, %v2321
    %v2323 = vrot.slane %v2294, 4
    %v2324 = vsel %vm539, %v2323, %v2282
    %v2325 = vrot.slane %v2282, 4
    %v2326 = vsel %vm539, %v2294, %v2325
    %v2328 = vunpack.c.l.s4 1934713408
    %v2329 = vunpack.c.0.s8 %v2328
    %v2330 = vperm.slane %v2324, %v2329
    %v2332 = vunpack.c.l.s4 1934713408
    %v2333 = vunpack.c.0.s8 %v2332
    %v2334 = vperm.slane %v2326, %v2333
    %v2335 = vrot.slane %v2298, 4
    %v2336 = vsel %vm539, %v2335, %v2286
    %v2337 = vrot.slane %v2286, 4
    %v2338 = vsel %vm539, %v2298, %v2337
    %v2340 = vunpack.c.l.s4 1934713408
    %v2341 = vunpack.c.0.s8 %v2340
    %v2342 = vperm.slane %v2336, %v2341
    %v2344 = vunpack.c.l.s4 1934713408
    %v2345 = vunpack.c.0.s8 %v2344
    %v2346 = vperm.slane %v2338, %v2345
    %v2347 = vrot.slane %v2318, 4
    %v2348 = vsel %vm539, %v2347, %v2306
    %v2349 = vrot.slane %v2306, 4
    %v2350 = vsel %vm539, %v2318, %v2349
    %v2352 = vunpack.c.l.s4 1934713408
    %v2353 = vunpack.c.0.s8 %v2352
    %v2354 = vperm.slane %v2348, %v2353
    %v2356 = vunpack.c.l.s4 1934713408
    %v2357 = vunpack.c.0.s8 %v2356
    %v2358 = vperm.slane %v2350, %v2357
    %v2359 = vrot.slane %v2322, 4
    %v2360 = vsel %vm539, %v2359, %v2310
    %v2361 = vrot.slane %v2310, 4
    %v2362 = vsel %vm539, %v2322, %v2361
    %v2364 = vunpack.c.l.s4 1934713408
    %v2365 = vunpack.c.0.s8 %v2364
    %v2366 = vperm.slane %v2360, %v2365
    %v2368 = vunpack.c.l.s4 1934713408
    %v2369 = vunpack.c.0.s8 %v2368
    %v2370 = vperm.slane %v2362, %v2369
    %v2371 = vrot.slane %v2354, 4
    %v2372 = vsel %vm539, %v2371, %v2330
    %v2373 = vrot.slane %v2330, 4
    %v2374 = vsel %vm539, %v2354, %v2373
    %v2375 = vrot.slane %v2358, 4
    %v2376 = vsel %vm539, %v2375, %v2334
    %v2377 = vrot.slane %v2334, 4
    %v2378 = vsel %vm539, %v2358, %v2377
    %v2379 = vrot.slane %v2366, 4
    %v2380 = vsel %vm539, %v2379, %v2342
    %v2381 = vrot.slane %v2342, 4
    %v2382 = vsel %vm539, %v2366, %v2381
    %v2383 = vrot.slane %v2370, 4
    %v2384 = vsel %vm539, %v2383, %v2346
    %v2385 = vrot.slane %v2346, 4
    %v2386 = vsel %vm539, %v2370, %v2385
    %v2387 = vrot.slane %v239, 4
    %v2388 = vsel %vm539, %v2387, %v235
    %v2389 = vrot.slane %v235, 4
    %v2390 = vsel %vm539, %v239, %v2389
    %v2392 = vunpack.c.l.s4 1983009808
    %v2393 = vunpack.c.0.s8 %v2392
    %v2394 = vperm.slane %v2388, %v2393
    %v2396 = vunpack.c.l.s4 1983009808
    %v2397 = vunpack.c.0.s8 %v2396
    %v2398 = vperm.slane %v2390, %v2397
    %v2399 = vrot.slane %v241, 4
    %v2400 = vsel %vm539, %v2399, %v237
    %v2401 = vrot.slane %v237, 4
    %v2402 = vsel %vm539, %v241, %v2401
    %v2404 = vunpack.c.l.s4 1983009808
    %v2405 = vunpack.c.0.s8 %v2404
    %v2406 = vperm.slane %v2400, %v2405
    %v2408 = vunpack.c.l.s4 1983009808
    %v2409 = vunpack.c.0.s8 %v2408
    %v2410 = vperm.slane %v2402, %v2409
    %v2411 = vrot.slane %v263, 4
    %v2412 = vsel %vm539, %v2411, %v259
    %v2413 = vrot.slane %v259, 4
    %v2414 = vsel %vm539, %v263, %v2413
    %v2416 = vunpack.c.l.s4 1983009808
    %v2417 = vunpack.c.0.s8 %v2416
    %v2418 = vperm.slane %v2412, %v2417
    %v2420 = vunpack.c.l.s4 1983009808
    %v2421 = vunpack.c.0.s8 %v2420
    %v2422 = vperm.slane %v2414, %v2421
    %v2423 = vrot.slane %v265, 4
    %v2424 = vsel %vm539, %v2423, %v261
    %v2425 = vrot.slane %v261, 4
    %v2426 = vsel %vm539, %v265, %v2425
    %v2428 = vunpack.c.l.s4 1983009808
    %v2429 = vunpack.c.0.s8 %v2428
    %v2430 = vperm.slane %v2424, %v2429
    %v2432 = vunpack.c.l.s4 1983009808
    %v2433 = vunpack.c.0.s8 %v2432
    %v2434 = vperm.slane %v2426, %v2433
    %v2435 = vrot.slane %v2406, 4
    %v2436 = vsel %vm539, %v2435, %v2394
    %v2437 = vrot.slane %v2394, 4
    %v2438 = vsel %vm539, %v2406, %v2437
    %v2440 = vunpack.c.l.s4 1934713408
    %v2441 = vunpack.c.0.s8 %v2440
    %v2442 = vperm.slane %v2436, %v2441
    %v2444 = vunpack.c.l.s4 1934713408
    %v2445 = vunpack.c.0.s8 %v2444
    %v2446 = vperm.slane %v2438, %v2445
    %v2447 = vrot.slane %v2410, 4
    %v2448 = vsel %vm539, %v2447, %v2398
    %v2449 = vrot.slane %v2398, 4
    %v2450 = vsel %vm539, %v2410, %v2449
    %v2452 = vunpack.c.l.s4 1934713408
    %v2453 = vunpack.c.0.s8 %v2452
    %v2454 = vperm.slane %v2448, %v2453
    %v2456 = vunpack.c.l.s4 1934713408
    %v2457 = vunpack.c.0.s8 %v2456
    %v2458 = vperm.slane %v2450, %v2457
    %v2459 = vrot.slane %v2430, 4
    %v2460 = vsel %vm539, %v2459, %v2418
    %v2461 = vrot.slane %v2418, 4
    %v2462 = vsel %vm539, %v2430, %v2461
    %v2464 = vunpack.c.l.s4 1934713408
    %v2465 = vunpack.c.0.s8 %v2464
    %v2466 = vperm.slane %v2460, %v2465
    %v2468 = vunpack.c.l.s4 1934713408
    %v2469 = vunpack.c.0.s8 %v2468
    %v2470 = vperm.slane %v2462, %v2469
    %v2471 = vrot.slane %v2434, 4
    %v2472 = vsel %vm539, %v2471, %v2422
    %v2473 = vrot.slane %v2422, 4
    %v2474 = vsel %vm539, %v2434, %v2473
    %v2476 = vunpack.c.l.s4 1934713408
    %v2477 = vunpack.c.0.s8 %v2476
    %v2478 = vperm.slane %v2472, %v2477
    %v2480 = vunpack.c.l.s4 1934713408
    %v2481 = vunpack.c.0.s8 %v2480
    %v2482 = vperm.slane %v2474, %v2481
    %v2483 = vrot.slane %v2466, 4
    %v2484 = vsel %vm539, %v2483, %v2442
    %v2485 = vrot.slane %v2442, 4
    %v2486 = vsel %vm539, %v2466, %v2485
    %v2487 = vrot.slane %v2470, 4
    %v2488 = vsel %vm539, %v2487, %v2446
    %v2489 = vrot.slane %v2446, 4
    %v2490 = vsel %vm539, %v2470, %v2489
    %v2491 = vrot.slane %v2478, 4
    %v2492 = vsel %vm539, %v2491, %v2454
    %v2493 = vrot.slane %v2454, 4
    %v2494 = vsel %vm539, %v2478, %v2493
    %v2495 = vrot.slane %v2482, 4
    %v2496 = vsel %vm539, %v2495, %v2458
    %v2497 = vrot.slane %v2458, 4
    %v2498 = vsel %vm539, %v2482, %v2497
    %v2499 = vrot.slane %v56, 4
    %v2500 = vsel %vm539, %v2499, %v54
    %v2501 = vrot.slane %v54, 4
    %v2502 = vsel %vm539, %v56, %v2501
    %v2504 = vunpack.c.l.s4 1983009808
    %v2505 = vunpack.c.0.s8 %v2504
    %v2506 = vperm.slane %v2500, %v2505
    %v2508 = vunpack.c.l.s4 1983009808
    %v2509 = vunpack.c.0.s8 %v2508
    %v2510 = vperm.slane %v2502, %v2509
    %v2511 = vrot.slane %v57, 4
    %v2512 = vsel %vm539, %v2511, %v55
    %v2513 = vrot.slane %v55, 4
    %v2514 = vsel %vm539, %v57, %v2513
    %v2516 = vunpack.c.l.s4 1983009808
    %v2517 = vunpack.c.0.s8 %v2516
    %v2518 = vperm.slane %v2512, %v2517
    %v2520 = vunpack.c.l.s4 1983009808
    %v2521 = vunpack.c.0.s8 %v2520
    %v2522 = vperm.slane %v2514, %v2521
    %v2523 = vrot.slane %v64, 4
    %v2524 = vsel %vm539, %v2523, %v62
    %v2525 = vrot.slane %v62, 4
    %v2526 = vsel %vm539, %v64, %v2525
    %v2528 = vunpack.c.l.s4 1983009808
    %v2529 = vunpack.c.0.s8 %v2528
    %v2530 = vperm.slane %v2524, %v2529
    %v2532 = vunpack.c.l.s4 1983009808
    %v2533 = vunpack.c.0.s8 %v2532
    %v2534 = vperm.slane %v2526, %v2533
    %v2535 = vrot.slane %v65, 4
    %v2536 = vsel %vm539, %v2535, %v63
    %v2537 = vrot.slane %v63, 4
    %v2538 = vsel %vm539, %v65, %v2537
    %v2540 = vunpack.c.l.s4 1983009808
    %v2541 = vunpack.c.0.s8 %v2540
    %v2542 = vperm.slane %v2536, %v2541
    %v2544 = vunpack.c.l.s4 1983009808
    %v2545 = vunpack.c.0.s8 %v2544
    %v2546 = vperm.slane %v2538, %v2545
    %v2547 = vrot.slane %v2518, 4
    %v2548 = vsel %vm539, %v2547, %v2506
    %v2549 = vrot.slane %v2506, 4
    %v2550 = vsel %vm539, %v2518, %v2549
    %v2552 = vunpack.c.l.s4 1934713408
    %v2553 = vunpack.c.0.s8 %v2552
    %v2554 = vperm.slane %v2548, %v2553
    %v2556 = vunpack.c.l.s4 1934713408
    %v2557 = vunpack.c.0.s8 %v2556
    %v2558 = vperm.slane %v2550, %v2557
    %v2559 = vrot.slane %v2522, 4
    %v2560 = vsel %vm539, %v2559, %v2510
    %v2561 = vrot.slane %v2510, 4
    %v2562 = vsel %vm539, %v2522, %v2561
    %v2564 = vunpack.c.l.s4 1934713408
    %v2565 = vunpack.c.0.s8 %v2564
    %v2566 = vperm.slane %v2560, %v2565
    %v2568 = vunpack.c.l.s4 1934713408
    %v2569 = vunpack.c.0.s8 %v2568
    %v2570 = vperm.slane %v2562, %v2569
    %v2571 = vrot.slane %v2542, 4
    %v2572 = vsel %vm539, %v2571, %v2530
    %v2573 = vrot.slane %v2530, 4
    %v2574 = vsel %vm539, %v2542, %v2573
    %v2576 = vunpack.c.l.s4 1934713408
    %v2577 = vunpack.c.0.s8 %v2576
    %v2578 = vperm.slane %v2572, %v2577
    %v2580 = vunpack.c.l.s4 1934713408
    %v2581 = vunpack.c.0.s8 %v2580
    %v2582 = vperm.slane %v2574, %v2581
    %v2583 = vrot.slane %v2546, 4
    %v2584 = vsel %vm539, %v2583, %v2534
    %v2585 = vrot.slane %v2534, 4
    %v2586 = vsel %vm539, %v2546, %v2585
    %v2588 = vunpack.c.l.s4 1934713408
    %v2589 = vunpack.c.0.s8 %v2588
    %v2590 = vperm.slane %v2584, %v2589
    %v2592 = vunpack.c.l.s4 1934713408
    %v2593 = vunpack.c.0.s8 %v2592
    %v2594 = vperm.slane %v2586, %v2593
    %v2595 = vrot.slane %v2578, 4
    %v2596 = vsel %vm539, %v2595, %v2554
    %v2597 = vrot.slane %v2554, 4
    %v2598 = vsel %vm539, %v2578, %v2597
    %v2599 = vrot.slane %v2582, 4
    %v2600 = vsel %vm539, %v2599, %v2558
    %v2601 = vrot.slane %v2558, 4
    %v2602 = vsel %vm539, %v2582, %v2601
    %v2603 = vrot.slane %v2590, 4
    %v2604 = vsel %vm539, %v2603, %v2566
    %v2605 = vrot.slane %v2566, 4
    %v2606 = vsel %vm539, %v2590, %v2605
    %v2607 = vrot.slane %v2594, 4
    %v2608 = vsel %vm539, %v2607, %v2570
    %v2609 = vrot.slane %v2570, 4
    %v2610 = vsel %vm539, %v2594, %v2609
    %v2611 = vrot.slane %v295, 4
    %v2612 = vsel %vm539, %v2611, %v291
    %v2613 = vrot.slane %v291, 4
    %v2614 = vsel %vm539, %v295, %v2613
    %v2616 = vunpack.c.l.s4 1983009808
    %v2617 = vunpack.c.0.s8 %v2616
    %v2618 = vperm.slane %v2612, %v2617
    %v2620 = vunpack.c.l.s4 1983009808
    %v2621 = vunpack.c.0.s8 %v2620
    %v2622 = vperm.slane %v2614, %v2621
    %v2623 = vrot.slane %v297, 4
    %v2624 = vsel %vm539, %v2623, %v293
    %v2625 = vrot.slane %v293, 4
    %v2626 = vsel %vm539, %v297, %v2625
    %v2628 = vunpack.c.l.s4 1983009808
    %v2629 = vunpack.c.0.s8 %v2628
    %v2630 = vperm.slane %v2624, %v2629
    %v2632 = vunpack.c.l.s4 1983009808
    %v2633 = vunpack.c.0.s8 %v2632
    %v2634 = vperm.slane %v2626, %v2633
    %v2635 = vrot.slane %v327, 4
    %v2636 = vsel %vm539, %v2635, %v323
    %v2637 = vrot.slane %v323, 4
    %v2638 = vsel %vm539, %v327, %v2637
    %v2640 = vunpack.c.l.s4 1983009808
    %v2641 = vunpack.c.0.s8 %v2640
    %v2642 = vperm.slane %v2636, %v2641
    %v2644 = vunpack.c.l.s4 1983009808
    %v2645 = vunpack.c.0.s8 %v2644
    %v2646 = vperm.slane %v2638, %v2645
    %v2647 = vrot.slane %v329, 4
    %v2648 = vsel %vm539, %v2647, %v325
    %v2649 = vrot.slane %v325, 4
    %v2650 = vsel %vm539, %v329, %v2649
    %v2652 = vunpack.c.l.s4 1983009808
    %v2653 = vunpack.c.0.s8 %v2652
    %v2654 = vperm.slane %v2648, %v2653
    %v2656 = vunpack.c.l.s4 1983009808
    %v2657 = vunpack.c.0.s8 %v2656
    %v2658 = vperm.slane %v2650, %v2657
    %v2659 = vrot.slane %v2630, 4
    %v2660 = vsel %vm539, %v2659, %v2618
    %v2661 = vrot.slane %v2618, 4
    %v2662 = vsel %vm539, %v2630, %v2661
    %v2664 = vunpack.c.l.s4 1934713408
    %v2665 = vunpack.c.0.s8 %v2664
    %v2666 = vperm.slane %v2660, %v2665
    %v2668 = vunpack.c.l.s4 1934713408
    %v2669 = vunpack.c.0.s8 %v2668
    %v2670 = vperm.slane %v2662, %v2669
    %v2671 = vrot.slane %v2634, 4
    %v2672 = vsel %vm539, %v2671, %v2622
    %v2673 = vrot.slane %v2622, 4
    %v2674 = vsel %vm539, %v2634, %v2673
    %v2676 = vunpack.c.l.s4 1934713408
    %v2677 = vunpack.c.0.s8 %v2676
    %v2678 = vperm.slane %v2672, %v2677
    %v2680 = vunpack.c.l.s4 1934713408
    %v2681 = vunpack.c.0.s8 %v2680
    %v2682 = vperm.slane %v2674, %v2681
    %v2683 = vrot.slane %v2654, 4
    %v2684 = vsel %vm539, %v2683, %v2642
    %v2685 = vrot.slane %v2642, 4
    %v2686 = vsel %vm539, %v2654, %v2685
    %v2688 = vunpack.c.l.s4 1934713408
    %v2689 = vunpack.c.0.s8 %v2688
    %v2690 = vperm.slane %v2684, %v2689
    %v2692 = vunpack.c.l.s4 1934713408
    %v2693 = vunpack.c.0.s8 %v2692
    %v2694 = vperm.slane %v2686, %v2693
    %v2695 = vrot.slane %v2658, 4
    %v2696 = vsel %vm539, %v2695, %v2646
    %v2697 = vrot.slane %v2646, 4
    %v2698 = vsel %vm539, %v2658, %v2697
    %v2700 = vunpack.c.l.s4 1934713408
    %v2701 = vunpack.c.0.s8 %v2700
    %v2702 = vperm.slane %v2696, %v2701
    %v2704 = vunpack.c.l.s4 1934713408
    %v2705 = vunpack.c.0.s8 %v2704
    %v2706 = vperm.slane %v2698, %v2705
    %v2707 = vrot.slane %v2690, 4
    %v2708 = vsel %vm539, %v2707, %v2666
    %v2709 = vrot.slane %v2666, 4
    %v2710 = vsel %vm539, %v2690, %v2709
    %v2711 = vrot.slane %v2694, 4
    %v2712 = vsel %vm539, %v2711, %v2670
    %v2713 = vrot.slane %v2670, 4
    %v2714 = vsel %vm539, %v2694, %v2713
    %v2715 = vrot.slane %v2702, 4
    %v2716 = vsel %vm539, %v2715, %v2678
    %v2717 = vrot.slane %v2678, 4
    %v2718 = vsel %vm539, %v2702, %v2717
    %v2719 = vrot.slane %v2706, 4
    %v2720 = vsel %vm539, %v2719, %v2682
    %v2721 = vrot.slane %v2682, 4
    %v2722 = vsel %vm539, %v2706, %v2721
    %v2723 = vrot.slane %v351, 4
    %v2724 = vsel %vm539, %v2723, %v347
    %v2725 = vrot.slane %v347, 4
    %v2726 = vsel %vm539, %v351, %v2725
    %v2728 = vunpack.c.l.s4 1983009808
    %v2729 = vunpack.c.0.s8 %v2728
    %v2730 = vperm.slane %v2724, %v2729
    %v2732 = vunpack.c.l.s4 1983009808
    %v2733 = vunpack.c.0.s8 %v2732
    %v2734 = vperm.slane %v2726, %v2733
    %v2735 = vrot.slane %v353, 4
    %v2736 = vsel %vm539, %v2735, %v349
    %v2737 = vrot.slane %v349, 4
    %v2738 = vsel %vm539, %v353, %v2737
    %v2740 = vunpack.c.l.s4 1983009808
    %v2741 = vunpack.c.0.s8 %v2740
    %v2742 = vperm.slane %v2736, %v2741
    %v2744 = vunpack.c.l.s4 1983009808
    %v2745 = vunpack.c.0.s8 %v2744
    %v2746 = vperm.slane %v2738, %v2745
    %v2747 = vrot.slane %v72, 4
    %v2748 = vsel %vm539, %v2747, %v70
    %v2749 = vrot.slane %v70, 4
    %v2750 = vsel %vm539, %v72, %v2749
    %v2752 = vunpack.c.l.s4 1983009808
    %v2753 = vunpack.c.0.s8 %v2752
    %v2754 = vperm.slane %v2748, %v2753
    %v2756 = vunpack.c.l.s4 1983009808
    %v2757 = vunpack.c.0.s8 %v2756
    %v2758 = vperm.slane %v2750, %v2757
    %v2759 = vrot.slane %v73, 4
    %v2760 = vsel %vm539, %v2759, %v71
    %v2761 = vrot.slane %v71, 4
    %v2762 = vsel %vm539, %v73, %v2761
    %v2764 = vunpack.c.l.s4 1983009808
    %v2765 = vunpack.c.0.s8 %v2764
    %v2766 = vperm.slane %v2760, %v2765
    %v2768 = vunpack.c.l.s4 1983009808
    %v2769 = vunpack.c.0.s8 %v2768
    %v2770 = vperm.slane %v2762, %v2769
    %v2771 = vrot.slane %v2742, 4
    %v2772 = vsel %vm539, %v2771, %v2730
    %v2773 = vrot.slane %v2730, 4
    %v2774 = vsel %vm539, %v2742, %v2773
    %v2776 = vunpack.c.l.s4 1934713408
    %v2777 = vunpack.c.0.s8 %v2776
    %v2778 = vperm.slane %v2772, %v2777
    %v2780 = vunpack.c.l.s4 1934713408
    %v2781 = vunpack.c.0.s8 %v2780
    %v2782 = vperm.slane %v2774, %v2781
    %v2783 = vrot.slane %v2746, 4
    %v2784 = vsel %vm539, %v2783, %v2734
    %v2785 = vrot.slane %v2734, 4
    %v2786 = vsel %vm539, %v2746, %v2785
    %v2788 = vunpack.c.l.s4 1934713408
    %v2789 = vunpack.c.0.s8 %v2788
    %v2790 = vperm.slane %v2784, %v2789
    %v2792 = vunpack.c.l.s4 1934713408
    %v2793 = vunpack.c.0.s8 %v2792
    %v2794 = vperm.slane %v2786, %v2793
    %v2795 = vrot.slane %v2766, 4
    %v2796 = vsel %vm539, %v2795, %v2754
    %v2797 = vrot.slane %v2754, 4
    %v2798 = vsel %vm539, %v2766, %v2797
    %v2800 = vunpack.c.l.s4 1934713408
    %v2801 = vunpack.c.0.s8 %v2800
    %v2802 = vperm.slane %v2796, %v2801
    %v2804 = vunpack.c.l.s4 1934713408
    %v2805 = vunpack.c.0.s8 %v2804
    %v2806 = vperm.slane %v2798, %v2805
    %v2807 = vrot.slane %v2770, 4
    %v2808 = vsel %vm539, %v2807, %v2758
    %v2809 = vrot.slane %v2758, 4
    %v2810 = vsel %vm539, %v2770, %v2809
    %v2812 = vunpack.c.l.s4 1934713408
    %v2813 = vunpack.c.0.s8 %v2812
    %v2814 = vperm.slane %v2808, %v2813
    %v2816 = vunpack.c.l.s4 1934713408
    %v2817 = vunpack.c.0.s8 %v2816
    %v2818 = vperm.slane %v2810, %v2817
    %v2819 = vrot.slane %v2802, 4
    %v2820 = vsel %vm539, %v2819, %v2778
    %v2821 = vrot.slane %v2778, 4
    %v2822 = vsel %vm539, %v2802, %v2821
    %v2823 = vrot.slane %v2806, 4
    %v2824 = vsel %vm539, %v2823, %v2782
    %v2825 = vrot.slane %v2782, 4
    %v2826 = vsel %vm539, %v2806, %v2825
    %v2827 = vrot.slane %v2814, 4
    %v2828 = vsel %vm539, %v2827, %v2790
    %v2829 = vrot.slane %v2790, 4
    %v2830 = vsel %vm539, %v2814, %v2829
    %v2831 = vrot.slane %v2818, 4
    %v2832 = vsel %vm539, %v2831, %v2794
    %v2833 = vrot.slane %v2794, 4
    %v2834 = vsel %vm539, %v2818, %v2833
    %v2835 = vrot.slane %v80, 4
    %v2836 = vsel %vm539, %v2835, %v78
    %v2837 = vrot.slane %v78, 4
    %v2838 = vsel %vm539, %v80, %v2837
    %v2840 = vunpack.c.l.s4 1983009808
    %v2841 = vunpack.c.0.s8 %v2840
    %v2842 = vperm.slane %v2836, %v2841
    %v2844 = vunpack.c.l.s4 1983009808
    %v2845 = vunpack.c.0.s8 %v2844
    %v2846 = vperm.slane %v2838, %v2845
    %v2847 = vrot.slane %v81, 4
    %v2848 = vsel %vm539, %v2847, %v79
    %v2849 = vrot.slane %v79, 4
    %v2850 = vsel %vm539, %v81, %v2849
    %v2852 = vunpack.c.l.s4 1983009808
    %v2853 = vunpack.c.0.s8 %v2852
    %v2854 = vperm.slane %v2848, %v2853
    %v2856 = vunpack.c.l.s4 1983009808
    %v2857 = vunpack.c.0.s8 %v2856
    %v2858 = vperm.slane %v2850, %v2857
    %v2859 = vrot.slane %v383, 4
    %v2860 = vsel %vm539, %v2859, %v379
    %v2861 = vrot.slane %v379, 4
    %v2862 = vsel %vm539, %v383, %v2861
    %v2864 = vunpack.c.l.s4 1983009808
    %v2865 = vunpack.c.0.s8 %v2864
    %v2866 = vperm.slane %v2860, %v2865
    %v2868 = vunpack.c.l.s4 1983009808
    %v2869 = vunpack.c.0.s8 %v2868
    %v2870 = vperm.slane %v2862, %v2869
    %v2871 = vrot.slane %v385, 4
    %v2872 = vsel %vm539, %v2871, %v381
    %v2873 = vrot.slane %v381, 4
    %v2874 = vsel %vm539, %v385, %v2873
    %v2876 = vunpack.c.l.s4 1983009808
    %v2877 = vunpack.c.0.s8 %v2876
    %v2878 = vperm.slane %v2872, %v2877
    %v2880 = vunpack.c.l.s4 1983009808
    %v2881 = vunpack.c.0.s8 %v2880
    %v2882 = vperm.slane %v2874, %v2881
    %v2883 = vrot.slane %v2854, 4
    %v2884 = vsel %vm539, %v2883, %v2842
    %v2885 = vrot.slane %v2842, 4
    %v2886 = vsel %vm539, %v2854, %v2885
    %v2888 = vunpack.c.l.s4 1934713408
    %v2889 = vunpack.c.0.s8 %v2888
    %v2890 = vperm.slane %v2884, %v2889
    %v2892 = vunpack.c.l.s4 1934713408
    %v2893 = vunpack.c.0.s8 %v2892
    %v2894 = vperm.slane %v2886, %v2893
    %v2895 = vrot.slane %v2858, 4
    %v2896 = vsel %vm539, %v2895, %v2846
    %v2897 = vrot.slane %v2846, 4
    %v2898 = vsel %vm539, %v2858, %v2897
    %v2900 = vunpack.c.l.s4 1934713408
    %v2901 = vunpack.c.0.s8 %v2900
    %v2902 = vperm.slane %v2896, %v2901
    %v2904 = vunpack.c.l.s4 1934713408
    %v2905 = vunpack.c.0.s8 %v2904
    %v2906 = vperm.slane %v2898, %v2905
    %v2907 = vrot.slane %v2878, 4
    %v2908 = vsel %vm539, %v2907, %v2866
    %v2909 = vrot.slane %v2866, 4
    %v2910 = vsel %vm539, %v2878, %v2909
    %v2912 = vunpack.c.l.s4 1934713408
    %v2913 = vunpack.c.0.s8 %v2912
    %v2914 = vperm.slane %v2908, %v2913
    %v2916 = vunpack.c.l.s4 1934713408
    %v2917 = vunpack.c.0.s8 %v2916
    %v2918 = vperm.slane %v2910, %v2917
    %v2919 = vrot.slane %v2882, 4
    %v2920 = vsel %vm539, %v2919, %v2870
    %v2921 = vrot.slane %v2870, 4
    %v2922 = vsel %vm539, %v2882, %v2921
    %v2924 = vunpack.c.l.s4 1934713408
    %v2925 = vunpack.c.0.s8 %v2924
    %v2926 = vperm.slane %v2920, %v2925
    %v2928 = vunpack.c.l.s4 1934713408
    %v2929 = vunpack.c.0.s8 %v2928
    %v2930 = vperm.slane %v2922, %v2929
    %v2931 = vrot.slane %v2914, 4
    %v2932 = vsel %vm539, %v2931, %v2890
    %v2933 = vrot.slane %v2890, 4
    %v2934 = vsel %vm539, %v2914, %v2933
    %v2935 = vrot.slane %v2918, 4
    %v2936 = vsel %vm539, %v2935, %v2894
    %v2937 = vrot.slane %v2894, 4
    %v2938 = vsel %vm539, %v2918, %v2937
    %v2939 = vrot.slane %v2926, 4
    %v2940 = vsel %vm539, %v2939, %v2902
    %v2941 = vrot.slane %v2902, 4
    %v2942 = vsel %vm539, %v2926, %v2941
    %v2943 = vrot.slane %v2930, 4
    %v2944 = vsel %vm539, %v2943, %v2906
    %v2945 = vrot.slane %v2906, 4
    %v2946 = vsel %vm539, %v2930, %v2945
    %v2947 = vrot.slane %v415, 4
    %v2948 = vsel %vm539, %v2947, %v411
    %v2949 = vrot.slane %v411, 4
    %v2950 = vsel %vm539, %v415, %v2949
    %v2952 = vunpack.c.l.s4 1983009808
    %v2953 = vunpack.c.0.s8 %v2952
    %v2954 = vperm.slane %v2948, %v2953
    %v2956 = vunpack.c.l.s4 1983009808
    %v2957 = vunpack.c.0.s8 %v2956
    %v2958 = vperm.slane %v2950, %v2957
    %v2959 = vrot.slane %v417, 4
    %v2960 = vsel %vm539, %v2959, %v413
    %v2961 = vrot.slane %v413, 4
    %v2962 = vsel %vm539, %v417, %v2961
    %v2964 = vunpack.c.l.s4 1983009808
    %v2965 = vunpack.c.0.s8 %v2964
    %v2966 = vperm.slane %v2960, %v2965
    %v2968 = vunpack.c.l.s4 1983009808
    %v2969 = vunpack.c.0.s8 %v2968
    %v2970 = vperm.slane %v2962, %v2969
    %v2971 = vrot.slane %v439, 4
    %v2972 = vsel %vm539, %v2971, %v435
    %v2973 = vrot.slane %v435, 4
    %v2974 = vsel %vm539, %v439, %v2973
    %v2976 = vunpack.c.l.s4 1983009808
    %v2977 = vunpack.c.0.s8 %v2976
    %v2978 = vperm.slane %v2972, %v2977
    %v2980 = vunpack.c.l.s4 1983009808
    %v2981 = vunpack.c.0.s8 %v2980
    %v2982 = vperm.slane %v2974, %v2981
    %v2983 = vrot.slane %v441, 4
    %v2984 = vsel %vm539, %v2983, %v437
    %v2985 = vrot.slane %v437, 4
    %v2986 = vsel %vm539, %v441, %v2985
    %v2988 = vunpack.c.l.s4 1983009808
    %v2989 = vunpack.c.0.s8 %v2988
    %v2990 = vperm.slane %v2984, %v2989
    %v2992 = vunpack.c.l.s4 1983009808
    %v2993 = vunpack.c.0.s8 %v2992
    %v2994 = vperm.slane %v2986, %v2993
    %v2995 = vrot.slane %v2966, 4
    %v2996 = vsel %vm539, %v2995, %v2954
    %v2997 = vrot.slane %v2954, 4
    %v2998 = vsel %vm539, %v2966, %v2997
    %v3000 = vunpack.c.l.s4 1934713408
    %v3001 = vunpack.c.0.s8 %v3000
    %v3002 = vperm.slane %v2996, %v3001
    %v3004 = vunpack.c.l.s4 1934713408
    %v3005 = vunpack.c.0.s8 %v3004
    %v3006 = vperm.slane %v2998, %v3005
    %v3007 = vrot.slane %v2970, 4
    %v3008 = vsel %vm539, %v3007, %v2958
    %v3009 = vrot.slane %v2958, 4
    %v3010 = vsel %vm539, %v2970, %v3009
    %v3012 = vunpack.c.l.s4 1934713408
    %v3013 = vunpack.c.0.s8 %v3012
    %v3014 = vperm.slane %v3008, %v3013
    %v3016 = vunpack.c.l.s4 1934713408
    %v3017 = vunpack.c.0.s8 %v3016
    %v3018 = vperm.slane %v3010, %v3017
    %v3019 = vrot.slane %v2990, 4
    %v3020 = vsel %vm539, %v3019, %v2978
    %v3021 = vrot.slane %v2978, 4
    %v3022 = vsel %vm539, %v2990, %v3021
    %v3024 = vunpack.c.l.s4 1934713408
    %v3025 = vunpack.c.0.s8 %v3024
    %v3026 = vperm.slane %v3020, %v3025
    %v3028 = vunpack.c.l.s4 1934713408
    %v3029 = vunpack.c.0.s8 %v3028
    %v3030 = vperm.slane %v3022, %v3029
    %v3031 = vrot.slane %v2994, 4
    %v3032 = vsel %vm539, %v3031, %v2982
    %v3033 = vrot.slane %v2982, 4
    %v3034 = vsel %vm539, %v2994, %v3033
    %v3036 = vunpack.c.l.s4 1934713408
    %v3037 = vunpack.c.0.s8 %v3036
    %v3038 = vperm.slane %v3032, %v3037
    %v3040 = vunpack.c.l.s4 1934713408
    %v3041 = vunpack.c.0.s8 %v3040
    %v3042 = vperm.slane %v3034, %v3041
    %v3043 = vrot.slane %v3026, 4
    %v3044 = vsel %vm539, %v3043, %v3002
    %v3045 = vrot.slane %v3002, 4
    %v3046 = vsel %vm539, %v3026, %v3045
    %v3047 = vrot.slane %v3030, 4
    %v3048 = vsel %vm539, %v3047, %v3006
    %v3049 = vrot.slane %v3006, 4
    %v3050 = vsel %vm539, %v3030, %v3049
    %v3051 = vrot.slane %v3038, 4
    %v3052 = vsel %vm539, %v3051, %v3014
    %v3053 = vrot.slane %v3014, 4
    %v3054 = vsel %vm539, %v3038, %v3053
    %v3055 = vrot.slane %v3042, 4
    %v3056 = vsel %vm539, %v3055, %v3018
    %v3057 = vrot.slane %v3018, 4
    %v3058 = vsel %vm539, %v3042, %v3057
    %v3059 = vrot.slane %v88, 4
    %v3060 = vsel %vm539, %v3059, %v86
    %v3061 = vrot.slane %v86, 4
    %v3062 = vsel %vm539, %v88, %v3061
    %v3064 = vunpack.c.l.s4 1983009808
    %v3065 = vunpack.c.0.s8 %v3064
    %v3066 = vperm.slane %v3060, %v3065
    %v3068 = vunpack.c.l.s4 1983009808
    %v3069 = vunpack.c.0.s8 %v3068
    %v3070 = vperm.slane %v3062, %v3069
    %v3071 = vrot.slane %v89, 4
    %v3072 = vsel %vm539, %v3071, %v87
    %v3073 = vrot.slane %v87, 4
    %v3074 = vsel %vm539, %v89, %v3073
    %v3076 = vunpack.c.l.s4 1983009808
    %v3077 = vunpack.c.0.s8 %v3076
    %v3078 = vperm.slane %v3072, %v3077
    %v3080 = vunpack.c.l.s4 1983009808
    %v3081 = vunpack.c.0.s8 %v3080
    %v3082 = vperm.slane %v3074, %v3081
    %v3083 = vrot.slane %v96, 4
    %v3084 = vsel %vm539, %v3083, %v94
    %v3085 = vrot.slane %v94, 4
    %v3086 = vsel %vm539, %v96, %v3085
    %v3088 = vunpack.c.l.s4 1983009808
    %v3089 = vunpack.c.0.s8 %v3088
    %v3090 = vperm.slane %v3084, %v3089
    %v3092 = vunpack.c.l.s4 1983009808
    %v3093 = vunpack.c.0.s8 %v3092
    %v3094 = vperm.slane %v3086, %v3093
    %v3095 = vrot.slane %v97, 4
    %v3096 = vsel %vm539, %v3095, %v95
    %v3097 = vrot.slane %v95, 4
    %v3098 = vsel %vm539, %v97, %v3097
    %v3100 = vunpack.c.l.s4 1983009808
    %v3101 = vunpack.c.0.s8 %v3100
    %v3102 = vperm.slane %v3096, %v3101
    %v3104 = vunpack.c.l.s4 1983009808
    %v3105 = vunpack.c.0.s8 %v3104
    %v3106 = vperm.slane %v3098, %v3105
    %v3107 = vrot.slane %v3078, 4
    %v3108 = vsel %vm539, %v3107, %v3066
    %v3109 = vrot.slane %v3066, 4
    %v3110 = vsel %vm539, %v3078, %v3109
    %v3112 = vunpack.c.l.s4 1934713408
    %v3113 = vunpack.c.0.s8 %v3112
    %v3114 = vperm.slane %v3108, %v3113
    %v3116 = vunpack.c.l.s4 1934713408
    %v3117 = vunpack.c.0.s8 %v3116
    %v3118 = vperm.slane %v3110, %v3117
    %v3119 = vrot.slane %v3082, 4
    %v3120 = vsel %vm539, %v3119, %v3070
    %v3121 = vrot.slane %v3070, 4
    %v3122 = vsel %vm539, %v3082, %v3121
    %v3124 = vunpack.c.l.s4 1934713408
    %v3125 = vunpack.c.0.s8 %v3124
    %v3126 = vperm.slane %v3120, %v3125
    %v3128 = vunpack.c.l.s4 1934713408
    %v3129 = vunpack.c.0.s8 %v3128
    %v3130 = vperm.slane %v3122, %v3129
    %v3131 = vrot.slane %v3102, 4
    %v3132 = vsel %vm539, %v3131, %v3090
    %v3133 = vrot.slane %v3090, 4
    %v3134 = vsel %vm539, %v3102, %v3133
    %v3136 = vunpack.c.l.s4 1934713408
    %v3137 = vunpack.c.0.s8 %v3136
    %v3138 = vperm.slane %v3132, %v3137
    %v3140 = vunpack.c.l.s4 1934713408
    %v3141 = vunpack.c.0.s8 %v3140
    %v3142 = vperm.slane %v3134, %v3141
    %v3143 = vrot.slane %v3106, 4
    %v3144 = vsel %vm539, %v3143, %v3094
    %v3145 = vrot.slane %v3094, 4
    %v3146 = vsel %vm539, %v3106, %v3145
    %v3148 = vunpack.c.l.s4 1934713408
    %v3149 = vunpack.c.0.s8 %v3148
    %v3150 = vperm.slane %v3144, %v3149
    %v3152 = vunpack.c.l.s4 1934713408
    %v3153 = vunpack.c.0.s8 %v3152
    %v3154 = vperm.slane %v3146, %v3153
    %v3155 = vrot.slane %v3138, 4
    %v3156 = vsel %vm539, %v3155, %v3114
    %v3157 = vrot.slane %v3114, 4
    %v3158 = vsel %vm539, %v3138, %v3157
    %v3159 = vrot.slane %v3142, 4
    %v3160 = vsel %vm539, %v3159, %v3118
    %v3161 = vrot.slane %v3118, 4
    %v3162 = vsel %vm539, %v3142, %v3161
    %v3163 = vrot.slane %v3150, 4
    %v3164 = vsel %vm539, %v3163, %v3126
    %v3165 = vrot.slane %v3126, 4
    %v3166 = vsel %vm539, %v3150, %v3165
    %v3167 = vrot.slane %v3154, 4
    %v3168 = vsel %vm539, %v3167, %v3130
    %v3169 = vrot.slane %v3130, 4
    %v3170 = vsel %vm539, %v3154, %v3169
    %v3171 = vrot.slane %v471, 4
    %v3172 = vsel %vm539, %v3171, %v467
    %v3173 = vrot.slane %v467, 4
    %v3174 = vsel %vm539, %v471, %v3173
    %v3176 = vunpack.c.l.s4 1983009808
    %v3177 = vunpack.c.0.s8 %v3176
    %v3178 = vperm.slane %v3172, %v3177
    %v3180 = vunpack.c.l.s4 1983009808
    %v3181 = vunpack.c.0.s8 %v3180
    %v3182 = vperm.slane %v3174, %v3181
    %v3183 = vrot.slane %v473, 4
    %v3184 = vsel %vm539, %v3183, %v469
    %v3185 = vrot.slane %v469, 4
    %v3186 = vsel %vm539, %v473, %v3185
    %v3188 = vunpack.c.l.s4 1983009808
    %v3189 = vunpack.c.0.s8 %v3188
    %v3190 = vperm.slane %v3184, %v3189
    %v3192 = vunpack.c.l.s4 1983009808
    %v3193 = vunpack.c.0.s8 %v3192
    %v3194 = vperm.slane %v3186, %v3193
    %v3195 = vrot.slane %v503, 4
    %v3196 = vsel %vm539, %v3195, %v499
    %v3197 = vrot.slane %v499, 4
    %v3198 = vsel %vm539, %v503, %v3197
    %v3200 = vunpack.c.l.s4 1983009808
    %v3201 = vunpack.c.0.s8 %v3200
    %v3202 = vperm.slane %v3196, %v3201
    %v3204 = vunpack.c.l.s4 1983009808
    %v3205 = vunpack.c.0.s8 %v3204
    %v3206 = vperm.slane %v3198, %v3205
    %v3207 = vrot.slane %v505, 4
    %v3208 = vsel %vm539, %v3207, %v501
    %v3209 = vrot.slane %v501, 4
    %v3210 = vsel %vm539, %v505, %v3209
    %v3212 = vunpack.c.l.s4 1983009808
    %v3213 = vunpack.c.0.s8 %v3212
    %v3214 = vperm.slane %v3208, %v3213
    %v3216 = vunpack.c.l.s4 1983009808
    %v3217 = vunpack.c.0.s8 %v3216
    %v3218 = vperm.slane %v3210, %v3217
    %v3219 = vrot.slane %v3190, 4
    %v3220 = vsel %vm539, %v3219, %v3178
    %v3221 = vrot.slane %v3178, 4
    %v3222 = vsel %vm539, %v3190, %v3221
    %v3224 = vunpack.c.l.s4 1934713408
    %v3225 = vunpack.c.0.s8 %v3224
    %v3226 = vperm.slane %v3220, %v3225
    %v3228 = vunpack.c.l.s4 1934713408
    %v3229 = vunpack.c.0.s8 %v3228
    %v3230 = vperm.slane %v3222, %v3229
    %v3231 = vrot.slane %v3194, 4
    %v3232 = vsel %vm539, %v3231, %v3182
    %v3233 = vrot.slane %v3182, 4
    %v3234 = vsel %vm539, %v3194, %v3233
    %v3236 = vunpack.c.l.s4 1934713408
    %v3237 = vunpack.c.0.s8 %v3236
    %v3238 = vperm.slane %v3232, %v3237
    %v3240 = vunpack.c.l.s4 1934713408
    %v3241 = vunpack.c.0.s8 %v3240
    %v3242 = vperm.slane %v3234, %v3241
    %v3243 = vrot.slane %v3214, 4
    %v3244 = vsel %vm539, %v3243, %v3202
    %v3245 = vrot.slane %v3202, 4
    %v3246 = vsel %vm539, %v3214, %v3245
    %v3248 = vunpack.c.l.s4 1934713408
    %v3249 = vunpack.c.0.s8 %v3248
    %v3250 = vperm.slane %v3244, %v3249
    %v3252 = vunpack.c.l.s4 1934713408
    %v3253 = vunpack.c.0.s8 %v3252
    %v3254 = vperm.slane %v3246, %v3253
    %v3255 = vrot.slane %v3218, 4
    %v3256 = vsel %vm539, %v3255, %v3206
    %v3257 = vrot.slane %v3206, 4
    %v3258 = vsel %vm539, %v3218, %v3257
    %v3260 = vunpack.c.l.s4 1934713408
    %v3261 = vunpack.c.0.s8 %v3260
    %v3262 = vperm.slane %v3256, %v3261
    %v3264 = vunpack.c.l.s4 1934713408
    %v3265 = vunpack.c.0.s8 %v3264
    %v3266 = vperm.slane %v3258, %v3265
    %v3267 = vrot.slane %v3250, 4
    %v3268 = vsel %vm539, %v3267, %v3226
    %v3269 = vrot.slane %v3226, 4
    %v3270 = vsel %vm539, %v3250, %v3269
    %v3271 = vrot.slane %v3254, 4
    %v3272 = vsel %vm539, %v3271, %v3230
    %v3273 = vrot.slane %v3230, 4
    %v3274 = vsel %vm539, %v3254, %v3273
    %v3275 = vrot.slane %v3262, 4
    %v3276 = vsel %vm539, %v3275, %v3238
    %v3277 = vrot.slane %v3238, 4
    %v3278 = vsel %vm539, %v3262, %v3277
    %v3279 = vrot.slane %v3266, 4
    %v3280 = vsel %vm539, %v3279, %v3242
    %v3281 = vrot.slane %v3242, 4
    %v3282 = vsel %vm539, %v3266, %v3281
    %v3283 = vrot.slane %v527, 4
    %v3284 = vsel %vm539, %v3283, %v523
    %v3285 = vrot.slane %v523, 4
    %v3286 = vsel %vm539, %v527, %v3285
    %v3288 = vunpack.c.l.s4 1983009808
    %v3289 = vunpack.c.0.s8 %v3288
    %v3290 = vperm.slane %v3284, %v3289
    %v3292 = vunpack.c.l.s4 1983009808
    %v3293 = vunpack.c.0.s8 %v3292
    %v3294 = vperm.slane %v3286, %v3293
    %v3295 = vrot.slane %v529, 4
    %v3296 = vsel %vm539, %v3295, %v525
    %v3297 = vrot.slane %v525, 4
    %v3298 = vsel %vm539, %v529, %v3297
    %v3300 = vunpack.c.l.s4 1983009808
    %v3301 = vunpack.c.0.s8 %v3300
    %v3302 = vperm.slane %v3296, %v3301
    %v3304 = vunpack.c.l.s4 1983009808
    %v3305 = vunpack.c.0.s8 %v3304
    %v3306 = vperm.slane %v3298, %v3305
    %v3307 = vrot.slane %v3302, 4
    %v3308 = vsel %vm539, %v3307, %v3290
    %v3309 = vrot.slane %v3290, 4
    %v3310 = vsel %vm539, %v3302, %v3309
    %v3312 = vunpack.c.l.s4 1934713408
    %v3313 = vunpack.c.0.s8 %v3312
    %v3314 = vperm.slane %v3308, %v3313
    %v3316 = vunpack.c.l.s4 1934713408
    %v3317 = vunpack.c.0.s8 %v3316
    %v3318 = vperm.slane %v3310, %v3317
    %v3319 = vrot.slane %v3306, 4
    %v3320 = vsel %vm539, %v3319, %v3294
    %v3321 = vrot.slane %v3294, 4
    %v3322 = vsel %vm539, %v3306, %v3321
    %v3324 = vunpack.c.l.s4 1934713408
    %v3325 = vunpack.c.0.s8 %v3324
    %v3326 = vperm.slane %v3320, %v3325
    %v3328 = vunpack.c.l.s4 1934713408
    %v3329 = vunpack.c.0.s8 %v3328
    %v3330 = vperm.slane %v3322, %v3329
    %v3331 = vrot.slane %v3314, 4
    %v3332 = vsel %vm539, 0.0, %v3331
    %v3333 = vrot.slane %v3318, 4
    %v3334 = vsel %vm539, 0.0, %v3333
    %v3335 = vrot.slane %v3326, 4
    %v3336 = vsel %vm539, 0.0, %v3335
    %v3337 = vrot.slane %v3330, 4
    %v3338 = vsel %vm539, 0.0, %v3337
    %3365 = vrot.lane.b32.xlu0 %v638, 8
    %v3366 = vpop.permute.xlu0 %3365
    %3367 = vrot.lane.b32.xlu0 %v750, 8
    %v3368 = vpop.permute.xlu0 %3367
    %3369 = vrot.lane.b32.xlu0 %v862, 8
    %v3370 = vpop.permute.xlu0 %3369
    %3371 = vrot.lane.b32.xlu0 %v974, 8
    %v3372 = vpop.permute.xlu0 %3371
    %3373 = vrot.lane.b32.xlu0 %v1086, 8
    %v3374 = vpop.permute.xlu0 %3373
    %3375 = vrot.lane.b32.xlu0 %v1198, 8
    %v3376 = vpop.permute.xlu0 %3375
    %3377 = vrot.lane.b32.xlu0 %v1310, 8
    %v3378 = vpop.permute.xlu0 %3377
    %3379 = vrot.lane.b32.xlu0 %v1422, 8
    %v3380 = vpop.permute.xlu0 %3379
    %3381 = vrot.lane.b32.xlu0 %v1534, 8
    %v3382 = vpop.permute.xlu0 %3381
    %3383 = vrot.lane.b32.xlu0 %v1646, 8
    %v3384 = vpop.permute.xlu0 %3383
    %3385 = vrot.lane.b32.xlu0 %v1758, 8
    %v3386 = vpop.permute.xlu0 %3385
    %3387 = vrot.lane.b32.xlu0 %v1870, 8
    %v3388 = vpop.permute.xlu0 %3387
    %3389 = vrot.lane.b32.xlu0 %v1932, 8
    %v3390 = vpop.permute.xlu0 %3389
    %3391 = vrot.lane.b32.xlu0 %v2038, 8
    %v3392 = vpop.permute.xlu0 %3391
    %3393 = vrot.lane.b32.xlu0 %v2150, 8
    %v3394 = vpop.permute.xlu0 %3393
    %3395 = vrot.lane.b32.xlu0 %v2262, 8
    %v3396 = vpop.permute.xlu0 %3395
    %3397 = vrot.lane.b32.xlu0 %v2374, 8
    %v3398 = vpop.permute.xlu0 %3397
    %3399 = vrot.lane.b32.xlu0 %v2486, 8
    %v3400 = vpop.permute.xlu0 %3399
    %3401 = vrot.lane.b32.xlu0 %v2598, 8
    %v3402 = vpop.permute.xlu0 %3401
    %3403 = vrot.lane.b32.xlu0 %v2710, 8
    %v3404 = vpop.permute.xlu0 %3403
    %3405 = vrot.lane.b32.xlu0 %v2822, 8
    %v3406 = vpop.permute.xlu0 %3405
    %3407 = vrot.lane.b32.xlu0 %v2934, 8
    %v3408 = vpop.permute.xlu0 %3407
    %3409 = vrot.lane.b32.xlu0 %v3046, 8
    %v3410 = vpop.permute.xlu0 %3409
    %3411 = vrot.lane.b32.xlu0 %v3158, 8
    %v3412 = vpop.permute.xlu0 %3411
    %3413 = vrot.lane.b32.xlu0 %v3270, 8
    %v3414 = vpop.permute.xlu0 %3413
    %3415 = vrot.lane.b32.xlu0 %v3332, 8
    %v3416 = vpop.permute.xlu0 %3415
    %3469 = vrot.lane.b32.xlu0 %v640, 16
    %v3470 = vpop.permute.xlu0 %3469
    %3471 = vrot.lane.b32.xlu0 %v752, 16
    %v3472 = vpop.permute.xlu0 %3471
    %3473 = vrot.lane.b32.xlu0 %v864, 16
    %v3474 = vpop.permute.xlu0 %3473
    %3475 = vrot.lane.b32.xlu0 %v976, 16
    %v3476 = vpop.permute.xlu0 %3475
    %3477 = vrot.lane.b32.xlu0 %v1088, 16
    %v3478 = vpop.permute.xlu0 %3477
    %3479 = vrot.lane.b32.xlu0 %v1200, 16
    %v3480 = vpop.permute.xlu0 %3479
    %3481 = vrot.lane.b32.xlu0 %v1312, 16
    %v3482 = vpop.permute.xlu0 %3481
    %3483 = vrot.lane.b32.xlu0 %v1424, 16
    %v3484 = vpop.permute.xlu0 %3483
    %3485 = vrot.lane.b32.xlu0 %v1536, 16
    %v3486 = vpop.permute.xlu0 %3485
    %3487 = vrot.lane.b32.xlu0 %v1648, 16
    %v3488 = vpop.permute.xlu0 %3487
    %3489 = vrot.lane.b32.xlu0 %v1760, 16
    %v3490 = vpop.permute.xlu0 %3489
    %3491 = vrot.lane.b32.xlu0 %v1872, 16
    %v3492 = vpop.permute.xlu0 %3491
    %3493 = vrot.lane.b32.xlu0 %v1918, 16
    %v3494 = vpop.permute.xlu0 %3493
    %3495 = vrot.lane.b32.xlu0 %v2040, 16
    %v3496 = vpop.permute.xlu0 %3495
    %3497 = vrot.lane.b32.xlu0 %v2152, 16
    %v3498 = vpop.permute.xlu0 %3497
    %3499 = vrot.lane.b32.xlu0 %v2264, 16
    %v3500 = vpop.permute.xlu0 %3499
    %3501 = vrot.lane.b32.xlu0 %v2376, 16
    %v3502 = vpop.permute.xlu0 %3501
    %3503 = vrot.lane.b32.xlu0 %v2488, 16
    %v3504 = vpop.permute.xlu0 %3503
    %3505 = vrot.lane.b32.xlu0 %v2600, 16
    %v3506 = vpop.permute.xlu0 %3505
    %3507 = vrot.lane.b32.xlu0 %v2712, 16
    %v3508 = vpop.permute.xlu0 %3507
    %3509 = vrot.lane.b32.xlu0 %v2824, 16
    %v3510 = vpop.permute.xlu0 %3509
    %3511 = vrot.lane.b32.xlu0 %v2936, 16
    %v3512 = vpop.permute.xlu0 %3511
    %3513 = vrot.lane.b32.xlu0 %v3048, 16
    %v3514 = vpop.permute.xlu0 %3513
    %3515 = vrot.lane.b32.xlu0 %v3160, 16
    %v3516 = vpop.permute.xlu0 %3515
    %3517 = vrot.lane.b32.xlu0 %v3272, 16
    %v3518 = vpop.permute.xlu0 %3517
    %3519 = vrot.lane.b32.xlu0 %v3318, 16
    %v3520 = vpop.permute.xlu0 %3519
    %3573 = vrot.lane.b32.xlu0 %v642, 24
    %v3574 = vpop.permute.xlu0 %3573
    %3575 = vrot.lane.b32.xlu0 %v754, 24
    %v3576 = vpop.permute.xlu0 %3575
    %3577 = vrot.lane.b32.xlu0 %v866, 24
    %v3578 = vpop.permute.xlu0 %3577
    %3579 = vrot.lane.b32.xlu0 %v978, 24
    %v3580 = vpop.permute.xlu0 %3579
    %3581 = vrot.lane.b32.xlu0 %v1090, 24
    %v3582 = vpop.permute.xlu0 %3581
    %3583 = vrot.lane.b32.xlu0 %v1202, 24
    %v3584 = vpop.permute.xlu0 %3583
    %3585 = vrot.lane.b32.xlu0 %v1314, 24
    %v3586 = vpop.permute.xlu0 %3585
    %3587 = vrot.lane.b32.xlu0 %v1426, 24
    %v3588 = vpop.permute.xlu0 %3587
    %3589 = vrot.lane.b32.xlu0 %v1538, 24
    %v3590 = vpop.permute.xlu0 %3589
    %3591 = vrot.lane.b32.xlu0 %v1650, 24
    %v3592 = vpop.permute.xlu0 %3591
    %3593 = vrot.lane.b32.xlu0 %v1762, 24
    %v3594 = vpop.permute.xlu0 %3593
    %3595 = vrot.lane.b32.xlu0 %v1874, 24
    %v3596 = vpop.permute.xlu0 %3595
    %3597 = vrot.lane.b32.xlu0 %v1934, 24
    %v3598 = vpop.permute.xlu0 %3597
    %3599 = vrot.lane.b32.xlu0 %v2042, 24
    %v3600 = vpop.permute.xlu0 %3599
    %3601 = vrot.lane.b32.xlu0 %v2154, 24
    %v3602 = vpop.permute.xlu0 %3601
    %3603 = vrot.lane.b32.xlu0 %v2266, 24
    %v3604 = vpop.permute.xlu0 %3603
    %3605 = vrot.lane.b32.xlu0 %v2378, 24
    %v3606 = vpop.permute.xlu0 %3605
    %3607 = vrot.lane.b32.xlu0 %v2490, 24
    %v3608 = vpop.permute.xlu0 %3607
    %3609 = vrot.lane.b32.xlu0 %v2602, 24
    %v3610 = vpop.permute.xlu0 %3609
    %3611 = vrot.lane.b32.xlu0 %v2714, 24
    %v3612 = vpop.permute.xlu0 %3611
    %3613 = vrot.lane.b32.xlu0 %v2826, 24
    %v3614 = vpop.permute.xlu0 %3613
    %3615 = vrot.lane.b32.xlu0 %v2938, 24
    %v3616 = vpop.permute.xlu0 %3615
    %3617 = vrot.lane.b32.xlu0 %v3050, 24
    %v3618 = vpop.permute.xlu0 %3617
    %3619 = vrot.lane.b32.xlu0 %v3162, 24
    %v3620 = vpop.permute.xlu0 %3619
    %3621 = vrot.lane.b32.xlu0 %v3274, 24
    %v3622 = vpop.permute.xlu0 %3621
    %3623 = vrot.lane.b32.xlu0 %v3334, 24
    %v3624 = vpop.permute.xlu0 %3623
    %3677 = vrot.lane.b32.xlu0 %v644, 32
    %v3678 = vpop.permute.xlu0 %3677
    %3679 = vrot.lane.b32.xlu0 %v756, 32
    %v3680 = vpop.permute.xlu0 %3679
    %3681 = vrot.lane.b32.xlu0 %v868, 32
    %v3682 = vpop.permute.xlu0 %3681
    %3683 = vrot.lane.b32.xlu0 %v980, 32
    %v3684 = vpop.permute.xlu0 %3683
    %3685 = vrot.lane.b32.xlu0 %v1092, 32
    %v3686 = vpop.permute.xlu0 %3685
    %3687 = vrot.lane.b32.xlu0 %v1204, 32
    %v3688 = vpop.permute.xlu0 %3687
    %3689 = vrot.lane.b32.xlu0 %v1316, 32
    %v3690 = vpop.permute.xlu0 %3689
    %3691 = vrot.lane.b32.xlu0 %v1428, 32
    %v3692 = vpop.permute.xlu0 %3691
    %3693 = vrot.lane.b32.xlu0 %v1540, 32
    %v3694 = vpop.permute.xlu0 %3693
    %3695 = vrot.lane.b32.xlu0 %v1652, 32
    %v3696 = vpop.permute.xlu0 %3695
    %3697 = vrot.lane.b32.xlu0 %v1764, 32
    %v3698 = vpop.permute.xlu0 %3697
    %3699 = vrot.lane.b32.xlu0 %v1876, 32
    %v3700 = vpop.permute.xlu0 %3699
    %3701 = vrot.lane.b32.xlu0 %v1926, 32
    %v3702 = vpop.permute.xlu0 %3701
    %3703 = vrot.lane.b32.xlu0 %v2044, 32
    %v3704 = vpop.permute.xlu0 %3703
    %3705 = vrot.lane.b32.xlu0 %v2156, 32
    %v3706 = vpop.permute.xlu0 %3705
    %3707 = vrot.lane.b32.xlu0 %v2268, 32
    %v3708 = vpop.permute.xlu0 %3707
    %3709 = vrot.lane.b32.xlu0 %v2380, 32
    %v3710 = vpop.permute.xlu0 %3709
    %3711 = vrot.lane.b32.xlu0 %v2492, 32
    %v3712 = vpop.permute.xlu0 %3711
    %3713 = vrot.lane.b32.xlu0 %v2604, 32
    %v3714 = vpop.permute.xlu0 %3713
    %3715 = vrot.lane.b32.xlu0 %v2716, 32
    %v3716 = vpop.permute.xlu0 %3715
    %3717 = vrot.lane.b32.xlu0 %v2828, 32
    %v3718 = vpop.permute.xlu0 %3717
    %3719 = vrot.lane.b32.xlu0 %v2940, 32
    %v3720 = vpop.permute.xlu0 %3719
    %3721 = vrot.lane.b32.xlu0 %v3052, 32
    %v3722 = vpop.permute.xlu0 %3721
    %3723 = vrot.lane.b32.xlu0 %v3164, 32
    %v3724 = vpop.permute.xlu0 %3723
    %3725 = vrot.lane.b32.xlu0 %v3276, 32
    %v3726 = vpop.permute.xlu0 %3725
    %3727 = vrot.lane.b32.xlu0 %v3326, 32
    %v3728 = vpop.permute.xlu0 %3727
    %3781 = vrot.lane.b32.xlu0 %v646, 40
    %v3782 = vpop.permute.xlu0 %3781
    %3783 = vrot.lane.b32.xlu0 %v758, 40
    %v3784 = vpop.permute.xlu0 %3783
    %3785 = vrot.lane.b32.xlu0 %v870, 40
    %v3786 = vpop.permute.xlu0 %3785
    %3787 = vrot.lane.b32.xlu0 %v982, 40
    %v3788 = vpop.permute.xlu0 %3787
    %3789 = vrot.lane.b32.xlu0 %v1094, 40
    %v3790 = vpop.permute.xlu0 %3789
    %3791 = vrot.lane.b32.xlu0 %v1206, 40
    %v3792 = vpop.permute.xlu0 %3791
    %3793 = vrot.lane.b32.xlu0 %v1318, 40
    %v3794 = vpop.permute.xlu0 %3793
    %3795 = vrot.lane.b32.xlu0 %v1430, 40
    %v3796 = vpop.permute.xlu0 %3795
    %3797 = vrot.lane.b32.xlu0 %v1542, 40
    %v3798 = vpop.permute.xlu0 %3797
    %3799 = vrot.lane.b32.xlu0 %v1654, 40
    %v3800 = vpop.permute.xlu0 %3799
    %3801 = vrot.lane.b32.xlu0 %v1766, 40
    %v3802 = vpop.permute.xlu0 %3801
    %3803 = vrot.lane.b32.xlu0 %v1878, 40
    %v3804 = vpop.permute.xlu0 %3803
    %3805 = vrot.lane.b32.xlu0 %v1936, 40
    %v3806 = vpop.permute.xlu0 %3805
    %3807 = vrot.lane.b32.xlu0 %v2046, 40
    %v3808 = vpop.permute.xlu0 %3807
    %3809 = vrot.lane.b32.xlu0 %v2158, 40
    %v3810 = vpop.permute.xlu0 %3809
    %3811 = vrot.lane.b32.xlu0 %v2270, 40
    %v3812 = vpop.permute.xlu0 %3811
    %3813 = vrot.lane.b32.xlu0 %v2382, 40
    %v3814 = vpop.permute.xlu0 %3813
    %3815 = vrot.lane.b32.xlu0 %v2494, 40
    %v3816 = vpop.permute.xlu0 %3815
    %3817 = vrot.lane.b32.xlu0 %v2606, 40
    %v3818 = vpop.permute.xlu0 %3817
    %3819 = vrot.lane.b32.xlu0 %v2718, 40
    %v3820 = vpop.permute.xlu0 %3819
    %3821 = vrot.lane.b32.xlu0 %v2830, 40
    %v3822 = vpop.permute.xlu0 %3821
    %3823 = vrot.lane.b32.xlu0 %v2942, 40
    %v3824 = vpop.permute.xlu0 %3823
    %3825 = vrot.lane.b32.xlu0 %v3054, 40
    %v3826 = vpop.permute.xlu0 %3825
    %3827 = vrot.lane.b32.xlu0 %v3166, 40
    %v3828 = vpop.permute.xlu0 %3827
    %3829 = vrot.lane.b32.xlu0 %v3278, 40
    %v3830 = vpop.permute.xlu0 %3829
    %3831 = vrot.lane.b32.xlu0 %v3336, 40
    %v3832 = vpop.permute.xlu0 %3831
    %3885 = vrot.lane.b32.xlu0 %v648, 48
    %v3886 = vpop.permute.xlu0 %3885
    %3887 = vrot.lane.b32.xlu0 %v760, 48
    %v3888 = vpop.permute.xlu0 %3887
    %3889 = vrot.lane.b32.xlu0 %v872, 48
    %v3890 = vpop.permute.xlu0 %3889
    %3891 = vrot.lane.b32.xlu0 %v984, 48
    %v3892 = vpop.permute.xlu0 %3891
    %3893 = vrot.lane.b32.xlu0 %v1096, 48
    %v3894 = vpop.permute.xlu0 %3893
    %3895 = vrot.lane.b32.xlu0 %v1208, 48
    %v3896 = vpop.permute.xlu0 %3895
    %3897 = vrot.lane.b32.xlu0 %v1320, 48
    %v3898 = vpop.permute.xlu0 %3897
    %3899 = vrot.lane.b32.xlu0 %v1432, 48
    %v3900 = vpop.permute.xlu0 %3899
    %3901 = vrot.lane.b32.xlu0 %v1544, 48
    %v3902 = vpop.permute.xlu0 %3901
    %3903 = vrot.lane.b32.xlu0 %v1656, 48
    %v3904 = vpop.permute.xlu0 %3903
    %3905 = vrot.lane.b32.xlu0 %v1768, 48
    %v3906 = vpop.permute.xlu0 %3905
    %3907 = vrot.lane.b32.xlu0 %v1880, 48
    %v3908 = vpop.permute.xlu0 %3907
    %3909 = vrot.lane.b32.xlu0 %v1930, 48
    %v3910 = vpop.permute.xlu0 %3909
    %3911 = vrot.lane.b32.xlu0 %v2048, 48
    %v3912 = vpop.permute.xlu0 %3911
    %3913 = vrot.lane.b32.xlu0 %v2160, 48
    %v3914 = vpop.permute.xlu0 %3913
    %3915 = vrot.lane.b32.xlu0 %v2272, 48
    %v3916 = vpop.permute.xlu0 %3915
    %3917 = vrot.lane.b32.xlu0 %v2384, 48
    %v3918 = vpop.permute.xlu0 %3917
    %3919 = vrot.lane.b32.xlu0 %v2496, 48
    %v3920 = vpop.permute.xlu0 %3919
    %3921 = vrot.lane.b32.xlu0 %v2608, 48
    %v3922 = vpop.permute.xlu0 %3921
    %3923 = vrot.lane.b32.xlu0 %v2720, 48
    %v3924 = vpop.permute.xlu0 %3923
    %3925 = vrot.lane.b32.xlu0 %v2832, 48
    %v3926 = vpop.permute.xlu0 %3925
    %3927 = vrot.lane.b32.xlu0 %v2944, 48
    %v3928 = vpop.permute.xlu0 %3927
    %3929 = vrot.lane.b32.xlu0 %v3056, 48
    %v3930 = vpop.permute.xlu0 %3929
    %3931 = vrot.lane.b32.xlu0 %v3168, 48
    %v3932 = vpop.permute.xlu0 %3931
    %3933 = vrot.lane.b32.xlu0 %v3280, 48
    %v3934 = vpop.permute.xlu0 %3933
    %3935 = vrot.lane.b32.xlu0 %v3330, 48
    %v3936 = vpop.permute.xlu0 %3935
    %3989 = vrot.lane.b32.xlu0 %v650, 56
    %v3990 = vpop.permute.xlu0 %3989
    %3991 = vrot.lane.b32.xlu0 %v762, 56
    %v3992 = vpop.permute.xlu0 %3991
    %3993 = vrot.lane.b32.xlu0 %v874, 56
    %v3994 = vpop.permute.xlu0 %3993
    %3995 = vrot.lane.b32.xlu0 %v986, 56
    %v3996 = vpop.permute.xlu0 %3995
    %3997 = vrot.lane.b32.xlu0 %v1098, 56
    %v3998 = vpop.permute.xlu0 %3997
    %3999 = vrot.lane.b32.xlu0 %v1210, 56
    %v4000 = vpop.permute.xlu0 %3999
    %4001 = vrot.lane.b32.xlu0 %v1322, 56
    %v4002 = vpop.permute.xlu0 %4001
    %4003 = vrot.lane.b32.xlu0 %v1434, 56
    %v4004 = vpop.permute.xlu0 %4003
    %4005 = vrot.lane.b32.xlu0 %v1546, 56
    %v4006 = vpop.permute.xlu0 %4005
    %4007 = vrot.lane.b32.xlu0 %v1658, 56
    %v4008 = vpop.permute.xlu0 %4007
    %4009 = vrot.lane.b32.xlu0 %v1770, 56
    %v4010 = vpop.permute.xlu0 %4009
    %4011 = vrot.lane.b32.xlu0 %v1882, 56
    %v4012 = vpop.permute.xlu0 %4011
    %4013 = vrot.lane.b32.xlu0 %v1938, 56
    %v4014 = vpop.permute.xlu0 %4013
    %4015 = vrot.lane.b32.xlu0 %v2050, 56
    %v4016 = vpop.permute.xlu0 %4015
    %4017 = vrot.lane.b32.xlu0 %v2162, 56
    %v4018 = vpop.permute.xlu0 %4017
    %4019 = vrot.lane.b32.xlu0 %v2274, 56
    %v4020 = vpop.permute.xlu0 %4019
    %4021 = vrot.lane.b32.xlu0 %v2386, 56
    %v4022 = vpop.permute.xlu0 %4021
    %4023 = vrot.lane.b32.xlu0 %v2498, 56
    %v4024 = vpop.permute.xlu0 %4023
    %4025 = vrot.lane.b32.xlu0 %v2610, 56
    %v4026 = vpop.permute.xlu0 %4025
    %4027 = vrot.lane.b32.xlu0 %v2722, 56
    %v4028 = vpop.permute.xlu0 %4027
    %4029 = vrot.lane.b32.xlu0 %v2834, 56
    %v4030 = vpop.permute.xlu0 %4029
    %4031 = vrot.lane.b32.xlu0 %v2946, 56
    %v4032 = vpop.permute.xlu0 %4031
    %4033 = vrot.lane.b32.xlu0 %v3058, 56
    %v4034 = vpop.permute.xlu0 %4033
    %4035 = vrot.lane.b32.xlu0 %v3170, 56
    %v4036 = vpop.permute.xlu0 %4035
    %4037 = vrot.lane.b32.xlu0 %v3282, 56
    %v4038 = vpop.permute.xlu0 %4037
    %4039 = vrot.lane.b32.xlu0 %v3338, 56
    %v4040 = vpop.permute.xlu0 %4039
    %vm4067 = vcmask 64512
    %v4068 = vsel %vm4067, %v636, %v3366
    %v4069 = vsel %vm4067, %v748, %v3368
    %v4070 = vsel %vm4067, %v860, %v3370
    %v4071 = vsel %vm4067, %v972, %v3372
    %v4072 = vsel %vm4067, %v1084, %v3374
    %v4073 = vsel %vm4067, %v1196, %v3376
    %v4074 = vsel %vm4067, %v1308, %v3378
    %v4075 = vsel %vm4067, %v1420, %v3380
    %v4076 = vsel %vm4067, %v1532, %v3382
    %v4077 = vsel %vm4067, %v1644, %v3384
    %v4078 = vsel %vm4067, %v1756, %v3386
    %v4079 = vsel %vm4067, %v1868, %v3388
    %v4080 = vsel %vm4067, %v1914, %v3390
    %v4081 = vsel %vm4067, %v2036, %v3392
    %v4082 = vsel %vm4067, %v2148, %v3394
    %v4083 = vsel %vm4067, %v2260, %v3396
    %v4084 = vsel %vm4067, %v2372, %v3398
    %v4085 = vsel %vm4067, %v2484, %v3400
    %v4086 = vsel %vm4067, %v2596, %v3402
    %v4087 = vsel %vm4067, %v2708, %v3404
    %v4088 = vsel %vm4067, %v2820, %v3406
    %v4089 = vsel %vm4067, %v2932, %v3408
    %v4090 = vsel %vm4067, %v3044, %v3410
    %v4091 = vsel %vm4067, %v3156, %v3412
    %v4092 = vsel %vm4067, %v3268, %v3414
    %v4093 = vsel %vm4067, %v3314, %v3416
    %vm4094 = vcmask 130048
    %v4095 = vsel %vm4094, %v4068, %v3470
    %v4096 = vsel %vm4094, %v4069, %v3472
    %v4097 = vsel %vm4094, %v4070, %v3474
    %v4098 = vsel %vm4094, %v4071, %v3476
    %v4099 = vsel %vm4094, %v4072, %v3478
    %v4100 = vsel %vm4094, %v4073, %v3480
    %v4101 = vsel %vm4094, %v4074, %v3482
    %v4102 = vsel %vm4094, %v4075, %v3484
    %v4103 = vsel %vm4094, %v4076, %v3486
    %v4104 = vsel %vm4094, %v4077, %v3488
    %v4105 = vsel %vm4094, %v4078, %v3490
    %v4106 = vsel %vm4094, %v4079, %v3492
    %v4107 = vsel %vm4094, %v4080, %v3494
    %v4108 = vsel %vm4094, %v4081, %v3496
    %v4109 = vsel %vm4094, %v4082, %v3498
    %v4110 = vsel %vm4094, %v4083, %v3500
    %v4111 = vsel %vm4094, %v4084, %v3502
    %v4112 = vsel %vm4094, %v4085, %v3504
    %v4113 = vsel %vm4094, %v4086, %v3506
    %v4114 = vsel %vm4094, %v4087, %v3508
    %v4115 = vsel %vm4094, %v4088, %v3510
    %v4116 = vsel %vm4094, %v4089, %v3512
    %v4117 = vsel %vm4094, %v4090, %v3514
    %v4118 = vsel %vm4094, %v4091, %v3516
    %v4119 = vsel %vm4094, %v4092, %v3518
    %v4120 = vsel %vm4094, %v4093, %v3520
    %vm4121 = vcmask 195584
    %v4122 = vsel %vm4121, %v4095, %v3574
    %v4123 = vsel %vm4121, %v4096, %v3576
    %v4124 = vsel %vm4121, %v4097, %v3578
    %v4125 = vsel %vm4121, %v4098, %v3580
    %v4126 = vsel %vm4121, %v4099, %v3582
    %v4127 = vsel %vm4121, %v4100, %v3584
    %v4128 = vsel %vm4121, %v4101, %v3586
    %v4129 = vsel %vm4121, %v4102, %v3588
    %v4130 = vsel %vm4121, %v4103, %v3590
    %v4131 = vsel %vm4121, %v4104, %v3592
    %v4132 = vsel %vm4121, %v4105, %v3594
    %v4133 = vsel %vm4121, %v4106, %v3596
    %v4134 = vsel %vm4121, %v4107, %v3598
    %v4135 = vsel %vm4121, %v4108, %v3600
    %v4136 = vsel %vm4121, %v4109, %v3602
    %v4137 = vsel %vm4121, %v4110, %v3604
    %v4138 = vsel %vm4121, %v4111, %v3606
    %v4139 = vsel %vm4121, %v4112, %v3608
    %v4140 = vsel %vm4121, %v4113, %v3610
    %v4141 = vsel %vm4121, %v4114, %v3612
    %v4142 = vsel %vm4121, %v4115, %v3614
    %v4143 = vsel %vm4121, %v4116, %v3616
    %v4144 = vsel %vm4121, %v4117, %v3618
    %v4145 = vsel %vm4121, %v4118, %v3620
    %v4146 = vsel %vm4121, %v4119, %v3622
    %v4147 = vsel %vm4121, %v4120, %v3624
    %vm4148 = vcmask 261120
    %v4149 = vsel %vm4148, %v4122, %v3678
    %v4150 = vsel %vm4148, %v4123, %v3680
    %v4151 = vsel %vm4148, %v4124, %v3682
    %v4152 = vsel %vm4148, %v4125, %v3684
    %v4153 = vsel %vm4148, %v4126, %v3686
    %v4154 = vsel %vm4148, %v4127, %v3688
    %v4155 = vsel %vm4148, %v4128, %v3690
    %v4156 = vsel %vm4148, %v4129, %v3692
    %v4157 = vsel %vm4148, %v4130, %v3694
    %v4158 = vsel %vm4148, %v4131, %v3696
    %v4159 = vsel %vm4148, %v4132, %v3698
    %v4160 = vsel %vm4148, %v4133, %v3700
    %v4161 = vsel %vm4148, %v4134, %v3702
    %v4162 = vsel %vm4148, %v4135, %v3704
    %v4163 = vsel %vm4148, %v4136, %v3706
    %v4164 = vsel %vm4148, %v4137, %v3708
    %v4165 = vsel %vm4148, %v4138, %v3710
    %v4166 = vsel %vm4148, %v4139, %v3712
    %v4167 = vsel %vm4148, %v4140, %v3714
    %v4168 = vsel %vm4148, %v4141, %v3716
    %v4169 = vsel %vm4148, %v4142, %v3718
    %v4170 = vsel %vm4148, %v4143, %v3720
    %v4171 = vsel %vm4148, %v4144, %v3722
    %v4172 = vsel %vm4148, %v4145, %v3724
    %v4173 = vsel %vm4148, %v4146, %v3726
    %v4174 = vsel %vm4148, %v4147, %v3728
    %vm4175 = vcmask 326656
    %v4176 = vsel %vm4175, %v4149, %v3782
    %v4177 = vsel %vm4175, %v4150, %v3784
    %v4178 = vsel %vm4175, %v4151, %v3786
    %v4179 = vsel %vm4175, %v4152, %v3788
    %v4180 = vsel %vm4175, %v4153, %v3790
    %v4181 = vsel %vm4175, %v4154, %v3792
    %v4182 = vsel %vm4175, %v4155, %v3794
    %v4183 = vsel %vm4175, %v4156, %v3796
    %v4184 = vsel %vm4175, %v4157, %v3798
    %v4185 = vsel %vm4175, %v4158, %v3800
    %v4186 = vsel %vm4175, %v4159, %v3802
    %v4187 = vsel %vm4175, %v4160, %v3804
    %v4188 = vsel %vm4175, %v4161, %v3806
    %v4189 = vsel %vm4175, %v4162, %v3808
    %v4190 = vsel %vm4175, %v4163, %v3810
    %v4191 = vsel %vm4175, %v4164, %v3812
    %v4192 = vsel %vm4175, %v4165, %v3814
    %v4193 = vsel %vm4175, %v4166, %v3816
    %v4194 = vsel %vm4175, %v4167, %v3818
    %v4195 = vsel %vm4175, %v4168, %v3820
    %v4196 = vsel %vm4175, %v4169, %v3822
    %v4197 = vsel %vm4175, %v4170, %v3824
    %v4198 = vsel %vm4175, %v4171, %v3826
    %v4199 = vsel %vm4175, %v4172, %v3828
    %v4200 = vsel %vm4175, %v4173, %v3830
    %v4201 = vsel %vm4175, %v4174, %v3832
    %vm4202 = vcmask 392192
    %v4203 = vsel %vm4202, %v4176, %v3886
    %v4204 = vsel %vm4202, %v4177, %v3888
    %v4205 = vsel %vm4202, %v4178, %v3890
    %v4206 = vsel %vm4202, %v4179, %v3892
    %v4207 = vsel %vm4202, %v4180, %v3894
    %v4208 = vsel %vm4202, %v4181, %v3896
    %v4209 = vsel %vm4202, %v4182, %v3898
    %v4210 = vsel %vm4202, %v4183, %v3900
    %v4211 = vsel %vm4202, %v4184, %v3902
    %v4212 = vsel %vm4202, %v4185, %v3904
    %v4213 = vsel %vm4202, %v4186, %v3906
    %v4214 = vsel %vm4202, %v4187, %v3908
    %v4215 = vsel %vm4202, %v4188, %v3910
    %v4216 = vsel %vm4202, %v4189, %v3912
    %v4217 = vsel %vm4202, %v4190, %v3914
    %v4218 = vsel %vm4202, %v4191, %v3916
    %v4219 = vsel %vm4202, %v4192, %v3918
    %v4220 = vsel %vm4202, %v4193, %v3920
    %v4221 = vsel %vm4202, %v4194, %v3922
    %v4222 = vsel %vm4202, %v4195, %v3924
    %v4223 = vsel %vm4202, %v4196, %v3926
    %v4224 = vsel %vm4202, %v4197, %v3928
    %v4225 = vsel %vm4202, %v4198, %v3930
    %v4226 = vsel %vm4202, %v4199, %v3932
    %v4227 = vsel %vm4202, %v4200, %v3934
    %v4228 = vsel %vm4202, %v4201, %v3936
    %vm4229 = vcmask 457728
    %v4230 = vsel %vm4229, %v4203, %v3990
    %v4231 = vsel %vm4229, %v4204, %v3992
    %v4232 = vsel %vm4229, %v4205, %v3994
    %v4233 = vsel %vm4229, %v4206, %v3996
    %v4234 = vsel %vm4229, %v4207, %v3998
    %v4235 = vsel %vm4229, %v4208, %v4000
    %v4236 = vsel %vm4229, %v4209, %v4002
    %v4237 = vsel %vm4229, %v4210, %v4004
    %v4238 = vsel %vm4229, %v4211, %v4006
    %v4239 = vsel %vm4229, %v4212, %v4008
    %v4240 = vsel %vm4229, %v4213, %v4010
    %v4241 = vsel %vm4229, %v4214, %v4012
    %v4242 = vsel %vm4229, %v4215, %v4014
    %v4243 = vsel %vm4229, %v4216, %v4016
    %v4244 = vsel %vm4229, %v4217, %v4018
    %v4245 = vsel %vm4229, %v4218, %v4020
    %v4246 = vsel %vm4229, %v4219, %v4022
    %v4247 = vsel %vm4229, %v4220, %v4024
    %v4248 = vsel %vm4229, %v4221, %v4026
    %v4249 = vsel %vm4229, %v4222, %v4028
    %v4250 = vsel %vm4229, %v4223, %v4030
    %v4251 = vsel %vm4229, %v4224, %v4032
    %v4252 = vsel %vm4229, %v4225, %v4034
    %v4253 = vsel %vm4229, %v4226, %v4036
    %v4254 = vsel %vm4229, %v4227, %v4038
    %v4255 = vsel %vm4229, %v4228, %v4040
    %v4256 = vld [vmem:[%s1] sm:$0xff]
    %v4257 = vld [vmem:[%s2] sm:$0xff]
    %4259 = vset.pattern.permute.xlu0 0
    %4260 = vperm.xlu0 %4259, %v4257
    %v4261 = vpop.permute.xlu0 %4260
    %vm4263 = vcmask 818176
    %v4265 = vsel %vm4263, %v4256, 0
    %vm4267 = vcmask 1043456
    %v4269 = vsel %vm4267, %v4242, 0
    %4271 = vmatpush.msra.mxu0 0.0
    %4272 = vmatpush.msra.mxu0 0.0
    %4273 = vmatpush.msra.mxu0 0.0
    %4274 = vmatpush.msra.mxu0 %v4269
    %4275 = vmatpush.msra.mxu0 %v4241
    %4276 = vmatpush.msra.mxu0 %v4240
    %4277 = vmatpush.msra.mxu0 %v4239
    %4278 = vmatpush.msra.mxu0 %v4238
    %4279 = vmatpush.msra.mxu0 %v4237
    %4280 = vmatpush.msra.mxu0 %v4236
    %4281 = vmatpush.msra.mxu0 %v4235
    %4282 = vmatpush.msra.mxu0 %v4234
    %4283 = vmatpush.msra.mxu0 %v4233
    %4284 = vmatpush.msra.mxu0 %v4232
    %4285 = vmatpush.msra.mxu0 %v4231
    %4286 = vmatpush.msra.mxu0 %v4230
    %4287 = vmatmul.f32.gmra.mxu0 %v4265
    %v4288 = vpop.f32.mrf.mxu0
    %v4289 = vadd.f32 %v4261, %v4288
    %4290 = vdwg.mxu0
    %v4292 = vsel %vm4267, %v4255, 0
    %4294 = vmatpush.msra.mxu0 0.0
    %4295 = vmatpush.msra.mxu0 0.0
    %4296 = vmatpush.msra.mxu0 0.0
    %4297 = vmatpush.msra.mxu0 %v4292
    %4298 = vmatpush.msra.mxu0 %v4254
    %4299 = vmatpush.msra.mxu0 %v4253
    %4300 = vmatpush.msra.mxu0 %v4252
    %4301 = vmatpush.msra.mxu0 %v4251
    %4302 = vmatpush.msra.mxu0 %v4250
    %4303 = vmatpush.msra.mxu0 %v4249
    %4304 = vmatpush.msra.mxu0 %v4248
    %4305 = vmatpush.msra.mxu0 %v4247
    %4306 = vmatpush.msra.mxu0 %v4246
    %4307 = vmatpush.msra.mxu0 %v4245
    %4308 = vmatpush.msra.mxu0 %v4244
    %4309 = vmatpush.msra.mxu0 %v4243
    %4310 = vmatmul.f32.gmra.mxu0 %v4265
    %v4311 = vpop.f32.mrf.mxu0
    %v4312 = vadd.f32 %v4261, %v4311
    %4313 = vdwg.mxu0
    %vm4314 = vcmask 523264
    %4315 = vst.msk [vmem:[#allocation2] sm:$0xff] %vm4314, %v4289
    %4316 = vst.msk [vmem:[#allocation2 + $0x8] sm:$0xff] %vm4314, %v4312
    // Predicated region
    $region14: #{tpu_custom_call.1} parent=1 // pred_check
      _
    $region15: #{tpu_custom_call.1} parent=1 // pred_check_branch
      %4318 = sbr.rel (0) target = $region17
    $region16: #{tpu_custom_call.1} parent=1 // pred_region
      %4320 = vsyncadd [#allocation3], 0
      %s4321 = sshll.u32 [#allocation2], 4
      %s4322 = int_to_ptr.vmem [resolvable:$true] %s4321
      %s4323 = sshll.u32 %s3, 4
      %s4324 = int_to_ptr.hbm [resolvable:$true] %s4323
      %4329 = dma.vmem_to_hbm [thread:$0]  %s4322, 256, %s4324, [#allocation3], 128, 128, 8
    $region17: #{tpu_custom_call.1} parent=1 // pred_fallthru
      _
    // Predicated region
    $region18: #{tpu_custom_call.1} parent=1 // pred_check
      _
    $region19: #{tpu_custom_call.1} parent=1 // pred_check_branch
      %4331 = sbr.rel (0) target = $region21
    $region20: #{tpu_custom_call.1} parent=1 // pred_region
      %4333 = dma.done [#allocation3], 256
    $region21: #{tpu_custom_call.1} parent=1 // pred_fallthru
      _
    %4334 = vsyncpa [#allocation3], 1

</llo_original>
